<compile_context>
chip_gen: v5e
topology: v5e:2x2
jax: 0.10.0
libtpu: 0.0.40
codegen_flags: <defaults>
</compile_context>

<pallas_src>
import functools

import jax
import jax.numpy as jnp
from jax import lax
from jax.experimental import pallas as pl
from jax.experimental.pallas import tpu as pltpu

LN_EPS = 1e-5   # torch.nn.LayerNorm default


def _layer_norm(x, gamma, beta):
    # x: (N, D); gamma/beta: (1, D).  Matches torch LayerNorm (biased variance), f32.
    mean = jnp.mean(x, axis=-1, keepdims=True)
    var = jnp.mean(jnp.square(x - mean), axis=-1, keepdims=True)
    return (x - mean) * lax.rsqrt(var + LN_EPS) * gamma + beta


def _gelu_tanh(x):
    # TODO(synk): torch.nn.GELU defaults to the exact erf form; Mosaic has no erf
    #             lowering, so the tanh approximation is used (~1e-3 per-element diff).
    return 0.5 * x * (1.0 + jnp.tanh(0.7978845608028654 * (x + 0.044715 * x * x * x)))


# --------------------------- fused kernel -----------------------------------


def fused_transformer_kernel(
        tok_ref,            # (N, D) f32  — this batch element's tokens (post patch-embed flatten)
        pos_ref,            # (N, D) f32  — absolute positional embedding (const)
        norms_ref,          # (4, D) f32  — [patch-norm gamma, beta, final-norm gamma, beta]
        vecs_ref,           # (1, 8, D) f32 — [attn LN g, attn LN b, ff LN g, ff LN b, ff b2, 0, 0, 0]
        qkvo_ref,           # (1, 4*heads, D, dim_head) bf16 — [q_h..., k_h..., v_h..., out_proj^T_h...]
        w1_ref,             # (1, D, mlp) bf16
        b1_ref,             # (1, 1, mlp) f32
        w2t_ref,            # (1, D, mlp) bf16 — second FF weight stored transposed (lane-dense)
        o_ref,              # (N, D) f32 output
        slab_ref,           # (N, D) f32 VMEM-resident token slab for this batch element
        *, heads, dim_head):
    d = pl.program_id(1)
    nb = pl.num_programs(1)

    # ---- once per batch element, at the first block: PatchEmbed LN + pos embed ----
    @pl.when(d == 0)
    def _():
        slab_ref[...] = (_layer_norm(tok_ref[...], norms_ref[0:1, :], norms_ref[1:2, :])
                         + pos_ref[...])

    x = slab_ref[...]                                       # (N, D) f32, stays in VMEM

    # ---- Attention: LN -> per-head attention -> out proj -> residual ----
    h = _layer_norm(x, vecs_ref[0, 0:1, :], vecs_ref[0, 1:2, :]).astype(jnp.bfloat16)
    scale = dim_head ** -0.5

    attn_out = jnp.zeros_like(x)                            # f32 accumulator over heads
    for hh in range(heads):                                 # heads: static Python int
        wq = qkvo_ref[0, 0 * heads + hh]                    # (D, dh) bf16
        wk = qkvo_ref[0, 1 * heads + hh]
        wv = qkvo_ref[0, 2 * heads + hh]
        wot = qkvo_ref[0, 3 * heads + hh]                   # out-proj weight, transposed (D, dh)

        q = jnp.dot(h, wq, preferred_element_type=jnp.float32)      # (N, dh) f32
        k = jnp.dot(h, wk, preferred_element_type=jnp.float32)
        v = jnp.dot(h, wv, preferred_element_type=jnp.float32)

        # q @ k^T via dot_general contracting the dh axes (no explicit transpose).
        dots = lax.dot_general(q.astype(jnp.bfloat16), k.astype(jnp.bfloat16),
                               (((1,), (1,)), ((), ())),
                               preferred_element_type=jnp.float32) * scale   # (N, N)
        m = jnp.max(dots, axis=-1, keepdims=True)           # keep max-subtraction (stability)
        p = jnp.exp(dots - m)
        l = jnp.sum(p, axis=-1, keepdims=True)
        # PV first, then normalize the (N, dh) result: fewer vregs, reciprocal goes to EUP.
        oh = jnp.dot(p.astype(jnp.bfloat16), v.astype(jnp.bfloat16),
                     preferred_element_type=jnp.float32)                     # (N, dh)
        oh = oh * pl.reciprocal(l, approx=True)
        # Output projection accumulated per head, trans_b contraction (lane-dense weight).
        attn_out = attn_out + lax.dot_general(
            oh.astype(jnp.bfloat16), wot, (((1,), (1,)), ((), ())),
            preferred_element_type=jnp.float32)
    x = x + attn_out                                        # residual

    # ---- FeedForward: LN -> Linear -> GELU -> Linear -> residual ----
    hf = _layer_norm(x, vecs_ref[0, 2:3, :], vecs_ref[0, 3:4, :]).astype(jnp.bfloat16)
    hid = jnp.dot(hf, w1_ref[0], preferred_element_type=jnp.float32) + b1_ref[0]
    hid = _gelu_tanh(hid)                                   # (N, mlp) f32
    y = lax.dot_general(hid.astype(jnp.bfloat16), w2t_ref[0],
                        (((1,), (1,)), ((), ())),
                        preferred_element_type=jnp.float32) + vecs_ref[0, 4:5, :]
    x = x + y                                               # residual

    # Skip the dead slab store on the last block (output written from x directly).
    @pl.when(d != nb - 1)
    def _():
        slab_ref[...] = x

    # ---- once, at the last block: final LayerNorm + the single HBM writeback ----
    @pl.when(d == nb - 1)
    def _():
        o_ref[...] = _layer_norm(x, norms_ref[2:3, :], norms_ref[3:4, :])


# --------------------------- pallas_call wrapper -----------------------------


def pallas_transformer_blocks(tok, pos, params, *, batch, n_tok, heads, dim_head):
    M, D = tok.shape
    NB = params["qkvo"].shape[0]
    mlp = params["w1"].shape[-1]

    kern = functools.partial(fused_transformer_kernel, heads=heads, dim_head=dim_head)
    return pl.pallas_call(
        kern,
        out_shape=jax.ShapeDtypeStruct((M, D), jnp.float32),
        grid=(batch, NB),
        in_specs=[
            pl.BlockSpec((n_tok, D), lambda b, d: (b, 0)),              # tok (per batch)
            pl.BlockSpec((n_tok, D), lambda b, d: (0, 0)),              # pos (const)
            pl.BlockSpec((4, D), lambda b, d: (0, 0)),                  # norms (const)
            pl.BlockSpec((1, 8, D), lambda b, d: (d, 0, 0)),            # packed small vecs
            pl.BlockSpec((1, 4 * heads, D, dim_head),
                         lambda b, d: (d, 0, 0, 0)),                    # packed q/k/v/out-proj
            pl.BlockSpec((1, D, mlp), lambda b, d: (d, 0, 0)),          # w1
            pl.BlockSpec((1, 1, mlp), lambda b, d: (d, 0, 0)),          # b1
            pl.BlockSpec((1, D, mlp), lambda b, d: (d, 0, 0)),          # w2 (transposed)
        ],
        out_specs=pl.BlockSpec((n_tok, D), lambda b, d: (b, 0)),
        scratch_shapes=[pltpu.VMEM((n_tok, D), jnp.float32)],
        compiler_params=pltpu.CompilerParams(
            # batch axis -> megacore on v7x; block axis is sequential (slab carry).
            dimension_semantics=("parallel", "arbitrary"),
            vmem_limit_bytes=16 * 1024 * 1024),
    )(tok, pos, params["norms"], params["vecs"], params["qkvo"],
      params["w1"], params["b1"], params["w2t"])


# --------------------------- parameters --------------------------------------


def build_params(key, *, embed_dim, depths, num_heads, dim_head, mlp_dim, num_patches):
    """Deterministic synthetic init mirroring TransformerBlocks.__init__ shapes.

    Per-block weights are stacked along a leading num_blocks axis (the fused kernel
    indexes them via its grid id), packed to minimize per-step DMA count, stored
    lane-dense (second FF weight and the per-head out-projection are pre-transposed),
    and cast to bf16 for the MXU (f32 accumulate in-kernel).
    """
    D = embed_dim
    heads = num_heads[0]
    assert all(h == heads for h in num_heads), "fused kernel assumes uniform heads"
    NB = sum(depths)
    ks = jax.random.split(key, 7)

    def rnd(k, shape, std=0.02):
        return std * jax.random.normal(k, shape, dtype=jnp.float32)

    # Attention weights per block / head.  to_qkv: Linear(dim, heads*dim_head*3, bias=False)
    # split per head as (D, dim_head); to_out: Linear(heads*dim_head, dim, bias=False) split
    # per head and stored TRANSPOSED as (D, dim_head) so the kernel uses a trans_b contraction.
    wq = rnd(ks[1], (NB, heads, D, dim_head))
    wk = rnd(ks[2], (NB, heads, D, dim_head))
    wv = rnd(ks[3], (NB, heads, D, dim_head))
    wo_t = rnd(ks[4], (NB, heads, D, dim_head))
    qkvo = jnp.concatenate([wq, wk, wv, wo_t], axis=1).astype(jnp.bfloat16)

    # Packed per-block small vectors: rows [attn LN g, attn LN b, ff LN g, ff LN b, ff b2, 0,0,0]
    vecs = jnp.zeros((NB, 8, D), jnp.float32)
    vecs = vecs.at[:, 0, :].set(1.0)   # attention LayerNorm gamma (torch default init)
    vecs = vecs.at[:, 2, :].set(1.0)   # feed-forward LayerNorm gamma

    # Constant norms: [patch-embed LN gamma, beta, final LN gamma, beta]
    norms = jnp.stack([jnp.ones((D,), jnp.float32), jnp.zeros((D,), jnp.float32),
                       jnp.ones((D,), jnp.float32), jnp.zeros((D,), jnp.float32)])

    params = {
        # absolute_pos_embed: (1, num_patches, embed_dim) trunc_normal(std=0.02) -> (N, D)
        "pos": rnd(ks[0], (num_patches, D)),
        "norms": norms,
        "vecs": vecs,
        "qkvo": qkvo,
        # FeedForward: Linear(dim, mlp) + GELU + Linear(mlp, dim); second weight stored
        # transposed (NB, D, mlp) so its VMEM tile is lane-dense.
        "w1": rnd(ks[5], (NB, D, mlp_dim)).astype(jnp.bfloat16),
        "b1": jnp.zeros((NB, 1, mlp_dim), jnp.float32),
        "w2t": rnd(ks[6], (NB, D, mlp_dim)).astype(jnp.bfloat16),
    }
    return params, heads


# --------------------------- forward (= TransformerBlocks.forward) -----------


def transformer_blocks_forward(x, params, *, heads, dim_head):
    # x: (B, embed_dim, H, W)  (NCHW, like PyTorch)
    B, C, H, W = x.shape
    N = H * W
    # PatchEmbed: flatten(2).transpose(1, 2) -> (B, N, D); fold to (B*N, D) for the kernel
    # (the kernel slices per-batch (N, D) slabs via its grid).
    tok = jnp.transpose(x.reshape(B, C, N), (0, 2, 1)).reshape(B * N, C)
    # pos_drop(p=0) == identity; drop_path is unused by the Transformer blocks.
    out = pallas_transformer_blocks(tok, params["pos"], params, batch=B, n_tok=N,
                                    heads=heads, dim_head=dim_head)
    # PatchUnEmbed: transpose(1, 2).view(B, embed_dim, H, W)
    return jnp.transpose(out.reshape(B, N, C), (0, 2, 1)).reshape(B, C, H, W)


# --------------------------- main ---------------------------------------------

if __name__ == "__main__":
    # Small, self-consistent config:
    #   img_size=32, patch_size=4 -> patches_resolution=(8, 8), num_patches=64.
    #   Forward x must have spatial size == patches_resolution so the positional
    #   embedding broadcasts; Transformer() hard-codes dim_head=64, mlp_dim=2048.
    B = 2
    embed_dim = 32
    H = W = 8
    depths = [2, 2]
    num_heads = [2, 2]
    dim_head = 64
    mlp_dim = 2048
    num_patches = H * W

    root = jax.random.PRNGKey(0)
    k_par, k_x = jax.random.split(root)
    params, heads = build_params(k_par, embed_dim=embed_dim, depths=depths,
                                 num_heads=num_heads, dim_head=dim_head,
                                 mlp_dim=mlp_dim, num_patches=num_patches)
    x = jax.random.normal(k_x, (B, embed_dim, H, W), dtype=jnp.float32)

    fwd = jax.jit(functools.partial(transformer_blocks_forward,
                                    heads=heads, dim_head=dim_head))
    y = jax.block_until_ready(fwd(x, params))

    assert y.shape == (B, embed_dim, H, W), y.shape
    assert bool(jnp.all(jnp.isfinite(y)))
    print("KERNEL_OK")
</pallas_src>

<mosaic_0001>
module attributes {stable_mosaic.version = 11 : i64} {
  func.func @fused_transformer_kernel(%arg0: i32, %arg1: i32, %arg2: memref<64x32xf32, #tpu.memory_space<vmem>>, %arg3: memref<64x32xf32, #tpu.memory_space<vmem>>, %arg4: memref<4x32xf32, #tpu.memory_space<vmem>>, %arg5: memref<1x8x32xf32, #tpu.memory_space<vmem>>, %arg6: memref<1x8x32x64xbf16, #tpu.memory_space<vmem>>, %arg7: memref<1x32x2048xbf16, #tpu.memory_space<vmem>>, %arg8: memref<1x1x2048xf32, #tpu.memory_space<vmem>>, %arg9: memref<1x32x2048xbf16, #tpu.memory_space<vmem>>, %arg10: memref<64x32xf32, #tpu.memory_space<vmem>>, %arg11: memref<64x32xf32, #tpu.memory_space<vmem>>) attributes {dimension_semantics = [#tpu.dimension_semantics<parallel>, #tpu.dimension_semantics<arbitrary>], iteration_bounds = array<i64: 2, 4>, scalar_prefetch = 0 : i64, scratch_operands = 1 : i64, tpu.core_type = #tpu.core_type<tc>, window_params = [{transform_indices = @transform_0, window_bounds = array<i64: 64, 32>}, {pipeline_mode = #tpu.pipeline_mode<synchronous>, transform_indices = @transform_1, window_bounds = array<i64: 64, 32>}, {pipeline_mode = #tpu.pipeline_mode<synchronous>, transform_indices = @transform_2, window_bounds = array<i64: 4, 32>}, {transform_indices = @transform_3, window_bounds = array<i64: 1, 8, 32>}, {transform_indices = @transform_4, window_bounds = array<i64: 1, 8, 32, 64>}, {transform_indices = @transform_5, window_bounds = array<i64: 1, 32, 2048>}, {transform_indices = @transform_6, window_bounds = array<i64: 1, 1, 2048>}, {transform_indices = @transform_7, window_bounds = array<i64: 1, 32, 2048>}, {transform_indices = @transform_8, window_bounds = array<i64: 64, 32>}]} {
    %c0_i32 = arith.constant 0 : i32
    %0 = arith.cmpi eq, %arg1, %c0_i32 : i32
    %1 = arith.extui %0 : i1 to i32
    %c0_i32_0 = arith.constant 0 : i32
    %2 = arith.cmpi ne, %1, %c0_i32_0 : i32
    scf.if %2 {
      %c0_88 = arith.constant 0 : index
      %c0_89 = arith.constant 0 : index
      %159 = vector.load %arg2[%c0_88, %c0_89] : memref<64x32xf32, #tpu.memory_space<vmem>>, vector<64x32xf32>
      %c0_90 = arith.constant 0 : index
      %c0_91 = arith.constant 0 : index
      %160 = vector.load %arg4[%c0_90, %c0_91] : memref<4x32xf32, #tpu.memory_space<vmem>>, vector<1x32xf32>
      %c1_92 = arith.constant 1 : index
      %c0_93 = arith.constant 0 : index
      %161 = vector.load %arg4[%c1_92, %c0_93] : memref<4x32xf32, #tpu.memory_space<vmem>>, vector<1x32xf32>
      %cst_94 = arith.constant dense<0.000000e+00> : vector<64xf32>
      %162 = vector.multi_reduction <add>, %159, %cst_94 [1] : vector<64x32xf32> to vector<64xf32>
      %163 = vector.shape_cast %162 : vector<64xf32> to vector<64x1xf32>
      %cst_95 = arith.constant 3.200000e+01 : f32
      %164 = vector.broadcast %cst_95 : f32 to vector<64x1xf32>
      %165 = arith.divf %163, %164 : vector<64x1xf32>
      %166 = vector.broadcast %165 : vector<64x1xf32> to vector<64x32xf32>
      %167 = arith.subf %159, %166 : vector<64x32xf32>
      %168 = arith.mulf %167, %167 : vector<64x32xf32>
      %cst_96 = arith.constant dense<0.000000e+00> : vector<64xf32>
      %169 = vector.multi_reduction <add>, %168, %cst_96 [1] : vector<64x32xf32> to vector<64xf32>
      %170 = vector.shape_cast %169 : vector<64xf32> to vector<64x1xf32>
      %cst_97 = arith.constant 3.200000e+01 : f32
      %171 = vector.broadcast %cst_97 : f32 to vector<64x1xf32>
      %172 = arith.divf %170, %171 : vector<64x1xf32>
      %173 = vector.broadcast %165 : vector<64x1xf32> to vector<64x32xf32>
      %174 = arith.subf %159, %173 : vector<64x32xf32>
      %cst_98 = arith.constant 9.99999974E-6 : f32
      %175 = vector.broadcast %cst_98 : f32 to vector<64x1xf32>
      %176 = arith.addf %172, %175 : vector<64x1xf32>
      %177 = math.rsqrt %176 : vector<64x1xf32>
      %178 = vector.broadcast %177 : vector<64x1xf32> to vector<64x32xf32>
      %179 = arith.mulf %174, %178 : vector<64x32xf32>
      %180 = vector.broadcast %160 : vector<1x32xf32> to vector<64x32xf32>
      %181 = arith.mulf %179, %180 : vector<64x32xf32>
      %182 = vector.broadcast %161 : vector<1x32xf32> to vector<64x32xf32>
      %183 = arith.addf %181, %182 : vector<64x32xf32>
      %c0_99 = arith.constant 0 : index
      %c0_100 = arith.constant 0 : index
      %184 = vector.load %arg3[%c0_99, %c0_100] : memref<64x32xf32, #tpu.memory_space<vmem>>, vector<64x32xf32>
      %185 = arith.addf %183, %184 : vector<64x32xf32>
      %c0_101 = arith.constant 0 : index
      %c0_102 = arith.constant 0 : index
      %186 = vector.load %arg11[%c0_101, %c0_102] : memref<64x32xf32, #tpu.memory_space<vmem>>, vector<64x32xf32>
      tpu.vector_store %arg11[%c0_101, %c0_102], %185 {strides = array<i32>} : memref<64x32xf32, #tpu.memory_space<vmem>>, vector<64x32xf32>,
    } else {
    }
    %c0 = arith.constant 0 : index
    %c0_1 = arith.constant 0 : index
    %3 = vector.load %arg11[%c0, %c0_1] : memref<64x32xf32, #tpu.memory_space<vmem>>, vector<64x32xf32>
    %c0_2 = arith.constant 0 : index
    %c0_3 = arith.constant 0 : index
    %c0_4 = arith.constant 0 : index
    %4 = vector.load %arg5[%c0_2, %c0_3, %c0_4] : memref<1x8x32xf32, #tpu.memory_space<vmem>>, vector<1x1x32xf32>
    %5 = vector.shape_cast %4 : vector<1x1x32xf32> to vector<1x32xf32>
    %c0_5 = arith.constant 0 : index
    %c1 = arith.constant 1 : index
    %c0_6 = arith.constant 0 : index
    %6 = vector.load %arg5[%c0_5, %c1, %c0_6] : memref<1x8x32xf32, #tpu.memory_space<vmem>>, vector<1x1x32xf32>
    %7 = vector.shape_cast %6 : vector<1x1x32xf32> to vector<1x32xf32>
    %cst = arith.constant dense<0.000000e+00> : vector<64xf32>
    %8 = vector.multi_reduction <add>, %3, %cst [1] : vector<64x32xf32> to vector<64xf32>
    %9 = vector.shape_cast %8 : vector<64xf32> to vector<64x1xf32>
    %cst_7 = arith.constant 3.200000e+01 : f32
    %10 = vector.broadcast %cst_7 : f32 to vector<64x1xf32>
    %11 = arith.divf %9, %10 : vector<64x1xf32>
    %12 = vector.broadcast %11 : vector<64x1xf32> to vector<64x32xf32>
    %13 = arith.subf %3, %12 : vector<64x32xf32>
    %14 = arith.mulf %13, %13 : vector<64x32xf32>
    %cst_8 = arith.constant dense<0.000000e+00> : vector<64xf32>
    %15 = vector.multi_reduction <add>, %14, %cst_8 [1] : vector<64x32xf32> to vector<64xf32>
    %16 = vector.shape_cast %15 : vector<64xf32> to vector<64x1xf32>
    %cst_9 = arith.constant 3.200000e+01 : f32
    %17 = vector.broadcast %cst_9 : f32 to vector<64x1xf32>
    %18 = arith.divf %16, %17 : vector<64x1xf32>
    %19 = vector.broadcast %11 : vector<64x1xf32> to vector<64x32xf32>
    %20 = arith.subf %3, %19 : vector<64x32xf32>
    %cst_10 = arith.constant 9.99999974E-6 : f32
    %21 = vector.broadcast %cst_10 : f32 to vector<64x1xf32>
    %22 = arith.addf %18, %21 : vector<64x1xf32>
    %23 = math.rsqrt %22 : vector<64x1xf32>
    %24 = vector.broadcast %23 : vector<64x1xf32> to vector<64x32xf32>
    %25 = arith.mulf %20, %24 : vector<64x32xf32>
    %26 = vector.broadcast %5 : vector<1x32xf32> to vector<64x32xf32>
    %27 = arith.mulf %25, %26 : vector<64x32xf32>
    %28 = vector.broadcast %7 : vector<1x32xf32> to vector<64x32xf32>
    %29 = arith.addf %27, %28 : vector<64x32xf32>
    %30 = arith.truncf %29 : vector<64x32xf32> to vector<64x32xbf16>
    %cst_11 = arith.constant 0.000000e+00 : f32
    %31 = vector.broadcast %cst_11 : f32 to vector<64x32xf32>
    %c0_12 = arith.constant 0 : index
    %c0_13 = arith.constant 0 : index
    %c0_14 = arith.constant 0 : index
    %c0_15 = arith.constant 0 : index
    %32 = vector.load %arg6[%c0_12, %c0_13, %c0_14, %c0_15] : memref<1x8x32x64xbf16, #tpu.memory_space<vmem>>, vector<1x1x32x64xbf16>
    %33 = vector.shape_cast %32 : vector<1x1x32x64xbf16> to vector<32x64xbf16>
    %c0_16 = arith.constant 0 : index
    %c2 = arith.constant 2 : index
    %c0_17 = arith.constant 0 : index
    %c0_18 = arith.constant 0 : index
    %34 = vector.load %arg6[%c0_16, %c2, %c0_17, %c0_18] : memref<1x8x32x64xbf16, #tpu.memory_space<vmem>>, vector<1x1x32x64xbf16>
    %35 = vector.shape_cast %34 : vector<1x1x32x64xbf16> to vector<32x64xbf16>
    %c0_19 = arith.constant 0 : index
    %c4 = arith.constant 4 : index
    %c0_20 = arith.constant 0 : index
    %c0_21 = arith.constant 0 : index
    %36 = vector.load %arg6[%c0_19, %c4, %c0_20, %c0_21] : memref<1x8x32x64xbf16, #tpu.memory_space<vmem>>, vector<1x1x32x64xbf16>
    %37 = vector.shape_cast %36 : vector<1x1x32x64xbf16> to vector<32x64xbf16>
    %c0_22 = arith.constant 0 : index
    %c6 = arith.constant 6 : index
    %c0_23 = arith.constant 0 : index
    %c0_24 = arith.constant 0 : index
    %38 = vector.load %arg6[%c0_22, %c6, %c0_23, %c0_24] : memref<1x8x32x64xbf16, #tpu.memory_space<vmem>>, vector<1x1x32x64xbf16>
    %39 = vector.shape_cast %38 : vector<1x1x32x64xbf16> to vector<32x64xbf16>
    %cst_25 = arith.constant dense<0.000000e+00> : vector<64x64xf32>
    %40 = tpu.matmul %30, %33, %cst_25 {dimension_numbers = #tpu.dot_dimension_numbers<[1], [0], [0], [1], [0, 0, 1, 1], [], []>} : vector<64x32xbf16>, vector<32x64xbf16>, vector<64x64xf32> -> vector<64x64xf32>
    %cst_26 = arith.constant dense<0.000000e+00> : vector<64x64xf32>
    %41 = tpu.matmul %30, %35, %cst_26 {dimension_numbers = #tpu.dot_dimension_numbers<[1], [0], [0], [1], [0, 0, 1, 1], [], []>} : vector<64x32xbf16>, vector<32x64xbf16>, vector<64x64xf32> -> vector<64x64xf32>
    %cst_27 = arith.constant dense<0.000000e+00> : vector<64x64xf32>
    %42 = tpu.matmul %30, %37, %cst_27 {dimension_numbers = #tpu.dot_dimension_numbers<[1], [0], [0], [1], [0, 0, 1, 1], [], []>} : vector<64x32xbf16>, vector<32x64xbf16>, vector<64x64xf32> -> vector<64x64xf32>
    %43 = arith.truncf %40 : vector<64x64xf32> to vector<64x64xbf16>
    %44 = arith.truncf %41 : vector<64x64xf32> to vector<64x64xbf16>
    %cst_28 = arith.constant dense<0.000000e+00> : vector<64x64xf32>
    %45 = tpu.matmul %43, %44, %cst_28 {dimension_numbers = #tpu.dot_dimension_numbers<[1], [1], [0], [0], [0, 0, 1, 0], [], []>} : vector<64x64xbf16>, vector<64x64xbf16>, vector<64x64xf32> -> vector<64x64xf32>
    %cst_29 = arith.constant 1.250000e-01 : f32
    %46 = vector.broadcast %cst_29 : f32 to vector<64x64xf32>
    %47 = arith.mulf %45, %46 : vector<64x64xf32>
    %cst_30 = arith.constant dense<0xFF800000> : vector<64xf32>
    %48 = vector.multi_reduction <maximumf>, %47, %cst_30 [1] : vector<64x64xf32> to vector<64xf32>
    %49 = vector.shape_cast %48 : vector<64xf32> to vector<64x1xf32>
    %50 = vector.broadcast %49 : vector<64x1xf32> to vector<64x64xf32>
    %51 = arith.subf %47, %50 : vector<64x64xf32>
    %52 = math.exp %51 : vector<64x64xf32>
    %cst_31 = arith.constant dense<0.000000e+00> : vector<64xf32>
    %53 = vector.multi_reduction <add>, %52, %cst_31 [1] : vector<64x64xf32> to vector<64xf32>
    %54 = vector.shape_cast %53 : vector<64xf32> to vector<64x1xf32>
    %55 = arith.truncf %52 : vector<64x64xf32> to vector<64x64xbf16>
    %56 = arith.truncf %42 : vector<64x64xf32> to vector<64x64xbf16>
    %cst_32 = arith.constant dense<0.000000e+00> : vector<64x64xf32>
    %57 = tpu.matmul %55, %56, %cst_32 {dimension_numbers = #tpu.dot_dimension_numbers<[1], [0], [0], [1], [0, 0, 1, 1], [], []>} : vector<64x64xbf16>, vector<64x64xbf16>, vector<64x64xf32> -> vector<64x64xf32>
    %58 = tpu.reciprocal %54 {approx = true} : vector<64x1xf32> -> vector<64x1xf32>
    %59 = vector.broadcast %58 : vector<64x1xf32> to vector<64x64xf32>
    %60 = arith.mulf %57, %59 : vector<64x64xf32>
    %61 = arith.truncf %60 : vector<64x64xf32> to vector<64x64xbf16>
    %cst_33 = arith.constant dense<0.000000e+00> : vector<64x32xf32>
    %62 = tpu.matmul %61, %39, %cst_33 {dimension_numbers = #tpu.dot_dimension_numbers<[1], [1], [0], [0], [0, 0, 1, 0], [], []>} : vector<64x64xbf16>, vector<32x64xbf16>, vector<64x32xf32> -> vector<64x32xf32>
    %63 = arith.addf %31, %62 : vector<64x32xf32>
    %c0_34 = arith.constant 0 : index
    %c1_35 = arith.constant 1 : index
    %c0_36 = arith.constant 0 : index
    %c0_37 = arith.constant 0 : index
    %64 = vector.load %arg6[%c0_34, %c1_35, %c0_36, %c0_37] : memref<1x8x32x64xbf16, #tpu.memory_space<vmem>>, vector<1x1x32x64xbf16>
    %65 = vector.shape_cast %64 : vector<1x1x32x64xbf16> to vector<32x64xbf16>
    %c0_38 = arith.constant 0 : index
    %c3 = arith.constant 3 : index
    %c0_39 = arith.constant 0 : index
    %c0_40 = arith.constant 0 : index
    %66 = vector.load %arg6[%c0_38, %c3, %c0_39, %c0_40] : memref<1x8x32x64xbf16, #tpu.memory_space<vmem>>, vector<1x1x32x64xbf16>
    %67 = vector.shape_cast %66 : vector<1x1x32x64xbf16> to vector<32x64xbf16>
    %c0_41 = arith.constant 0 : index
    %c5 = arith.constant 5 : index
    %c0_42 = arith.constant 0 : index
    %c0_43 = arith.constant 0 : index
    %68 = vector.load %arg6[%c0_41, %c5, %c0_42, %c0_43] : memref<1x8x32x64xbf16, #tpu.memory_space<vmem>>, vector<1x1x32x64xbf16>
    %69 = vector.shape_cast %68 : vector<1x1x32x64xbf16> to vector<32x64xbf16>
    %c0_44 = arith.constant 0 : index
    %c7 = arith.constant 7 : index
    %c0_45 = arith.constant 0 : index
    %c0_46 = arith.constant 0 : index
    %70 = vector.load %arg6[%c0_44, %c7, %c0_45, %c0_46] : memref<1x8x32x64xbf16, #tpu.memory_space<vmem>>, vector<1x1x32x64xbf16>
    %71 = vector.shape_cast %70 : vector<1x1x32x64xbf16> to vector<32x64xbf16>
    %cst_47 = arith.constant dense<0.000000e+00> : vector<64x64xf32>
    %72 = tpu.matmul %30, %65, %cst_47 {dimension_numbers = #tpu.dot_dimension_numbers<[1], [0], [0], [1], [0, 0, 1, 1], [], []>} : vector<64x32xbf16>, vector<32x64xbf16>, vector<64x64xf32> -> vector<64x64xf32>
    %cst_48 = arith.constant dense<0.000000e+00> : vector<64x64xf32>
    %73 = tpu.matmul %30, %67, %cst_48 {dimension_numbers = #tpu.dot_dimension_numbers<[1], [0], [0], [1], [0, 0, 1, 1], [], []>} : vector<64x32xbf16>, vector<32x64xbf16>, vector<64x64xf32> -> vector<64x64xf32>
    %cst_49 = arith.constant dense<0.000000e+00> : vector<64x64xf32>
    %74 = tpu.matmul %30, %69, %cst_49 {dimension_numbers = #tpu.dot_dimension_numbers<[1], [0], [0], [1], [0, 0, 1, 1], [], []>} : vector<64x32xbf16>, vector<32x64xbf16>, vector<64x64xf32> -> vector<64x64xf32>
    %75 = arith.truncf %72 : vector<64x64xf32> to vector<64x64xbf16>
    %76 = arith.truncf %73 : vector<64x64xf32> to vector<64x64xbf16>
    %cst_50 = arith.constant dense<0.000000e+00> : vector<64x64xf32>
    %77 = tpu.matmul %75, %76, %cst_50 {dimension_numbers = #tpu.dot_dimension_numbers<[1], [1], [0], [0], [0, 0, 1, 0], [], []>} : vector<64x64xbf16>, vector<64x64xbf16>, vector<64x64xf32> -> vector<64x64xf32>
    %cst_51 = arith.constant 1.250000e-01 : f32
    %78 = vector.broadcast %cst_51 : f32 to vector<64x64xf32>
    %79 = arith.mulf %77, %78 : vector<64x64xf32>
    %cst_52 = arith.constant dense<0xFF800000> : vector<64xf32>
    %80 = vector.multi_reduction <maximumf>, %79, %cst_52 [1] : vector<64x64xf32> to vector<64xf32>
    %81 = vector.shape_cast %80 : vector<64xf32> to vector<64x1xf32>
    %82 = vector.broadcast %81 : vector<64x1xf32> to vector<64x64xf32>
    %83 = arith.subf %79, %82 : vector<64x64xf32>
    %84 = math.exp %83 : vector<64x64xf32>
    %cst_53 = arith.constant dense<0.000000e+00> : vector<64xf32>
    %85 = vector.multi_reduction <add>, %84, %cst_53 [1] : vector<64x64xf32> to vector<64xf32>
    %86 = vector.shape_cast %85 : vector<64xf32> to vector<64x1xf32>
    %87 = arith.truncf %84 : vector<64x64xf32> to vector<64x64xbf16>
    %88 = arith.truncf %74 : vector<64x64xf32> to vector<64x64xbf16>
    %cst_54 = arith.constant dense<0.000000e+00> : vector<64x64xf32>
    %89 = tpu.matmul %87, %88, %cst_54 {dimension_numbers = #tpu.dot_dimension_numbers<[1], [0], [0], [1], [0, 0, 1, 1], [], []>} : vector<64x64xbf16>, vector<64x64xbf16>, vector<64x64xf32> -> vector<64x64xf32>
    %90 = tpu.reciprocal %86 {approx = true} : vector<64x1xf32> -> vector<64x1xf32>
    %91 = vector.broadcast %90 : vector<64x1xf32> to vector<64x64xf32>
    %92 = arith.mulf %89, %91 : vector<64x64xf32>
    %93 = arith.truncf %92 : vector<64x64xf32> to vector<64x64xbf16>
    %cst_55 = arith.constant dense<0.000000e+00> : vector<64x32xf32>
    %94 = tpu.matmul %93, %71, %cst_55 {dimension_numbers = #tpu.dot_dimension_numbers<[1], [1], [0], [0], [0, 0, 1, 0], [], []>} : vector<64x64xbf16>, vector<32x64xbf16>, vector<64x32xf32> -> vector<64x32xf32>
    %95 = arith.addf %63, %94 : vector<64x32xf32>
    %96 = arith.addf %3, %95 : vector<64x32xf32>
    %c0_56 = arith.constant 0 : index
    %c2_57 = arith.constant 2 : index
    %c0_58 = arith.constant 0 : index
    %97 = vector.load %arg5[%c0_56, %c2_57, %c0_58] : memref<1x8x32xf32, #tpu.memory_space<vmem>>, vector<1x1x32xf32>
    %98 = vector.shape_cast %97 : vector<1x1x32xf32> to vector<1x32xf32>
    %c0_59 = arith.constant 0 : index
    %c3_60 = arith.constant 3 : index
    %c0_61 = arith.constant 0 : index
    %99 = vector.load %arg5[%c0_59, %c3_60, %c0_61] : memref<1x8x32xf32, #tpu.memory_space<vmem>>, vector<1x1x32xf32>
    %100 = vector.shape_cast %99 : vector<1x1x32xf32> to vector<1x32xf32>
    %cst_62 = arith.constant dense<0.000000e+00> : vector<64xf32>
    %101 = vector.multi_reduction <add>, %96, %cst_62 [1] : vector<64x32xf32> to vector<64xf32>
    %102 = vector.shape_cast %101 : vector<64xf32> to vector<64x1xf32>
    %cst_63 = arith.constant 3.200000e+01 : f32
    %103 = vector.broadcast %cst_63 : f32 to vector<64x1xf32>
    %104 = arith.divf %102, %103 : vector<64x1xf32>
    %105 = vector.broadcast %104 : vector<64x1xf32> to vector<64x32xf32>
    %106 = arith.subf %96, %105 : vector<64x32xf32>
    %107 = arith.mulf %106, %106 : vector<64x32xf32>
    %cst_64 = arith.constant dense<0.000000e+00> : vector<64xf32>
    %108 = vector.multi_reduction <add>, %107, %cst_64 [1] : vector<64x32xf32> to vector<64xf32>
    %109 = vector.shape_cast %108 : vector<64xf32> to vector<64x1xf32>
    %cst_65 = arith.constant 3.200000e+01 : f32
    %110 = vector.broadcast %cst_65 : f32 to vector<64x1xf32>
    %111 = arith.divf %109, %110 : vector<64x1xf32>
    %112 = vector.broadcast %104 : vector<64x1xf32> to vector<64x32xf32>
    %113 = arith.subf %96, %112 : vector<64x32xf32>
    %cst_66 = arith.constant 9.99999974E-6 : f32
    %114 = vector.broadcast %cst_66 : f32 to vector<64x1xf32>
    %115 = arith.addf %111, %114 : vector<64x1xf32>
    %116 = math.rsqrt %115 : vector<64x1xf32>
    %117 = vector.broadcast %116 : vector<64x1xf32> to vector<64x32xf32>
    %118 = arith.mulf %113, %117 : vector<64x32xf32>
    %119 = vector.broadcast %98 : vector<1x32xf32> to vector<64x32xf32>
    %120 = arith.mulf %118, %119 : vector<64x32xf32>
    %121 = vector.broadcast %100 : vector<1x32xf32> to vector<64x32xf32>
    %122 = arith.addf %120, %121 : vector<64x32xf32>
    %123 = arith.truncf %122 : vector<64x32xf32> to vector<64x32xbf16>
    %c0_67 = arith.constant 0 : index
    %c0_68 = arith.constant 0 : index
    %c0_69 = arith.constant 0 : index
    %124 = vector.load %arg7[%c0_67, %c0_68, %c0_69] : memref<1x32x2048xbf16, #tpu.memory_space<vmem>>, vector<1x32x2048xbf16>
    %125 = vector.shape_cast %124 : vector<1x32x2048xbf16> to vector<32x2048xbf16>
    %cst_70 = arith.constant dense<0.000000e+00> : vector<64x2048xf32>
    %126 = tpu.matmul %123, %125, %cst_70 {dimension_numbers = #tpu.dot_dimension_numbers<[1], [0], [0], [1], [0, 0, 1, 1], [], []>} : vector<64x32xbf16>, vector<32x2048xbf16>, vector<64x2048xf32> -> vector<64x2048xf32>
    %c0_71 = arith.constant 0 : index
    %c0_72 = arith.constant 0 : index
    %c0_73 = arith.constant 0 : index
    %127 = vector.load %arg8[%c0_71, %c0_72, %c0_73] : memref<1x1x2048xf32, #tpu.memory_space<vmem>>, vector<1x1x2048xf32>
    %128 = vector.shape_cast %127 : vector<1x1x2048xf32> to vector<1x2048xf32>
    %129 = vector.broadcast %128 : vector<1x2048xf32> to vector<64x2048xf32>
    %130 = arith.addf %126, %129 : vector<64x2048xf32>
    %cst_74 = arith.constant 5.000000e-01 : f32
    %131 = vector.broadcast %cst_74 : f32 to vector<64x2048xf32>
    %132 = arith.mulf %131, %130 : vector<64x2048xf32>
    %cst_75 = arith.constant 4.471500e-02 : f32
    %133 = vector.broadcast %cst_75 : f32 to vector<64x2048xf32>
    %134 = arith.mulf %133, %130 : vector<64x2048xf32>
    %135 = arith.mulf %134, %130 : vector<64x2048xf32>
    %136 = arith.mulf %135, %130 : vector<64x2048xf32>
    %137 = arith.addf %130, %136 : vector<64x2048xf32>
    %cst_76 = arith.constant 0.797884583 : f32
    %138 = vector.broadcast %cst_76 : f32 to vector<64x2048xf32>
    %139 = arith.mulf %138, %137 : vector<64x2048xf32>
    %140 = math.tanh %139 : vector<64x2048xf32>
    %cst_77 = arith.constant 1.000000e+00 : f32
    %141 = vector.broadcast %cst_77 : f32 to vector<64x2048xf32>
    %142 = arith.addf %141, %140 : vector<64x2048xf32>
    %143 = arith.mulf %132, %142 : vector<64x2048xf32>
    %144 = arith.truncf %143 : vector<64x2048xf32> to vector<64x2048xbf16>
    %c0_78 = arith.constant 0 : index
    %c0_79 = arith.constant 0 : index
    %c0_80 = arith.constant 0 : index
    %145 = vector.load %arg9[%c0_78, %c0_79, %c0_80] : memref<1x32x2048xbf16, #tpu.memory_space<vmem>>, vector<1x32x2048xbf16>
    %146 = vector.shape_cast %145 : vector<1x32x2048xbf16> to vector<32x2048xbf16>
    %cst_81 = arith.constant dense<0.000000e+00> : vector<64x32xf32>
    %147 = tpu.matmul %144, %146, %cst_81 {dimension_numbers = #tpu.dot_dimension_numbers<[1], [1], [0], [0], [0, 0, 1, 0], [], []>} : vector<64x2048xbf16>, vector<32x2048xbf16>, vector<64x32xf32> -> vector<64x32xf32>
    %c0_82 = arith.constant 0 : index
    %c4_83 = arith.constant 4 : index
    %c0_84 = arith.constant 0 : index
    %148 = vector.load %arg5[%c0_82, %c4_83, %c0_84] : memref<1x8x32xf32, #tpu.memory_space<vmem>>, vector<1x1x32xf32>
    %149 = vector.shape_cast %148 : vector<1x1x32xf32> to vector<1x32xf32>
    %150 = vector.broadcast %149 : vector<1x32xf32> to vector<64x32xf32>
    %151 = arith.addf %147, %150 : vector<64x32xf32>
    %152 = arith.addf %96, %151 : vector<64x32xf32>
    %c3_i32 = arith.constant 3 : i32
    %153 = arith.cmpi ne, %arg1, %c3_i32 : i32
    %154 = arith.extui %153 : i1 to i32
    %c0_i32_85 = arith.constant 0 : i32
    %155 = arith.cmpi ne, %154, %c0_i32_85 : i32
    scf.if %155 {
      %c0_88 = arith.constant 0 : index
      %c0_89 = arith.constant 0 : index
      %159 = vector.load %arg11[%c0_88, %c0_89] : memref<64x32xf32, #tpu.memory_space<vmem>>, vector<64x32xf32>
      tpu.vector_store %arg11[%c0_88, %c0_89], %152 {strides = array<i32>} : memref<64x32xf32, #tpu.memory_space<vmem>>, vector<64x32xf32>,
    } else {
    }
    %c3_i32_86 = arith.constant 3 : i32
    %156 = arith.cmpi eq, %arg1, %c3_i32_86 : i32
    %157 = arith.extui %156 : i1 to i32
    %c0_i32_87 = arith.constant 0 : i32
    %158 = arith.cmpi ne, %157, %c0_i32_87 : i32
    scf.if %158 {
      %c2_88 = arith.constant 2 : index
      %c0_89 = arith.constant 0 : index
      %159 = vector.load %arg4[%c2_88, %c0_89] : memref<4x32xf32, #tpu.memory_space<vmem>>, vector<1x32xf32>
      %c3_90 = arith.constant 3 : index
      %c0_91 = arith.constant 0 : index
      %160 = vector.load %arg4[%c3_90, %c0_91] : memref<4x32xf32, #tpu.memory_space<vmem>>, vector<1x32xf32>
      %cst_92 = arith.constant dense<0.000000e+00> : vector<64xf32>
      %161 = vector.multi_reduction <add>, %152, %cst_92 [1] : vector<64x32xf32> to vector<64xf32>
      %162 = vector.shape_cast %161 : vector<64xf32> to vector<64x1xf32>
      %cst_93 = arith.constant 3.200000e+01 : f32
      %163 = vector.broadcast %cst_93 : f32 to vector<64x1xf32>
      %164 = arith.divf %162, %163 : vector<64x1xf32>
      %165 = vector.broadcast %164 : vector<64x1xf32> to vector<64x32xf32>
      %166 = arith.subf %152, %165 : vector<64x32xf32>
      %167 = arith.mulf %166, %166 : vector<64x32xf32>
      %cst_94 = arith.constant dense<0.000000e+00> : vector<64xf32>
      %168 = vector.multi_reduction <add>, %167, %cst_94 [1] : vector<64x32xf32> to vector<64xf32>
      %169 = vector.shape_cast %168 : vector<64xf32> to vector<64x1xf32>
      %cst_95 = arith.constant 3.200000e+01 : f32
      %170 = vector.broadcast %cst_95 : f32 to vector<64x1xf32>
      %171 = arith.divf %169, %170 : vector<64x1xf32>
      %172 = vector.broadcast %164 : vector<64x1xf32> to vector<64x32xf32>
      %173 = arith.subf %152, %172 : vector<64x32xf32>
      %cst_96 = arith.constant 9.99999974E-6 : f32
      %174 = vector.broadcast %cst_96 : f32 to vector<64x1xf32>
      %175 = arith.addf %171, %174 : vector<64x1xf32>
      %176 = math.rsqrt %175 : vector<64x1xf32>
      %177 = vector.broadcast %176 : vector<64x1xf32> to vector<64x32xf32>
      %178 = arith.mulf %173, %177 : vector<64x32xf32>
      %179 = vector.broadcast %159 : vector<1x32xf32> to vector<64x32xf32>
      %180 = arith.mulf %178, %179 : vector<64x32xf32>
      %181 = vector.broadcast %160 : vector<1x32xf32> to vector<64x32xf32>
      %182 = arith.addf %180, %181 : vector<64x32xf32>
      %c0_97 = arith.constant 0 : index
      %c0_98 = arith.constant 0 : index
      %183 = vector.load %arg10[%c0_97, %c0_98] : memref<64x32xf32, #tpu.memory_space<vmem>>, vector<64x32xf32>
      tpu.vector_store %arg10[%c0_97, %c0_98], %182 {strides = array<i32>} : memref<64x32xf32, #tpu.memory_space<vmem>>, vector<64x32xf32>,
    } else {
    }
    return
  }
  func.func @transform_0(%arg0: i32, %arg1: i32) -> (i32, i32) {
    %c0_i32 = arith.constant 0 : i32
    %c0_i32_0 = arith.constant 0 : i32
    return %arg0, %c0_i32 : i32, i32
  }
  func.func @transform_1(%arg0: i32, %arg1: i32) -> (i32, i32) {
    %c0_i32 = arith.constant 0 : i32
    %c0_i32_0 = arith.constant 0 : i32
    %c0_i32_1 = arith.constant 0 : i32
    return %c0_i32, %c0_i32_0 : i32, i32
  }
  func.func @transform_2(%arg0: i32, %arg1: i32) -> (i32, i32) {
    %c0_i32 = arith.constant 0 : i32
    %c0_i32_0 = arith.constant 0 : i32
    %c0_i32_1 = arith.constant 0 : i32
    return %c0_i32, %c0_i32_0 : i32, i32
  }
  func.func @transform_3(%arg0: i32, %arg1: i32) -> (i32, i32, i32) {
    %c0_i32 = arith.constant 0 : i32
    %c0_i32_0 = arith.constant 0 : i32
    %c0_i32_1 = arith.constant 0 : i32
    return %arg1, %c0_i32, %c0_i32_0 : i32, i32, i32
  }
  func.func @transform_4(%arg0: i32, %arg1: i32) -> (i32, i32, i32, i32) {
    %c0_i32 = arith.constant 0 : i32
    %c0_i32_0 = arith.constant 0 : i32
    %c0_i32_1 = arith.constant 0 : i32
    %c0_i32_2 = arith.constant 0 : i32
    return %arg1, %c0_i32, %c0_i32_0, %c0_i32_1 : i32, i32, i32, i32
  }
  func.func @transform_5(%arg0: i32, %arg1: i32) -> (i32, i32, i32) {
    %c0_i32 = arith.constant 0 : i32
    %c0_i32_0 = arith.constant 0 : i32
    %c0_i32_1 = arith.constant 0 : i32
    return %arg1, %c0_i32, %c0_i32_0 : i32, i32, i32
  }
  func.func @transform_6(%arg0: i32, %arg1: i32) -> (i32, i32, i32) {
    %c0_i32 = arith.constant 0 : i32
    %c0_i32_0 = arith.constant 0 : i32
    %c0_i32_1 = arith.constant 0 : i32
    return %arg1, %c0_i32, %c0_i32_0 : i32, i32, i32
  }
  func.func @transform_7(%arg0: i32, %arg1: i32) -> (i32, i32, i32) {
    %c0_i32 = arith.constant 0 : i32
    %c0_i32_0 = arith.constant 0 : i32
    %c0_i32_1 = arith.constant 0 : i32
    return %arg1, %c0_i32, %c0_i32_0 : i32, i32, i32
  }
  func.func @transform_8(%arg0: i32, %arg1: i32) -> (i32, i32) {
    %c0_i32 = arith.constant 0 : i32
    %c0_i32_0 = arith.constant 0 : i32
    return %arg0, %c0_i32 : i32, i32
  }
}

</mosaic_0001>

<llo_original>
// kernel: transformer_blocks_forward.1
$region0: #{transformer_blocks_forward.1}
  #allocation0 [shape = 'u32[]', space=smem, size = 0x4, offset = 0x4, fixed_abs, tag = 'smem constant byte address 0x4 - core index']
  #allocation1 [shape = 'u32[72,128]{1,0:T(1,128)}', space=vmem, size = 0x9000, scoped, tag = 'internal scratch']
  #allocation2 [shape = 'f32[64,32]{1,0:T(8,128)}', space=vmem, size = 0x8000, scoped, tag = 'scratch operand']
  %s0 = inlined_call_operand.hbm [shape: f32[128,32], index: 0, kind: input, shape index: {}]
  %s1 = inlined_call_operand.vmem [shape: f32[64,32], index: 1, kind: input, shape index: {}]
  %s2 = inlined_call_operand.hbm [shape: f32[4,32], index: 2, kind: input, shape index: {}]
  %s3 = inlined_call_operand.vmem [shape: f32[4,8,32], index: 3, kind: input, shape index: {}]
  %s4 = inlined_call_operand.hbm [shape: bf16[4,8,32,64], index: 4, kind: input, shape index: {}]
  %s5 = inlined_call_operand.hbm [shape: bf16[4,32,2048], index: 5, kind: input, shape index: {}]
  %s6 = inlined_call_operand.vmem [shape: f32[4,1,2048], index: 6, kind: input, shape index: {}]
  %s7 = inlined_call_operand.hbm [shape: bf16[4,32,2048], index: 7, kind: input, shape index: {}]
  %s8 = inlined_call_operand.hbm [shape: f32[128,32], index: 8, kind: output, shape index: {}]
  %s9 = sld [smem:[#allocation0]]
  $region97: #{transformer_blocks_forward.1} parent=0
    _
  %s11 = ssub.s32 1, %s9
  %s12 = scalar_select 0, %s11, %s9
  $region1: #{transformer_blocks_forward.1} parent=0
    #allocation3 [shape = 'u8[65536]{0}', space=vmem, size = 0x10000, scoped, tag = 'input window, operand 0']
    #allocation4 [shape = 's32[2]{0}', space=sflag, size = 0x8, scoped, tag = 'scoped memory for transformer_blocks_forward.1']
    #allocation5 [shape = 's32[2]{0}', space=sflag, size = 0x8, scoped, tag = 'scoped memory for transformer_blocks_forward.1']
    #allocation6 [shape = 'u8[2048]{0}', space=vmem, size = 0x800, scoped, tag = 'input window, operand 2, single buffered']
    #allocation7 [shape = 's32[1]{0}', space=sflag, size = 0x4, scoped, tag = 'scoped memory for transformer_blocks_forward.1']
    #allocation8 [shape = 'u8[131072]{0}', space=vmem, size = 0x20000, scoped, tag = 'input window, operand 4']
    #allocation9 [shape = 'u8[262144]{0}', space=vmem, size = 0x40000, scoped, tag = 'input window, operand 5']
    #allocation10 [shape = 'u8[262144]{0}', space=vmem, size = 0x40000, scoped, tag = 'input window, operand 7']
    #allocation11 [shape = 'u8[65536]{0}', space=vmem, size = 0x10000, scoped, tag = 'output window, operand 0']
    %13 = vsyncpa [#allocation4], 0
    %s14 = scalar_lea.sflag [#allocation4], 1
    %15 = vsyncpa %s14, 0
    %16 = vsyncpa [#allocation7], 0
    %17 = vsyncpa [#allocation5], 0
    %s18 = scalar_lea.sflag [#allocation5], 1
    %19 = vsyncpa %s18, 0
    loop: start=0, step=1, limit=10
    $region2: #{transformer_blocks_forward.1} parent=1 // loop_pre_header
      _
    $region3: #{transformer_blocks_forward.1} parent=1 // loop_header
      %s21 = sphi 0, %s25
      %p22 = scmp.ge.s32.totalorder %s21, 10
      %s28 = sphi 0, %s40
      %s29 = sphi 0, %s36
      %s30 = sphi 0, %s28
      %s31 = sphi 0, %s29
      %s32 = sphi 0, %s30
      %s33 = sphi 0, %s31
      %s43 = sphi 0, %s45
      %s46 = sphi 0, %s43
      %s47 = sphi 0, %s46
      %s63 = sphi 0, %s47
      %s67 = sphi 0, %s67
      %s69 = sphi 0, %s67
      %s70 = sphi 0, %s69
      %s84 = sphi 0, %s70
      %s88 = sphi 0, %s88
      %s90 = sphi 0, %s88
      %s91 = sphi 0, %s90
      %s105 = sphi 0, %s91
      %s111 = sphi 0, %s113
      %s114 = sphi 0, %s111
      %s115 = sphi 0, %s114
      %s131 = sphi 0, %s115
      %s137 = sphi 0, %s139
      %s140 = sphi 0, %s137
      %s141 = sphi 0, %s140
      %s157 = sphi 0, %s141
      %s163 = sphi 0, %s165
      %s166 = sphi 0, %s163
      %s167 = sphi 0, %s166
      %s183 = sphi 0, %s167
      %s189 = sphi 0, %s191
      %s192 = sphi 0, %s189
      %s193 = sphi 0, %s192
      %s209 = sphi 0, %s193
      %s215 = sphi 0, %s217
      %s218 = sphi 0, %s215
      %s219 = sphi 0, %s218
      %s235 = sphi 0, %s219
      %s241 = sphi 0, %s243
      %s244 = sphi 0, %s241
      %s245 = sphi 0, %s244
      %s261 = sphi 0, %s245
    $region4: #{transformer_blocks_forward.1} parent=1 // loop_header_branch
      %24 = sbr.rel (%p22) target = $region8
    $region5: #{transformer_blocks_forward.1} parent=1 // loop_body
      %s26 = ssub.s32 %s21, 1
      %s27 = ssub.s32 %s21, 2
      %s34 = sadd.s32 1, %s29
      %p35 = scmp.ge.s32.totalorder %s34, 4
      %s36 = scalar_select %p35, 0, %s34
      %s37 = sadd.s32 1, %s28
      %s38 = scalar_select %p35, %s37, %s28
      %p39 = scmp.ge.s32.totalorder %s38, 2
      %s40 = scalar_select %p39, 0, %s38
      %s41 = ssub.s32 %s28, %s40
      %p42 = scmp.eq.s32.totalorder %s41, 0
      %s44 = sadd.s32 %s43, 1
      %s45 = scalar_select %p42, %s43, %s44
      %p48 = pneg %p42
      %p49 = scmp.eq.s32.totalorder %s21, 7
      %p50 = por %p48, %p49
      %p51 = scmp.ne.s32.totalorder %s43, %s46
      %p52 = scmp.eq.s32.totalorder %s21, 0
      %p53 = por %p51, %p52
      %p54 = scmp.ne.s32.totalorder %s43, %s46
      %p55 = scmp.eq.s32.totalorder %s26, 7
      %p56 = por %p54, %p55
      %p57 = scmp.ne.s32.totalorder %s46, %s47
      %p58 = scmp.eq.s32.totalorder %s26, 0
      %p59 = por %p57, %p58
      %p60 = scmp.ne.s32.totalorder %s46, %s47
      %p61 = scmp.eq.s32.totalorder %s27, 7
      %p62 = por %p60, %p61
      %p64 = scmp.ne.s32.totalorder %s47, %s63
      %p65 = scmp.eq.s32.totalorder %s27, 0
      %p66 = por %p64, %p65
      %s68 = sadd.s32 %s67, 1
      %p71 = scmp.eq.s32.totalorder %s21, 7
      %p72 = scmp.ne.s32.totalorder %s67, %s69
      %p73 = scmp.eq.s32.totalorder %s21, 0
      %p74 = por %p72, %p73
      %p75 = scmp.ne.s32.totalorder %s67, %s69
      %p76 = scmp.eq.s32.totalorder %s26, 7
      %p77 = por %p75, %p76
      %p78 = scmp.ne.s32.totalorder %s69, %s70
      %p79 = scmp.eq.s32.totalorder %s26, 0
      %p80 = por %p78, %p79
      %p81 = scmp.ne.s32.totalorder %s69, %s70
      %p82 = scmp.eq.s32.totalorder %s27, 7
      %p83 = por %p81, %p82
      %p85 = scmp.ne.s32.totalorder %s70, %s84
      %p86 = scmp.eq.s32.totalorder %s27, 0
      %p87 = por %p85, %p86
      %s89 = sadd.s32 %s88, 1
      %p92 = scmp.eq.s32.totalorder %s21, 7
      %p93 = scmp.ne.s32.totalorder %s88, %s90
      %p94 = scmp.eq.s32.totalorder %s21, 0
      %p95 = por %p93, %p94
      %p96 = scmp.ne.s32.totalorder %s88, %s90
      %p97 = scmp.eq.s32.totalorder %s26, 7
      %p98 = por %p96, %p97
      %p99 = scmp.ne.s32.totalorder %s90, %s91
      %p100 = scmp.eq.s32.totalorder %s26, 0
      %p101 = por %p99, %p100
      %p102 = scmp.ne.s32.totalorder %s90, %s91
      %p103 = scmp.eq.s32.totalorder %s27, 7
      %p104 = por %p102, %p103
      %p106 = scmp.ne.s32.totalorder %s91, %s105
      %p107 = scmp.eq.s32.totalorder %s27, 0
      %p108 = por %p106, %p107
      %s109 = ssub.s32 %s29, %s36
      %p110 = scmp.eq.s32.totalorder %s109, 0
      %s112 = sadd.s32 %s111, 1
      %s113 = scalar_select %p110, %s111, %s112
      %p116 = pneg %p110
      %p117 = scmp.eq.s32.totalorder %s21, 7
      %p118 = por %p116, %p117
      %p119 = scmp.ne.s32.totalorder %s111, %s114
      %p120 = scmp.eq.s32.totalorder %s21, 0
      %p121 = por %p119, %p120
      %p122 = scmp.ne.s32.totalorder %s111, %s114
      %p123 = scmp.eq.s32.totalorder %s26, 7
      %p124 = por %p122, %p123
      %p125 = scmp.ne.s32.totalorder %s114, %s115
      %p126 = scmp.eq.s32.totalorder %s26, 0
      %p127 = por %p125, %p126
      %p128 = scmp.ne.s32.totalorder %s114, %s115
      %p129 = scmp.eq.s32.totalorder %s27, 7
      %p130 = por %p128, %p129
      %p132 = scmp.ne.s32.totalorder %s115, %s131
      %p133 = scmp.eq.s32.totalorder %s27, 0
      %p134 = por %p132, %p133
      %s135 = ssub.s32 %s29, %s36
      %p136 = scmp.eq.s32.totalorder %s135, 0
      %s138 = sadd.s32 %s137, 1
      %s139 = scalar_select %p136, %s137, %s138
      %p142 = pneg %p136
      %p143 = scmp.eq.s32.totalorder %s21, 7
      %p144 = por %p142, %p143
      %p145 = scmp.ne.s32.totalorder %s137, %s140
      %p146 = scmp.eq.s32.totalorder %s21, 0
      %p147 = por %p145, %p146
      %p148 = scmp.ne.s32.totalorder %s137, %s140
      %p149 = scmp.eq.s32.totalorder %s26, 7
      %p150 = por %p148, %p149
      %p151 = scmp.ne.s32.totalorder %s140, %s141
      %p152 = scmp.eq.s32.totalorder %s26, 0
      %p153 = por %p151, %p152
      %p154 = scmp.ne.s32.totalorder %s140, %s141
      %p155 = scmp.eq.s32.totalorder %s27, 7
      %p156 = por %p154, %p155
      %p158 = scmp.ne.s32.totalorder %s141, %s157
      %p159 = scmp.eq.s32.totalorder %s27, 0
      %p160 = por %p158, %p159
      %s161 = ssub.s32 %s29, %s36
      %p162 = scmp.eq.s32.totalorder %s161, 0
      %s164 = sadd.s32 %s163, 1
      %s165 = scalar_select %p162, %s163, %s164
      %p168 = pneg %p162
      %p169 = scmp.eq.s32.totalorder %s21, 7
      %p170 = por %p168, %p169
      %p171 = scmp.ne.s32.totalorder %s163, %s166
      %p172 = scmp.eq.s32.totalorder %s21, 0
      %p173 = por %p171, %p172
      %p174 = scmp.ne.s32.totalorder %s163, %s166
      %p175 = scmp.eq.s32.totalorder %s26, 7
      %p176 = por %p174, %p175
      %p177 = scmp.ne.s32.totalorder %s166, %s167
      %p178 = scmp.eq.s32.totalorder %s26, 0
      %p179 = por %p177, %p178
      %p180 = scmp.ne.s32.totalorder %s166, %s167
      %p181 = scmp.eq.s32.totalorder %s27, 7
      %p182 = por %p180, %p181
      %p184 = scmp.ne.s32.totalorder %s167, %s183
      %p185 = scmp.eq.s32.totalorder %s27, 0
      %p186 = por %p184, %p185
      %s187 = ssub.s32 %s29, %s36
      %p188 = scmp.eq.s32.totalorder %s187, 0
      %s190 = sadd.s32 %s189, 1
      %s191 = scalar_select %p188, %s189, %s190
      %p194 = pneg %p188
      %p195 = scmp.eq.s32.totalorder %s21, 7
      %p196 = por %p194, %p195
      %p197 = scmp.ne.s32.totalorder %s189, %s192
      %p198 = scmp.eq.s32.totalorder %s21, 0
      %p199 = por %p197, %p198
      %p200 = scmp.ne.s32.totalorder %s189, %s192
      %p201 = scmp.eq.s32.totalorder %s26, 7
      %p202 = por %p200, %p201
      %p203 = scmp.ne.s32.totalorder %s192, %s193
      %p204 = scmp.eq.s32.totalorder %s26, 0
      %p205 = por %p203, %p204
      %p206 = scmp.ne.s32.totalorder %s192, %s193
      %p207 = scmp.eq.s32.totalorder %s27, 7
      %p208 = por %p206, %p207
      %p210 = scmp.ne.s32.totalorder %s193, %s209
      %p211 = scmp.eq.s32.totalorder %s27, 0
      %p212 = por %p210, %p211
      %s213 = ssub.s32 %s29, %s36
      %p214 = scmp.eq.s32.totalorder %s213, 0
      %s216 = sadd.s32 %s215, 1
      %s217 = scalar_select %p214, %s215, %s216
      %p220 = pneg %p214
      %p221 = scmp.eq.s32.totalorder %s21, 7
      %p222 = por %p220, %p221
      %p223 = scmp.ne.s32.totalorder %s215, %s218
      %p224 = scmp.eq.s32.totalorder %s21, 0
      %p225 = por %p223, %p224
      %p226 = scmp.ne.s32.totalorder %s215, %s218
      %p227 = scmp.eq.s32.totalorder %s26, 7
      %p228 = por %p226, %p227
      %p229 = scmp.ne.s32.totalorder %s218, %s219
      %p230 = scmp.eq.s32.totalorder %s26, 0
      %p231 = por %p229, %p230
      %p232 = scmp.ne.s32.totalorder %s218, %s219
      %p233 = scmp.eq.s32.totalorder %s27, 7
      %p234 = por %p232, %p233
      %p236 = scmp.ne.s32.totalorder %s219, %s235
      %p237 = scmp.eq.s32.totalorder %s27, 0
      %p238 = por %p236, %p237
      %s239 = ssub.s32 %s28, %s40
      %p240 = scmp.eq.s32.totalorder %s239, 0
      %s242 = sadd.s32 %s241, 1
      %s243 = scalar_select %p240, %s241, %s242
      %p246 = pneg %p240
      %p247 = scmp.eq.s32.totalorder %s21, 7
      %p248 = por %p246, %p247
      %p249 = scmp.ne.s32.totalorder %s241, %s244
      %p250 = scmp.eq.s32.totalorder %s21, 0
      %p251 = por %p249, %p250
      %p252 = scmp.ne.s32.totalorder %s241, %s244
      %p253 = scmp.eq.s32.totalorder %s26, 7
      %p254 = por %p252, %p253
      %p255 = scmp.ne.s32.totalorder %s244, %s245
      %p256 = scmp.eq.s32.totalorder %s26, 0
      %p257 = por %p255, %p256
      %p258 = scmp.ne.s32.totalorder %s244, %s245
      %p259 = scmp.eq.s32.totalorder %s27, 7
      %p260 = por %p258, %p259
      %p262 = scmp.ne.s32.totalorder %s245, %s261
      %p263 = scmp.eq.s32.totalorder %s27, 0
      %p264 = por %p262, %p263
      %p265 = scmp.le.s32.totalorder 1, %s21
      %p266 = scmp.lt.s32.totalorder %s21, 9
      %p267 = pnand %p265, %p266
      %p268 = pneg %p267
      // Predicated region
      $region9: #{transformer_blocks_forward.1} parent=5 // pred_check
        _
      $region10: #{transformer_blocks_forward.1} parent=5 // pred_check_branch
        %270 = sbr.rel (%p267) target = $region12
      $region11: #{transformer_blocks_forward.1} parent=5 // pred_region
        %s271 = ssub.s32 %s21, 1
        // Predicated region
        $region13: #{transformer_blocks_forward.1} parent=11 // pred_check
          %p272 = pneg %p80
        $region14: #{transformer_blocks_forward.1} parent=11 // pred_check_branch
          %274 = sbr.rel (%p272) target = $region16
        $region15: #{transformer_blocks_forward.1} parent=11 // pred_region
          _
        $region16: #{transformer_blocks_forward.1} parent=11 // pred_fallthru
          _
        // Predicated region
        $region17: #{transformer_blocks_forward.1} parent=11 // pred_check
          %p275 = pneg %p101
        $region18: #{transformer_blocks_forward.1} parent=11 // pred_check_branch
          %277 = sbr.rel (%p275) target = $region20
        $region19: #{transformer_blocks_forward.1} parent=11 // pred_region
          %279 = vsyncadd [#allocation7], 0
          %s281 = sshll.u32 %s2, 4
          %s282 = int_to_ptr.hbm [resolvable:$true] %s281
          %s283 = sshll.u32 [#allocation6], 4
          %s284 = int_to_ptr.vmem [resolvable:$true] %s283
          %286 = dma.hbm_to_vmem [thread:$0]  %s282, 64, %s284, [#allocation7]
        $region20: #{transformer_blocks_forward.1} parent=11 // pred_fallthru
          _
      $region12: #{transformer_blocks_forward.1} parent=5 // pred_fallthru
        _
      %p287 = scmp.lt.s32.totalorder %s21, 8
      // Predicated region
      $region21: #{transformer_blocks_forward.1} parent=5 // pred_check
        %p288 = pneg %p287
      $region22: #{transformer_blocks_forward.1} parent=5 // pred_check_branch
        %290 = sbr.rel (%p288) target = $region24
      $region23: #{transformer_blocks_forward.1} parent=5 // pred_region
        // Predicated region
        $region25: #{transformer_blocks_forward.1} parent=23 // pred_check
          %p291 = pneg %p53
        $region26: #{transformer_blocks_forward.1} parent=23 // pred_check_branch
          %293 = sbr.rel (%p291) target = $region28
        $region27: #{transformer_blocks_forward.1} parent=23 // pred_region
          %s294 = sand.u32 %s21, 1
          %s295 = scalar_lea.sflag [#allocation4], %s294
          %s296 = sand.u32 %s43, 1
          %s297 = smul.addr %s296, 64
          %s298 = scalar_lea.vmem [#allocation3], %s297
          %s299 = smul.u32 8, %s28
          %301 = vsyncadd %s295, 0
          %s302 = smul.addr %s299, 8
          %s303 = scalar_lea.hbm %s0, %s302
          %s304 = sshll.u32 %s303, 4
          %s305 = int_to_ptr.hbm [resolvable:$true] %s304
          %s306 = sshll.u32 %s298, 4
          %s307 = int_to_ptr.vmem [resolvable:$true] %s306
          %312 = dma.hbm_to_vmem [thread:$0]  %s305, 1024, %s307, %s295, 128, 128, 8
        $region28: #{transformer_blocks_forward.1} parent=23 // pred_fallthru
          _
        // Predicated region
        $region29: #{transformer_blocks_forward.1} parent=23 // pred_check
          %p313 = pneg %p121
        $region30: #{transformer_blocks_forward.1} parent=23 // pred_check_branch
          %315 = sbr.rel (%p313) target = $region32
        $region31: #{transformer_blocks_forward.1} parent=23 // pred_region
          %p316 = scmp.lt.s32.totalorder %s29, 3
          %s317 = scalar_select %p316, %s29, 3
          %s318 = smul.addr %s317, 8
          %s319 = scalar_lea.vmem %s3, %s318
        $region32: #{transformer_blocks_forward.1} parent=23 // pred_fallthru
          _
        // Predicated region
        $region33: #{transformer_blocks_forward.1} parent=23 // pred_check
          %p320 = pneg %p147
        $region34: #{transformer_blocks_forward.1} parent=23 // pred_check_branch
          %322 = sbr.rel (%p320) target = $region36
        $region35: #{transformer_blocks_forward.1} parent=23 // pred_region
          %s323 = sand.u32 %s21, 1
          %s324 = scalar_lea.sflag [#allocation4], %s323
          %s325 = sand.u32 %s137, 1
          %s326 = smul.addr %s325, 128
          %s327 = scalar_lea.vmem [#allocation8], %s326
          %329 = vsyncadd %s324, 0
          %s330 = smul.addr %s29, 32
          %s331 = smul.addr %s330, 4
          %s332 = scalar_lea.hbm %s4, %s331
          %s333 = sshll.u32 %s332, 4
          %s334 = int_to_ptr.hbm [resolvable:$true] %s333
          %s335 = sshll.u32 %s327, 4
          %s336 = int_to_ptr.vmem [resolvable:$true] %s335
          %341 = dma.hbm_to_vmem [thread:$0]  %s334, 2048, %s336, %s324, 64, 64, 4
        $region36: #{transformer_blocks_forward.1} parent=23 // pred_fallthru
          _
        // Predicated region
        $region37: #{transformer_blocks_forward.1} parent=23 // pred_check
          %p342 = pneg %p173
        $region38: #{transformer_blocks_forward.1} parent=23 // pred_check_branch
          %344 = sbr.rel (%p342) target = $region40
        $region39: #{transformer_blocks_forward.1} parent=23 // pred_region
          %s345 = sand.u32 %s21, 1
          %s346 = scalar_lea.sflag [#allocation4], %s345
          %s347 = sand.u32 %s163, 1
          %s348 = smul.addr %s347, 256
          %s349 = scalar_lea.vmem [#allocation9], %s348
          %351 = vsyncadd %s346, 0
          %s352 = smul.addr %s29, 64
          %s353 = smul.addr %s352, 4
          %s354 = scalar_lea.hbm %s5, %s353
          %s355 = sshll.u32 %s354, 4
          %s356 = int_to_ptr.hbm [resolvable:$true] %s355
          %s357 = sshll.u32 %s349, 4
          %s358 = int_to_ptr.vmem [resolvable:$true] %s357
          %363 = dma.hbm_to_vmem [thread:$0]  %s356, 4096, %s358, %s346, 1024, 1024, 64
        $region40: #{transformer_blocks_forward.1} parent=23 // pred_fallthru
          _
        // Predicated region
        $region41: #{transformer_blocks_forward.1} parent=23 // pred_check
          %p364 = pneg %p199
        $region42: #{transformer_blocks_forward.1} parent=23 // pred_check_branch
          %366 = sbr.rel (%p364) target = $region44
        $region43: #{transformer_blocks_forward.1} parent=23 // pred_region
          %p367 = scmp.lt.s32.totalorder %s29, 3
          %s368 = scalar_select %p367, %s29, 3
          %s369 = smul.addr %s368, 16
          %s370 = scalar_lea.vmem %s6, %s369
        $region44: #{transformer_blocks_forward.1} parent=23 // pred_fallthru
          _
        // Predicated region
        $region45: #{transformer_blocks_forward.1} parent=23 // pred_check
          %p371 = pneg %p225
        $region46: #{transformer_blocks_forward.1} parent=23 // pred_check_branch
          %373 = sbr.rel (%p371) target = $region48
        $region47: #{transformer_blocks_forward.1} parent=23 // pred_region
          %s374 = sand.u32 %s21, 1
          %s375 = scalar_lea.sflag [#allocation4], %s374
          %s376 = sand.u32 %s215, 1
          %s377 = smul.addr %s376, 256
          %s378 = scalar_lea.vmem [#allocation10], %s377
          %380 = vsyncadd %s375, 0
          %s381 = smul.addr %s29, 64
          %s382 = smul.addr %s381, 4
          %s383 = scalar_lea.hbm %s7, %s382
          %s384 = sshll.u32 %s383, 4
          %s385 = int_to_ptr.hbm [resolvable:$true] %s384
          %s386 = sshll.u32 %s378, 4
          %s387 = int_to_ptr.vmem [resolvable:$true] %s386
          %392 = dma.hbm_to_vmem [thread:$0]  %s385, 4096, %s387, %s375, 1024, 1024, 64
        $region48: #{transformer_blocks_forward.1} parent=23 // pred_fallthru
          _
      $region24: #{transformer_blocks_forward.1} parent=5 // pred_fallthru
        _
      %p393 = scmp.le.s32.totalorder 1, %s21
      %p394 = scmp.lt.s32.totalorder %s21, 9
      %p395 = pnand %p393, %p394
      %p396 = pneg %p395
      // Predicated region
      $region49: #{transformer_blocks_forward.1} parent=5 // pred_check
        _
      $region50: #{transformer_blocks_forward.1} parent=5 // pred_check_branch
        %398 = sbr.rel (%p395) target = $region52
      $region51: #{transformer_blocks_forward.1} parent=5 // pred_region
        %s399 = ssub.s32 %s21, 1
        %s400 = sand.u32 %s26, 1
        %s401 = scalar_lea.sflag [#allocation4], %s400
        %s402 = sand.u32 %s46, 1
        %s403 = smul.addr %s402, 64
        %s404 = scalar_lea.vmem [#allocation3], %s403
        // Predicated region
        $region53: #{transformer_blocks_forward.1} parent=51 // pred_check
          %p405 = pneg %p59
        $region54: #{transformer_blocks_forward.1} parent=51 // pred_check_branch
          %407 = sbr.rel (%p405) target = $region56
        $region55: #{transformer_blocks_forward.1} parent=51 // pred_region
          %409 = dma.done %s401, 1024
        $region56: #{transformer_blocks_forward.1} parent=51 // pred_fallthru
          _
        // Predicated region
        $region57: #{transformer_blocks_forward.1} parent=51 // pred_check
          %p410 = pneg %p101
        $region58: #{transformer_blocks_forward.1} parent=51 // pred_check_branch
          %412 = sbr.rel (%p410) target = $region60
        $region59: #{transformer_blocks_forward.1} parent=51 // pred_region
          %414 = dma.done [#allocation7], 64
        $region60: #{transformer_blocks_forward.1} parent=51 // pred_fallthru
          _
        %s415 = sand.u32 %s26, 1
        %s416 = scalar_lea.sflag [#allocation4], %s415
        %s417 = sand.u32 %s140, 1
        %s418 = smul.addr %s417, 128
        %s419 = scalar_lea.vmem [#allocation8], %s418
        // Predicated region
        $region61: #{transformer_blocks_forward.1} parent=51 // pred_check
          %p420 = pneg %p153
        $region62: #{transformer_blocks_forward.1} parent=51 // pred_check_branch
          %422 = sbr.rel (%p420) target = $region64
        $region63: #{transformer_blocks_forward.1} parent=51 // pred_region
          %424 = dma.done %s416, 2048
        $region64: #{transformer_blocks_forward.1} parent=51 // pred_fallthru
          _
        %s425 = sand.u32 %s26, 1
        %s426 = scalar_lea.sflag [#allocation4], %s425
        %s427 = sand.u32 %s166, 1
        %s428 = smul.addr %s427, 256
        %s429 = scalar_lea.vmem [#allocation9], %s428
        // Predicated region
        $region65: #{transformer_blocks_forward.1} parent=51 // pred_check
          %p430 = pneg %p179
        $region66: #{transformer_blocks_forward.1} parent=51 // pred_check_branch
          %432 = sbr.rel (%p430) target = $region68
        $region67: #{transformer_blocks_forward.1} parent=51 // pred_region
          %434 = dma.done %s426, 4096
        $region68: #{transformer_blocks_forward.1} parent=51 // pred_fallthru
          _
        %s435 = sand.u32 %s26, 1
        %s436 = scalar_lea.sflag [#allocation4], %s435
        %s437 = sand.u32 %s218, 1
        %s438 = smul.addr %s437, 256
        %s439 = scalar_lea.vmem [#allocation10], %s438
        // Predicated region
        $region69: #{transformer_blocks_forward.1} parent=51 // pred_check
          %p440 = pneg %p231
        $region70: #{transformer_blocks_forward.1} parent=51 // pred_check_branch
          %442 = sbr.rel (%p440) target = $region72
        $region71: #{transformer_blocks_forward.1} parent=51 // pred_region
          %444 = dma.done %s436, 4096
        $region72: #{transformer_blocks_forward.1} parent=51 // pred_fallthru
          _
        %s445 = sand.u32 %s26, 1
        %s446 = scalar_lea.sflag [#allocation4], %s445
        %s447 = sand.u32 %s46, 1
        %s448 = smul.addr %s447, 64
        %s449 = scalar_lea.vmem [#allocation3], %s448
        %p450 = pneg %p59
        %p451 = pneg %p56
        %p452 = pneg %p80
        %p453 = pneg %p77
        %p454 = pneg %p101
        %p455 = pneg %p98
        %p456 = scmp.lt.s32.totalorder %s31, 3
        %s457 = scalar_select %p456, %s31, 3
        %s458 = smul.addr %s457, 8
        %s459 = scalar_lea.vmem %s3, %s458
        %p460 = pneg %p127
        %p461 = pneg %p124
        %s462 = sand.u32 %s26, 1
        %s463 = scalar_lea.sflag [#allocation4], %s462
        %s464 = sand.u32 %s140, 1
        %s465 = smul.addr %s464, 128
        %s466 = scalar_lea.vmem [#allocation8], %s465
        %p467 = pneg %p153
        %p468 = pneg %p150
        %s469 = sand.u32 %s26, 1
        %s470 = scalar_lea.sflag [#allocation4], %s469
        %s471 = sand.u32 %s166, 1
        %s472 = smul.addr %s471, 256
        %s473 = scalar_lea.vmem [#allocation9], %s472
        %p474 = pneg %p179
        %p475 = pneg %p176
        %p476 = scmp.lt.s32.totalorder %s31, 3
        %s477 = scalar_select %p476, %s31, 3
        %s478 = smul.addr %s477, 16
        %s479 = scalar_lea.vmem %s6, %s478
        %p480 = pneg %p205
        %p481 = pneg %p202
        %s482 = sand.u32 %s26, 1
        %s483 = scalar_lea.sflag [#allocation4], %s482
        %s484 = sand.u32 %s218, 1
        %s485 = smul.addr %s484, 256
        %s486 = scalar_lea.vmem [#allocation10], %s485
        %p487 = pneg %p231
        %p488 = pneg %p228
        %p489 = pneg %p257
        %p490 = pneg %p254
        %s491 = sand.u32 %s244, 1
        %s492 = scalar_lea.sflag [#allocation5], %s491
        %s493 = sand.u32 %s244, 1
        %s494 = smul.addr %s493, 64
        %s495 = scalar_lea.vmem [#allocation11], %s494
        %s496 = smul.u32 8, %s30
        %p497 = scmp.lt.s32.totalorder %s31, 3
        %s498 = scalar_select %p497, %s31, 3
        %s499 = smul.addr %s498, 8
        %s500 = scalar_lea.vmem %s3, %s499
        %p501 = scmp.lt.s32.totalorder %s31, 3
        %s502 = scalar_select %p501, %s31, 3
        %s503 = smul.addr %s502, 16
        %s504 = scalar_lea.vmem %s6, %s503
        %s505 = smul.u32 8, %s30
        %p507 = scmp.eq.s32.totalorder %s31, 0
        // Predicated region
        $region73: #{transformer_blocks_forward.1} parent=51 // pred_check
          %p508 = pneg %p507
        $region74: #{transformer_blocks_forward.1} parent=51 // pred_check_branch
          %510 = sbr.rel (%p508) target = $region76
        $region75: #{transformer_blocks_forward.1} parent=51 // pred_region
          %v511 = vld [vmem:[%s404] sm:$0xff]
          %v512 = vld [vmem:[%s404 + $0x8] sm:$0xff]
          %v513 = vld [vmem:[%s404 + $0x10] sm:$0xff]
          %v514 = vld [vmem:[%s404 + $0x18] sm:$0xff]
          %v515 = vld [vmem:[%s404 + $0x20] sm:$0xff]
          %v516 = vld [vmem:[%s404 + $0x28] sm:$0xff]
          %v517 = vld [vmem:[%s404 + $0x30] sm:$0xff]
          %v518 = vld [vmem:[%s404 + $0x38] sm:$0xff]
          %v519 = vld [vmem:[#allocation6] sm:$0x1]
          %v520 = vld [vmem:[#allocation6 + $0x1] sm:$0x1]
          %vm521 = vcmask 261120
          %v522 = vsel %vm521, %v511, 0.0
          %523 = vadd.xlane.f32.xlu0 %v522
          %v524 = vpop.xlane.xlu0 %523
          %v525 = vsel %vm521, %v512, 0.0
          %526 = vadd.xlane.f32.xlu0 %v525
          %v527 = vpop.xlane.xlu0 %526
          %v528 = vsel %vm521, %v513, 0.0
          %529 = vadd.xlane.f32.xlu0 %v528
          %v530 = vpop.xlane.xlu0 %529
          %v531 = vsel %vm521, %v514, 0.0
          %532 = vadd.xlane.f32.xlu0 %v531
          %v533 = vpop.xlane.xlu0 %532
          %v534 = vsel %vm521, %v515, 0.0
          %535 = vadd.xlane.f32.xlu0 %v534
          %v536 = vpop.xlane.xlu0 %535
          %v537 = vsel %vm521, %v516, 0.0
          %538 = vadd.xlane.f32.xlu0 %v537
          %v539 = vpop.xlane.xlu0 %538
          %v540 = vsel %vm521, %v517, 0.0
          %541 = vadd.xlane.f32.xlu0 %v540
          %v542 = vpop.xlane.xlu0 %541
          %v543 = vsel %vm521, %v518, 0.0
          %544 = vadd.xlane.f32.xlu0 %v543
          %v545 = vpop.xlane.xlu0 %544
          %v546 = vrcp.pop 32.0
          %v547 = vmul.f32 32.0, %v546
          %v548 = vsub.f32 1.0, %v547
          %v549 = vmul.f32 %v546, %v548
          %v550 = vadd.f32 %v546, %v549
          %vm551 = vweird.f32 %v546
          %v552 = vsel %vm551, %v546, %v550
          %v553 = vmul.f32 %v524, %v552
          %v554 = vmul.f32 %v527, %v552
          %v555 = vmul.f32 %v530, %v552
          %v556 = vmul.f32 %v533, %v552
          %v557 = vmul.f32 %v536, %v552
          %v558 = vmul.f32 %v539, %v552
          %v559 = vmul.f32 %v542, %v552
          %v560 = vmul.f32 %v545, %v552
          %v561 = vsub.f32 %v511, %v553
          %v562 = vsub.f32 %v512, %v554
          %v563 = vsub.f32 %v513, %v555
          %v564 = vsub.f32 %v514, %v556
          %v565 = vsub.f32 %v515, %v557
          %v566 = vsub.f32 %v516, %v558
          %v567 = vsub.f32 %v517, %v559
          %v568 = vsub.f32 %v518, %v560
          %v569 = vmul.f32 %v561, %v561
          %v570 = vmul.f32 %v562, %v562
          %v571 = vmul.f32 %v563, %v563
          %v572 = vmul.f32 %v564, %v564
          %v573 = vmul.f32 %v565, %v565
          %v574 = vmul.f32 %v566, %v566
          %v575 = vmul.f32 %v567, %v567
          %v576 = vmul.f32 %v568, %v568
          %v577 = vsel %vm521, %v569, 0.0
          %578 = vadd.xlane.f32.xlu0 %v577
          %v579 = vpop.xlane.xlu0 %578
          %v580 = vsel %vm521, %v570, 0.0
          %581 = vadd.xlane.f32.xlu0 %v580
          %v582 = vpop.xlane.xlu0 %581
          %v583 = vsel %vm521, %v571, 0.0
          %584 = vadd.xlane.f32.xlu0 %v583
          %v585 = vpop.xlane.xlu0 %584
          %v586 = vsel %vm521, %v572, 0.0
          %587 = vadd.xlane.f32.xlu0 %v586
          %v588 = vpop.xlane.xlu0 %587
          %v589 = vsel %vm521, %v573, 0.0
          %590 = vadd.xlane.f32.xlu0 %v589
          %v591 = vpop.xlane.xlu0 %590
          %v592 = vsel %vm521, %v574, 0.0
          %593 = vadd.xlane.f32.xlu0 %v592
          %v594 = vpop.xlane.xlu0 %593
          %v595 = vsel %vm521, %v575, 0.0
          %596 = vadd.xlane.f32.xlu0 %v595
          %v597 = vpop.xlane.xlu0 %596
          %v598 = vsel %vm521, %v576, 0.0
          %599 = vadd.xlane.f32.xlu0 %v598
          %v600 = vpop.xlane.xlu0 %599
          %v601 = vmul.f32 %v579, %v552
          %v602 = vmul.f32 %v582, %v552
          %v603 = vmul.f32 %v585, %v552
          %v604 = vmul.f32 %v588, %v552
          %v605 = vmul.f32 %v591, %v552
          %v606 = vmul.f32 %v594, %v552
          %v607 = vmul.f32 %v597, %v552
          %v608 = vmul.f32 %v600, %v552
          %v609 = vadd.f32 %v601, 1e-05
          %v610 = vadd.f32 %v602, 1e-05
          %v611 = vadd.f32 %v603, 1e-05
          %v612 = vadd.f32 %v604, 1e-05
          %v613 = vadd.f32 %v605, 1e-05
          %v614 = vadd.f32 %v606, 1e-05
          %v615 = vadd.f32 %v607, 1e-05
          %v616 = vadd.f32 %v608, 1e-05
          %v617 = vrsqrt.pop %v609
          %v618 = vmul.f32 %v617, %v609
          %v619 = vmul.f32 %v618, %v617
          %v620 = vmul.f32 0.5, %v619
          %v621 = vsub.f32 1.5, %v620
          %v622 = vmul.f32 %v617, %v621
          %vm623 = vweird.f32 %v609
          %vm624 = vweird.f32 %v617
          %vm625 = vmor %vm623, %vm624
          %v626 = vsel %vm625, %v617, %v622
          %v627 = vrsqrt.pop %v610
          %v628 = vmul.f32 %v627, %v610
          %v629 = vmul.f32 %v628, %v627
          %v630 = vmul.f32 0.5, %v629
          %v631 = vsub.f32 1.5, %v630
          %v632 = vmul.f32 %v627, %v631
          %vm633 = vweird.f32 %v610
          %vm634 = vweird.f32 %v627
          %vm635 = vmor %vm633, %vm634
          %v636 = vsel %vm635, %v627, %v632
          %v637 = vrsqrt.pop %v611
          %v638 = vmul.f32 %v637, %v611
          %v639 = vmul.f32 %v638, %v637
          %v640 = vmul.f32 0.5, %v639
          %v641 = vsub.f32 1.5, %v640
          %v642 = vmul.f32 %v637, %v641
          %vm643 = vweird.f32 %v611
          %vm644 = vweird.f32 %v637
          %vm645 = vmor %vm643, %vm644
          %v646 = vsel %vm645, %v637, %v642
          %v647 = vrsqrt.pop %v612
          %v648 = vmul.f32 %v647, %v612
          %v649 = vmul.f32 %v648, %v647
          %v650 = vmul.f32 0.5, %v649
          %v651 = vsub.f32 1.5, %v650
          %v652 = vmul.f32 %v647, %v651
          %vm653 = vweird.f32 %v612
          %vm654 = vweird.f32 %v647
          %vm655 = vmor %vm653, %vm654
          %v656 = vsel %vm655, %v647, %v652
          %v657 = vrsqrt.pop %v613
          %v658 = vmul.f32 %v657, %v613
          %v659 = vmul.f32 %v658, %v657
          %v660 = vmul.f32 0.5, %v659
          %v661 = vsub.f32 1.5, %v660
          %v662 = vmul.f32 %v657, %v661
          %vm663 = vweird.f32 %v613
          %vm664 = vweird.f32 %v657
          %vm665 = vmor %vm663, %vm664
          %v666 = vsel %vm665, %v657, %v662
          %v667 = vrsqrt.pop %v614
          %v668 = vmul.f32 %v667, %v614
          %v669 = vmul.f32 %v668, %v667
          %v670 = vmul.f32 0.5, %v669
          %v671 = vsub.f32 1.5, %v670
          %v672 = vmul.f32 %v667, %v671
          %vm673 = vweird.f32 %v614
          %vm674 = vweird.f32 %v667
          %vm675 = vmor %vm673, %vm674
          %v676 = vsel %vm675, %v667, %v672
          %v677 = vrsqrt.pop %v615
          %v678 = vmul.f32 %v677, %v615
          %v679 = vmul.f32 %v678, %v677
          %v680 = vmul.f32 0.5, %v679
          %v681 = vsub.f32 1.5, %v680
          %v682 = vmul.f32 %v677, %v681
          %vm683 = vweird.f32 %v615
          %vm684 = vweird.f32 %v677
          %vm685 = vmor %vm683, %vm684
          %v686 = vsel %vm685, %v677, %v682
          %v687 = vrsqrt.pop %v616
          %v688 = vmul.f32 %v687, %v616
          %v689 = vmul.f32 %v688, %v687
          %v690 = vmul.f32 0.5, %v689
          %v691 = vsub.f32 1.5, %v690
          %v692 = vmul.f32 %v687, %v691
          %vm693 = vweird.f32 %v616
          %vm694 = vweird.f32 %v687
          %vm695 = vmor %vm693, %vm694
          %v696 = vsel %vm695, %v687, %v692
          %v697 = vmul.f32 %v561, %v626
          %v698 = vmul.f32 %v562, %v636
          %v699 = vmul.f32 %v563, %v646
          %v700 = vmul.f32 %v564, %v656
          %v701 = vmul.f32 %v565, %v666
          %v702 = vmul.f32 %v566, %v676
          %v703 = vmul.f32 %v567, %v686
          %v704 = vmul.f32 %v568, %v696
          %v705 = vperm.slane %v519, 0
          %v706 = vmul.f32 %v697, %v705
          %v707 = vmul.f32 %v698, %v705
          %v708 = vmul.f32 %v699, %v705
          %v709 = vmul.f32 %v700, %v705
          %v710 = vmul.f32 %v701, %v705
          %v711 = vmul.f32 %v702, %v705
          %v712 = vmul.f32 %v703, %v705
          %v713 = vmul.f32 %v704, %v705
          %v714 = vperm.slane %v520, 0
          %v715 = vadd.f32 %v706, %v714
          %v716 = vadd.f32 %v707, %v714
          %v717 = vadd.f32 %v708, %v714
          %v718 = vadd.f32 %v709, %v714
          %v719 = vadd.f32 %v710, %v714
          %v720 = vadd.f32 %v711, %v714
          %v721 = vadd.f32 %v712, %v714
          %v722 = vadd.f32 %v713, %v714
          %v723 = vld [vmem:[%s1] sm:$0xff]
          %v724 = vld [vmem:[%s1 + $0x8] sm:$0xff]
          %v725 = vld [vmem:[%s1 + $0x10] sm:$0xff]
          %v726 = vld [vmem:[%s1 + $0x18] sm:$0xff]
          %v727 = vld [vmem:[%s1 + $0x20] sm:$0xff]
          %v728 = vld [vmem:[%s1 + $0x28] sm:$0xff]
          %v729 = vld [vmem:[%s1 + $0x30] sm:$0xff]
          %v730 = vld [vmem:[%s1 + $0x38] sm:$0xff]
          %v731 = vadd.f32 %v715, %v723
          %v732 = vadd.f32 %v716, %v724
          %v733 = vadd.f32 %v717, %v725
          %v734 = vadd.f32 %v718, %v726
          %v735 = vadd.f32 %v719, %v727
          %v736 = vadd.f32 %v720, %v728
          %v737 = vadd.f32 %v721, %v729
          %v738 = vadd.f32 %v722, %v730
          %739 = vst.msk [vmem:[#allocation2] sm:$0xff] %vm521, %v731
          %740 = vst.msk [vmem:[#allocation2 + $0x8] sm:$0xff] %vm521, %v732
          %741 = vst.msk [vmem:[#allocation2 + $0x10] sm:$0xff] %vm521, %v733
          %742 = vst.msk [vmem:[#allocation2 + $0x18] sm:$0xff] %vm521, %v734
          %743 = vst.msk [vmem:[#allocation2 + $0x20] sm:$0xff] %vm521, %v735
          %744 = vst.msk [vmem:[#allocation2 + $0x28] sm:$0xff] %vm521, %v736
          %745 = vst.msk [vmem:[#allocation2 + $0x30] sm:$0xff] %vm521, %v737
          %746 = vst.msk [vmem:[#allocation2 + $0x38] sm:$0xff] %vm521, %v738
        $region76: #{transformer_blocks_forward.1} parent=51 // pred_fallthru
          _
        %v747 = vld [vmem:[#allocation2] sm:$0xff]
        %v748 = vld [vmem:[#allocation2 + $0x8] sm:$0xff]
        %v749 = vld [vmem:[#allocation2 + $0x10] sm:$0xff]
        %v750 = vld [vmem:[#allocation2 + $0x18] sm:$0xff]
        %v751 = vld [vmem:[#allocation2 + $0x20] sm:$0xff]
        %v752 = vld [vmem:[#allocation2 + $0x28] sm:$0xff]
        %v753 = vld [vmem:[#allocation2 + $0x30] sm:$0xff]
        %v754 = vld [vmem:[#allocation2 + $0x38] sm:$0xff]
        %v755 = vld [vmem:[%s500] sm:$0x1]
        %v756 = vld [vmem:[%s500 + $0x1] sm:$0x1]
        %vm757 = vcmask 261120
        %v758 = vsel %vm757, %v747, 0.0
        %759 = vadd.xlane.f32.xlu0 %v758
        %v760 = vpop.xlane.xlu0 %759
        %v761 = vsel %vm757, %v748, 0.0
        %762 = vadd.xlane.f32.xlu0 %v761
        %v763 = vpop.xlane.xlu0 %762
        %v764 = vsel %vm757, %v749, 0.0
        %765 = vadd.xlane.f32.xlu0 %v764
        %v766 = vpop.xlane.xlu0 %765
        %v767 = vsel %vm757, %v750, 0.0
        %768 = vadd.xlane.f32.xlu0 %v767
        %v769 = vpop.xlane.xlu0 %768
        %v770 = vsel %vm757, %v751, 0.0
        %771 = vadd.xlane.f32.xlu0 %v770
        %v772 = vpop.xlane.xlu0 %771
        %v773 = vsel %vm757, %v752, 0.0
        %774 = vadd.xlane.f32.xlu0 %v773
        %v775 = vpop.xlane.xlu0 %774
        %v776 = vsel %vm757, %v753, 0.0
        %777 = vadd.xlane.f32.xlu0 %v776
        %v778 = vpop.xlane.xlu0 %777
        %v779 = vsel %vm757, %v754, 0.0
        %780 = vadd.xlane.f32.xlu0 %v779
        %v781 = vpop.xlane.xlu0 %780
        %v782 = vrcp.pop 32.0
        %v783 = vmul.f32 32.0, %v782
        %v784 = vsub.f32 1.0, %v783
        %v785 = vmul.f32 %v782, %v784
        %v786 = vadd.f32 %v782, %v785
        %vm787 = vweird.f32 %v782
        %v788 = vsel %vm787, %v782, %v786
        %v789 = vmul.f32 %v760, %v788
        %v790 = vmul.f32 %v763, %v788
        %v791 = vmul.f32 %v766, %v788
        %v792 = vmul.f32 %v769, %v788
        %v793 = vmul.f32 %v772, %v788
        %v794 = vmul.f32 %v775, %v788
        %v795 = vmul.f32 %v778, %v788
        %v796 = vmul.f32 %v781, %v788
        %v797 = vsub.f32 %v747, %v789
        %v798 = vsub.f32 %v748, %v790
        %v799 = vsub.f32 %v749, %v791
        %v800 = vsub.f32 %v750, %v792
        %v801 = vsub.f32 %v751, %v793
        %v802 = vsub.f32 %v752, %v794
        %v803 = vsub.f32 %v753, %v795
        %v804 = vsub.f32 %v754, %v796
        %v805 = vmul.f32 %v797, %v797
        %v806 = vmul.f32 %v798, %v798
        %v807 = vmul.f32 %v799, %v799
        %v808 = vmul.f32 %v800, %v800
        %v809 = vmul.f32 %v801, %v801
        %v810 = vmul.f32 %v802, %v802
        %v811 = vmul.f32 %v803, %v803
        %v812 = vmul.f32 %v804, %v804
        %v813 = vsel %vm757, %v805, 0.0
        %814 = vadd.xlane.f32.xlu0 %v813
        %v815 = vpop.xlane.xlu0 %814
        %v816 = vsel %vm757, %v806, 0.0
        %817 = vadd.xlane.f32.xlu0 %v816
        %v818 = vpop.xlane.xlu0 %817
        %v819 = vsel %vm757, %v807, 0.0
        %820 = vadd.xlane.f32.xlu0 %v819
        %v821 = vpop.xlane.xlu0 %820
        %v822 = vsel %vm757, %v808, 0.0
        %823 = vadd.xlane.f32.xlu0 %v822
        %v824 = vpop.xlane.xlu0 %823
        %v825 = vsel %vm757, %v809, 0.0
        %826 = vadd.xlane.f32.xlu0 %v825
        %v827 = vpop.xlane.xlu0 %826
        %v828 = vsel %vm757, %v810, 0.0
        %829 = vadd.xlane.f32.xlu0 %v828
        %v830 = vpop.xlane.xlu0 %829
        %v831 = vsel %vm757, %v811, 0.0
        %832 = vadd.xlane.f32.xlu0 %v831
        %v833 = vpop.xlane.xlu0 %832
        %v834 = vsel %vm757, %v812, 0.0
        %835 = vadd.xlane.f32.xlu0 %v834
        %v836 = vpop.xlane.xlu0 %835
        %v837 = vmul.f32 %v815, %v788
        %v838 = vmul.f32 %v818, %v788
        %v839 = vmul.f32 %v821, %v788
        %v840 = vmul.f32 %v824, %v788
        %v841 = vmul.f32 %v827, %v788
        %v842 = vmul.f32 %v830, %v788
        %v843 = vmul.f32 %v833, %v788
        %v844 = vmul.f32 %v836, %v788
        %v845 = vadd.f32 %v837, 1e-05
        %v846 = vadd.f32 %v838, 1e-05
        %v847 = vadd.f32 %v839, 1e-05
        %v848 = vadd.f32 %v840, 1e-05
        %v849 = vadd.f32 %v841, 1e-05
        %v850 = vadd.f32 %v842, 1e-05
        %v851 = vadd.f32 %v843, 1e-05
        %v852 = vadd.f32 %v844, 1e-05
        %v853 = vrsqrt.pop %v845
        %v854 = vmul.f32 %v853, %v845
        %v855 = vmul.f32 %v854, %v853
        %v856 = vmul.f32 0.5, %v855
        %v857 = vsub.f32 1.5, %v856
        %v858 = vmul.f32 %v853, %v857
        %vm859 = vweird.f32 %v845
        %vm860 = vweird.f32 %v853
        %vm861 = vmor %vm859, %vm860
        %v862 = vsel %vm861, %v853, %v858
        %v863 = vrsqrt.pop %v846
        %v864 = vmul.f32 %v863, %v846
        %v865 = vmul.f32 %v864, %v863
        %v866 = vmul.f32 0.5, %v865
        %v867 = vsub.f32 1.5, %v866
        %v868 = vmul.f32 %v863, %v867
        %vm869 = vweird.f32 %v846
        %vm870 = vweird.f32 %v863
        %vm871 = vmor %vm869, %vm870
        %v872 = vsel %vm871, %v863, %v868
        %v873 = vrsqrt.pop %v847
        %v874 = vmul.f32 %v873, %v847
        %v875 = vmul.f32 %v874, %v873
        %v876 = vmul.f32 0.5, %v875
        %v877 = vsub.f32 1.5, %v876
        %v878 = vmul.f32 %v873, %v877
        %vm879 = vweird.f32 %v847
        %vm880 = vweird.f32 %v873
        %vm881 = vmor %vm879, %vm880
        %v882 = vsel %vm881, %v873, %v878
        %v883 = vrsqrt.pop %v848
        %v884 = vmul.f32 %v883, %v848
        %v885 = vmul.f32 %v884, %v883
        %v886 = vmul.f32 0.5, %v885
        %v887 = vsub.f32 1.5, %v886
        %v888 = vmul.f32 %v883, %v887
        %vm889 = vweird.f32 %v848
        %vm890 = vweird.f32 %v883
        %vm891 = vmor %vm889, %vm890
        %v892 = vsel %vm891, %v883, %v888
        %v893 = vrsqrt.pop %v849
        %v894 = vmul.f32 %v893, %v849
        %v895 = vmul.f32 %v894, %v893
        %v896 = vmul.f32 0.5, %v895
        %v897 = vsub.f32 1.5, %v896
        %v898 = vmul.f32 %v893, %v897
        %vm899 = vweird.f32 %v849
        %vm900 = vweird.f32 %v893
        %vm901 = vmor %vm899, %vm900
        %v902 = vsel %vm901, %v893, %v898
        %v903 = vrsqrt.pop %v850
        %v904 = vmul.f32 %v903, %v850
        %v905 = vmul.f32 %v904, %v903
        %v906 = vmul.f32 0.5, %v905
        %v907 = vsub.f32 1.5, %v906
        %v908 = vmul.f32 %v903, %v907
        %vm909 = vweird.f32 %v850
        %vm910 = vweird.f32 %v903
        %vm911 = vmor %vm909, %vm910
        %v912 = vsel %vm911, %v903, %v908
        %v913 = vrsqrt.pop %v851
        %v914 = vmul.f32 %v913, %v851
        %v915 = vmul.f32 %v914, %v913
        %v916 = vmul.f32 0.5, %v915
        %v917 = vsub.f32 1.5, %v916
        %v918 = vmul.f32 %v913, %v917
        %vm919 = vweird.f32 %v851
        %vm920 = vweird.f32 %v913
        %vm921 = vmor %vm919, %vm920
        %v922 = vsel %vm921, %v913, %v918
        %v923 = vrsqrt.pop %v852
        %v924 = vmul.f32 %v923, %v852
        %v925 = vmul.f32 %v924, %v923
        %v926 = vmul.f32 0.5, %v925
        %v927 = vsub.f32 1.5, %v926
        %v928 = vmul.f32 %v923, %v927
        %vm929 = vweird.f32 %v852
        %vm930 = vweird.f32 %v923
        %vm931 = vmor %vm929, %vm930
        %v932 = vsel %vm931, %v923, %v928
        %v933 = vmul.f32 %v797, %v862
        %v934 = vmul.f32 %v798, %v872
        %v935 = vmul.f32 %v799, %v882
        %v936 = vmul.f32 %v800, %v892
        %v937 = vmul.f32 %v801, %v902
        %v938 = vmul.f32 %v802, %v912
        %v939 = vmul.f32 %v803, %v922
        %v940 = vmul.f32 %v804, %v932
        %v941 = vperm.slane %v755, 0
        %v942 = vmul.f32 %v933, %v941
        %v943 = vmul.f32 %v934, %v941
        %v944 = vmul.f32 %v935, %v941
        %v945 = vmul.f32 %v936, %v941
        %v946 = vmul.f32 %v937, %v941
        %v947 = vmul.f32 %v938, %v941
        %v948 = vmul.f32 %v939, %v941
        %v949 = vmul.f32 %v940, %v941
        %v950 = vperm.slane %v756, 0
        %v951 = vadd.f32 %v942, %v950
        %v952 = vadd.f32 %v943, %v950
        %v953 = vadd.f32 %v944, %v950
        %v954 = vadd.f32 %v945, %v950
        %v955 = vadd.f32 %v946, %v950
        %v956 = vadd.f32 %v947, %v950
        %v957 = vadd.f32 %v948, %v950
        %v958 = vadd.f32 %v949, %v950
        %v959 = vpack.c.bf16 %v952, %v951
        %v960 = vpack.c.bf16 %v954, %v953
        %v961 = vpack.c.bf16 %v956, %v955
        %v962 = vpack.c.bf16 %v958, %v957
        %v963 = vld [vmem:[%s419] sm:$0xf]
        %v964 = vld [vmem:[%s419 + $0x4] sm:$0xf]
        %v965 = vld [vmem:[%s419 + $0x8] sm:$0xf]
        %v966 = vld [vmem:[%s419 + $0xc] sm:$0xf]
        %s967 = scalar_lea.vmem %s419, 32 [#allocation8]
        %v968 = vld [vmem:[%s967] sm:$0xf]
        %v969 = vld [vmem:[%s967 + $0x4] sm:$0xf]
        %v970 = vld [vmem:[%s967 + $0x8] sm:$0xf]
        %v971 = vld [vmem:[%s967 + $0xc] sm:$0xf]
        %s972 = scalar_lea.vmem %s419, 64 [#allocation8]
        %v973 = vld [vmem:[%s972] sm:$0xf]
        %v974 = vld [vmem:[%s972 + $0x4] sm:$0xf]
        %v975 = vld [vmem:[%s972 + $0x8] sm:$0xf]
        %v976 = vld [vmem:[%s972 + $0xc] sm:$0xf]
        %s977 = scalar_lea.vmem %s419, 96 [#allocation8]
        %v978 = vld [vmem:[%s977] sm:$0xf]
        %v979 = vld [vmem:[%s977 + $0x4] sm:$0xf]
        %v980 = vld [vmem:[%s977 + $0x8] sm:$0xf]
        %v981 = vld [vmem:[%s977 + $0xc] sm:$0xf]
        %v986 = vunpack.c.l.b16 %v963
        %v987 = vunpack.c.l.b16 %v964
        %v988 = vunpack.c.l.b16 %v965
        %v989 = vunpack.c.l.b16 %v966
        %v990 = vpack.c.b16 %v987, %v986
        %v991 = vpack.c.b16 %v989, %v988
        %v995 = vsel %vm757, %v959, 0
        %v998 = vsel %vm757, %v960, 0
        %v1001 = vsel %vm757, %v961, 0
        %v1004 = vsel %vm757, %v962, 0
        %1006 = vmatpush.bf16.msra.mxu0 0
        %1007 = vmatpush.bf16.msra.mxu0 0
        %1008 = vmatpush.bf16.msra.mxu0 0
        %1009 = vmatpush.bf16.msra.mxu0 0
        %1010 = vmatpush.bf16.msra.mxu0 0
        %1011 = vmatpush.bf16.msra.mxu0 0
        %1012 = vmatpush.bf16.msra.mxu0 %v991
        %1013 = vmatpush.bf16.msra.mxu0 %v990
        %1014 = vmatmul.bf16.gmra.mxu0 %v995
        %v1015 = vpop.f32.mrf.mxu0
        %v1016 = vadd.f32 0.0, %v1015
        %v1017 = vpop.f32.mrf.mxu0
        %v1018 = vadd.f32 0.0, %v1017
        %1019 = vmatmul.bf16.gmra.mxu0 %v998
        %v1020 = vpop.f32.mrf.mxu0
        %v1021 = vadd.f32 0.0, %v1020
        %v1022 = vpop.f32.mrf.mxu0
        %v1023 = vadd.f32 0.0, %v1022
        %1024 = vmatmul.bf16.gmra.mxu0 %v1001
        %v1025 = vpop.f32.mrf.mxu0
        %v1026 = vadd.f32 0.0, %v1025
        %v1027 = vpop.f32.mrf.mxu0
        %v1028 = vadd.f32 0.0, %v1027
        %1029 = vmatmul.bf16.gmra.mxu0 %v1004
        %v1030 = vpop.f32.mrf.mxu0
        %v1031 = vadd.f32 0.0, %v1030
        %v1032 = vpop.f32.mrf.mxu0
        %v1033 = vadd.f32 0.0, %v1032
        %1034 = vdwg.mxu0
        %v1039 = vunpack.c.l.b16 %v968
        %v1040 = vunpack.c.l.b16 %v969
        %v1041 = vunpack.c.l.b16 %v970
        %v1042 = vunpack.c.l.b16 %v971
        %v1043 = vpack.c.b16 %v1040, %v1039
        %v1044 = vpack.c.b16 %v1042, %v1041
        %1047 = vmatpush.bf16.msra.mxu0 0
        %1048 = vmatpush.bf16.msra.mxu0 0
        %1049 = vmatpush.bf16.msra.mxu0 0
        %1050 = vmatpush.bf16.msra.mxu0 0
        %1051 = vmatpush.bf16.msra.mxu0 0
        %1052 = vmatpush.bf16.msra.mxu0 0
        %1053 = vmatpush.bf16.msra.mxu0 %v1044
        %1054 = vmatpush.bf16.msra.mxu0 %v1043
        %1055 = vmatmul.bf16.gmra.mxu0 %v995
        %v1056 = vpop.f32.mrf.mxu0
        %v1057 = vadd.f32 0.0, %v1056
        %v1058 = vpop.f32.mrf.mxu0
        %v1059 = vadd.f32 0.0, %v1058
        %1060 = vmatmul.bf16.gmra.mxu0 %v998
        %v1061 = vpop.f32.mrf.mxu0
        %v1062 = vadd.f32 0.0, %v1061
        %v1063 = vpop.f32.mrf.mxu0
        %v1064 = vadd.f32 0.0, %v1063
        %1065 = vmatmul.bf16.gmra.mxu0 %v1001
        %v1066 = vpop.f32.mrf.mxu0
        %v1067 = vadd.f32 0.0, %v1066
        %v1068 = vpop.f32.mrf.mxu0
        %v1069 = vadd.f32 0.0, %v1068
        %1070 = vmatmul.bf16.gmra.mxu0 %v1004
        %v1071 = vpop.f32.mrf.mxu0
        %v1072 = vadd.f32 0.0, %v1071
        %v1073 = vpop.f32.mrf.mxu0
        %v1074 = vadd.f32 0.0, %v1073
        %1075 = vdwg.mxu0
        %v1080 = vunpack.c.l.b16 %v973
        %v1081 = vunpack.c.l.b16 %v974
        %v1082 = vunpack.c.l.b16 %v975
        %v1083 = vunpack.c.l.b16 %v976
        %v1084 = vpack.c.b16 %v1081, %v1080
        %v1085 = vpack.c.b16 %v1083, %v1082
        %1088 = vmatpush.bf16.msra.mxu0 0
        %1089 = vmatpush.bf16.msra.mxu0 0
        %1090 = vmatpush.bf16.msra.mxu0 0
        %1091 = vmatpush.bf16.msra.mxu0 0
        %1092 = vmatpush.bf16.msra.mxu0 0
        %1093 = vmatpush.bf16.msra.mxu0 0
        %1094 = vmatpush.bf16.msra.mxu0 %v1085
        %1095 = vmatpush.bf16.msra.mxu0 %v1084
        %1096 = vmatmul.bf16.gmra.mxu0 %v995
        %v1097 = vpop.f32.mrf.mxu0
        %v1098 = vadd.f32 0.0, %v1097
        %v1099 = vpop.f32.mrf.mxu0
        %v1100 = vadd.f32 0.0, %v1099
        %1101 = vmatmul.bf16.gmra.mxu0 %v998
        %v1102 = vpop.f32.mrf.mxu0
        %v1103 = vadd.f32 0.0, %v1102
        %v1104 = vpop.f32.mrf.mxu0
        %v1105 = vadd.f32 0.0, %v1104
        %1106 = vmatmul.bf16.gmra.mxu0 %v1001
        %v1107 = vpop.f32.mrf.mxu0
        %v1108 = vadd.f32 0.0, %v1107
        %v1109 = vpop.f32.mrf.mxu0
        %v1110 = vadd.f32 0.0, %v1109
        %1111 = vmatmul.bf16.gmra.mxu0 %v1004
        %v1112 = vpop.f32.mrf.mxu0
        %v1113 = vadd.f32 0.0, %v1112
        %v1114 = vpop.f32.mrf.mxu0
        %v1115 = vadd.f32 0.0, %v1114
        %1116 = vdwg.mxu0
        %v1117 = vpack.c.bf16 %v1018, %v1016
        %v1118 = vpack.c.bf16 %v1023, %v1021
        %v1119 = vpack.c.bf16 %v1028, %v1026
        %v1120 = vpack.c.bf16 %v1033, %v1031
        %v1121 = vpack.c.bf16 %v1059, %v1057
        %v1122 = vpack.c.bf16 %v1064, %v1062
        %v1123 = vpack.c.bf16 %v1069, %v1067
        %v1124 = vpack.c.bf16 %v1074, %v1072
        %vm1125 = vcmask 523264
        %v1127 = vsel %vm1125, %v1117, 0
        %v1130 = vsel %vm1125, %v1118, 0
        %v1133 = vsel %vm1125, %v1119, 0
        %v1136 = vsel %vm1125, %v1120, 0
        %v1139 = vsel %vm1125, %v1121, 0
        %v1142 = vsel %vm1125, %v1122, 0
        %v1145 = vsel %vm1125, %v1123, 0
        %v1148 = vsel %vm1125, %v1124, 0
        %1150 = vmatpush.bf16.xpose.msra.mxu0 0
        %1151 = vmatpush.bf16.xpose.msra.mxu0 0
        %1152 = vmatpush.bf16.xpose.msra.mxu0 0
        %1153 = vmatpush.bf16.xpose.msra.mxu0 0
        %1154 = vmatpush.bf16.xpose.msra.mxu0 %v1148
        %1155 = vmatpush.bf16.xpose.msra.mxu0 %v1145
        %1156 = vmatpush.bf16.xpose.msra.mxu0 %v1142
        %1157 = vmatpush.bf16.xpose.msra.mxu0 %v1139
        %1158 = vmatmul.bf16.gmra.mxu0 %v1127
        %v1159 = vpop.f32.mrf.mxu0
        %v1160 = vadd.f32 0.0, %v1159
        %v1161 = vpop.f32.mrf.mxu0
        %v1162 = vadd.f32 0.0, %v1161
        %1163 = vmatmul.bf16.gmra.mxu0 %v1130
        %v1164 = vpop.f32.mrf.mxu0
        %v1165 = vadd.f32 0.0, %v1164
        %v1166 = vpop.f32.mrf.mxu0
        %v1167 = vadd.f32 0.0, %v1166
        %1168 = vmatmul.bf16.gmra.mxu0 %v1133
        %v1169 = vpop.f32.mrf.mxu0
        %v1170 = vadd.f32 0.0, %v1169
        %v1171 = vpop.f32.mrf.mxu0
        %v1172 = vadd.f32 0.0, %v1171
        %1173 = vmatmul.bf16.gmra.mxu0 %v1136
        %v1174 = vpop.f32.mrf.mxu0
        %v1175 = vadd.f32 0.0, %v1174
        %v1176 = vpop.f32.mrf.mxu0
        %v1177 = vadd.f32 0.0, %v1176
        %1178 = vdwg.mxu0
        %v1179 = vmul.f32 %v1160, 0.125
        %v1180 = vmul.f32 %v1162, 0.125
        %v1181 = vmul.f32 %v1165, 0.125
        %v1182 = vmul.f32 %v1167, 0.125
        %v1183 = vmul.f32 %v1170, 0.125
        %v1184 = vmul.f32 %v1172, 0.125
        %v1185 = vmul.f32 %v1175, 0.125
        %v1186 = vmul.f32 %v1177, 0.125
        %v1187 = vsel %vm1125, %v1179, -inf
        %1188 = vmax.xlane.f32.xlu0 %v1187
        %v1189 = vpop.xlane.xlu0 %1188
        %v1190 = vsel %vm1125, %v1180, -inf
        %1191 = vmax.xlane.f32.xlu0 %v1190
        %v1192 = vpop.xlane.xlu0 %1191
        %v1193 = vsel %vm1125, %v1181, -inf
        %1194 = vmax.xlane.f32.xlu0 %v1193
        %v1195 = vpop.xlane.xlu0 %1194
        %v1196 = vsel %vm1125, %v1182, -inf
        %1197 = vmax.xlane.f32.xlu0 %v1196
        %v1198 = vpop.xlane.xlu0 %1197
        %v1199 = vsel %vm1125, %v1183, -inf
        %1200 = vmax.xlane.f32.xlu0 %v1199
        %v1201 = vpop.xlane.xlu0 %1200
        %v1202 = vsel %vm1125, %v1184, -inf
        %1203 = vmax.xlane.f32.xlu0 %v1202
        %v1204 = vpop.xlane.xlu0 %1203
        %v1205 = vsel %vm1125, %v1185, -inf
        %1206 = vmax.xlane.f32.xlu0 %v1205
        %v1207 = vpop.xlane.xlu0 %1206
        %v1208 = vsel %vm1125, %v1186, -inf
        %1209 = vmax.xlane.f32.xlu0 %v1208
        %v1210 = vpop.xlane.xlu0 %1209
        %v1211 = vsub.f32 %v1179, %v1189
        %v1212 = vsub.f32 %v1180, %v1192
        %v1213 = vsub.f32 %v1181, %v1195
        %v1214 = vsub.f32 %v1182, %v1198
        %v1215 = vsub.f32 %v1183, %v1201
        %v1216 = vsub.f32 %v1184, %v1204
        %v1217 = vsub.f32 %v1185, %v1207
        %v1218 = vsub.f32 %v1186, %v1210
        %v1219 = vmul.f32 %v1211, 1.442695
        %v1220 = vpow.pop %v1219
        %v1221 = vmul.f32 %v1212, 1.442695
        %v1222 = vpow.pop %v1221
        %v1223 = vmul.f32 %v1213, 1.442695
        %v1224 = vpow.pop %v1223
        %v1225 = vmul.f32 %v1214, 1.442695
        %v1226 = vpow.pop %v1225
        %v1227 = vmul.f32 %v1215, 1.442695
        %v1228 = vpow.pop %v1227
        %v1229 = vmul.f32 %v1216, 1.442695
        %v1230 = vpow.pop %v1229
        %v1231 = vmul.f32 %v1217, 1.442695
        %v1232 = vpow.pop %v1231
        %v1233 = vmul.f32 %v1218, 1.442695
        %v1234 = vpow.pop %v1233
        %v1235 = vsel %vm1125, %v1220, 0.0
        %1236 = vadd.xlane.f32.xlu0 %v1235
        %v1237 = vpop.xlane.xlu0 %1236
        %v1238 = vsel %vm1125, %v1222, 0.0
        %1239 = vadd.xlane.f32.xlu0 %v1238
        %v1240 = vpop.xlane.xlu0 %1239
        %v1241 = vsel %vm1125, %v1224, 0.0
        %1242 = vadd.xlane.f32.xlu0 %v1241
        %v1243 = vpop.xlane.xlu0 %1242
        %v1244 = vsel %vm1125, %v1226, 0.0
        %1245 = vadd.xlane.f32.xlu0 %v1244
        %v1246 = vpop.xlane.xlu0 %1245
        %v1247 = vsel %vm1125, %v1228, 0.0
        %1248 = vadd.xlane.f32.xlu0 %v1247
        %v1249 = vpop.xlane.xlu0 %1248
        %v1250 = vsel %vm1125, %v1230, 0.0
        %1251 = vadd.xlane.f32.xlu0 %v1250
        %v1252 = vpop.xlane.xlu0 %1251
        %v1253 = vsel %vm1125, %v1232, 0.0
        %1254 = vadd.xlane.f32.xlu0 %v1253
        %v1255 = vpop.xlane.xlu0 %1254
        %v1256 = vsel %vm1125, %v1234, 0.0
        %1257 = vadd.xlane.f32.xlu0 %v1256
        %v1258 = vpop.xlane.xlu0 %1257
        %v1259 = vpack.c.bf16 %v1222, %v1220
        %v1260 = vpack.c.bf16 %v1226, %v1224
        %v1261 = vpack.c.bf16 %v1230, %v1228
        %v1262 = vpack.c.bf16 %v1234, %v1232
        %v1263 = vpack.c.bf16 %v1100, %v1098
        %v1264 = vpack.c.bf16 %v1105, %v1103
        %v1265 = vpack.c.bf16 %v1110, %v1108
        %v1266 = vpack.c.bf16 %v1115, %v1113
        %v1268 = vsel %vm1125, %v1259, 0
        %v1271 = vsel %vm1125, %v1260, 0
        %v1274 = vsel %vm1125, %v1261, 0
        %v1277 = vsel %vm1125, %v1262, 0
        %1279 = vmatpush.bf16.msra.mxu0 0
        %1280 = vmatpush.bf16.msra.mxu0 0
        %1281 = vmatpush.bf16.msra.mxu0 0
        %1282 = vmatpush.bf16.msra.mxu0 0
        %1283 = vmatpush.bf16.msra.mxu0 %v1266
        %1284 = vmatpush.bf16.msra.mxu0 %v1265
        %1285 = vmatpush.bf16.msra.mxu0 %v1264
        %1286 = vmatpush.bf16.msra.mxu0 %v1263
        %1287 = vmatmul.bf16.gmra.mxu0 %v1268
        %v1288 = vpop.f32.mrf.mxu0
        %v1289 = vadd.f32 0.0, %v1288
        %v1290 = vpop.f32.mrf.mxu0
        %v1291 = vadd.f32 0.0, %v1290
        %1292 = vmatmul.bf16.gmra.mxu0 %v1271
        %v1293 = vpop.f32.mrf.mxu0
        %v1294 = vadd.f32 0.0, %v1293
        %v1295 = vpop.f32.mrf.mxu0
        %v1296 = vadd.f32 0.0, %v1295
        %1297 = vmatmul.bf16.gmra.mxu0 %v1274
        %v1298 = vpop.f32.mrf.mxu0
        %v1299 = vadd.f32 0.0, %v1298
        %v1300 = vpop.f32.mrf.mxu0
        %v1301 = vadd.f32 0.0, %v1300
        %1302 = vmatmul.bf16.gmra.mxu0 %v1277
        %v1303 = vpop.f32.mrf.mxu0
        %v1304 = vadd.f32 0.0, %v1303
        %v1305 = vpop.f32.mrf.mxu0
        %v1306 = vadd.f32 0.0, %v1305
        %1307 = vdwg.mxu0
        %v1308 = vrcp.pop %v1237
        %v1309 = vrcp.pop %v1240
        %v1310 = vrcp.pop %v1243
        %v1311 = vrcp.pop %v1246
        %v1312 = vrcp.pop %v1249
        %v1313 = vrcp.pop %v1252
        %v1314 = vrcp.pop %v1255
        %v1315 = vrcp.pop %v1258
        %v1316 = vmul.f32 %v1289, %v1308
        %v1317 = vmul.f32 %v1291, %v1309
        %v1318 = vmul.f32 %v1294, %v1310
        %v1319 = vmul.f32 %v1296, %v1311
        %v1320 = vmul.f32 %v1299, %v1312
        %v1321 = vmul.f32 %v1301, %v1313
        %v1322 = vmul.f32 %v1304, %v1314
        %v1323 = vmul.f32 %v1306, %v1315
        %v1324 = vpack.c.bf16 %v1317, %v1316
        %v1325 = vpack.c.bf16 %v1319, %v1318
        %v1326 = vpack.c.bf16 %v1321, %v1320
        %v1327 = vpack.c.bf16 %v1323, %v1322
        %s1328 = scalar_lea.vmem %s419, 16 [#allocation8]
        %v1329 = vld [vmem:[%s1328] sm:$0xf]
        %v1330 = vld [vmem:[%s1328 + $0x4] sm:$0xf]
        %v1331 = vld [vmem:[%s1328 + $0x8] sm:$0xf]
        %v1332 = vld [vmem:[%s1328 + $0xc] sm:$0xf]
        %s1333 = scalar_lea.vmem %s419, 48 [#allocation8]
        %v1334 = vld [vmem:[%s1333] sm:$0xf]
        %v1335 = vld [vmem:[%s1333 + $0x4] sm:$0xf]
        %v1336 = vld [vmem:[%s1333 + $0x8] sm:$0xf]
        %v1337 = vld [vmem:[%s1333 + $0xc] sm:$0xf]
        %s1338 = scalar_lea.vmem %s419, 80 [#allocation8]
        %v1339 = vld [vmem:[%s1338] sm:$0xf]
        %v1340 = vld [vmem:[%s1338 + $0x4] sm:$0xf]
        %v1341 = vld [vmem:[%s1338 + $0x8] sm:$0xf]
        %v1342 = vld [vmem:[%s1338 + $0xc] sm:$0xf]
        %s1343 = scalar_lea.vmem %s419, 112 [#allocation8]
        %v1344 = vld [vmem:[%s1343] sm:$0xf]
        %v1345 = vld [vmem:[%s1343 + $0x4] sm:$0xf]
        %v1346 = vld [vmem:[%s1343 + $0x8] sm:$0xf]
        %v1347 = vld [vmem:[%s1343 + $0xc] sm:$0xf]
        %v1352 = vunpack.c.l.b16 %v1329
        %v1353 = vunpack.c.l.b16 %v1330
        %v1354 = vunpack.c.l.b16 %v1331
        %v1355 = vunpack.c.l.b16 %v1332
        %v1356 = vpack.c.b16 %v1353, %v1352
        %v1357 = vpack.c.b16 %v1355, %v1354
        %1360 = vmatpush.bf16.msra.mxu0 0
        %1361 = vmatpush.bf16.msra.mxu0 0
        %1362 = vmatpush.bf16.msra.mxu0 0
        %1363 = vmatpush.bf16.msra.mxu0 0
        %1364 = vmatpush.bf16.msra.mxu0 0
        %1365 = vmatpush.bf16.msra.mxu0 0
        %1366 = vmatpush.bf16.msra.mxu0 %v1357
        %1367 = vmatpush.bf16.msra.mxu0 %v1356
        %1368 = vmatmul.bf16.gmra.mxu0 %v995
        %v1369 = vpop.f32.mrf.mxu0
        %v1370 = vadd.f32 0.0, %v1369
        %v1371 = vpop.f32.mrf.mxu0
        %v1372 = vadd.f32 0.0, %v1371
        %1373 = vmatmul.bf16.gmra.mxu0 %v998
        %v1374 = vpop.f32.mrf.mxu0
        %v1375 = vadd.f32 0.0, %v1374
        %v1376 = vpop.f32.mrf.mxu0
        %v1377 = vadd.f32 0.0, %v1376
        %1378 = vmatmul.bf16.gmra.mxu0 %v1001
        %v1379 = vpop.f32.mrf.mxu0
        %v1380 = vadd.f32 0.0, %v1379
        %v1381 = vpop.f32.mrf.mxu0
        %v1382 = vadd.f32 0.0, %v1381
        %1383 = vmatmul.bf16.gmra.mxu0 %v1004
        %v1384 = vpop.f32.mrf.mxu0
        %v1385 = vadd.f32 0.0, %v1384
        %v1386 = vpop.f32.mrf.mxu0
        %v1387 = vadd.f32 0.0, %v1386
        %1388 = vdwg.mxu0
        %v1393 = vunpack.c.l.b16 %v1334
        %v1394 = vunpack.c.l.b16 %v1335
        %v1395 = vunpack.c.l.b16 %v1336
        %v1396 = vunpack.c.l.b16 %v1337
        %v1397 = vpack.c.b16 %v1394, %v1393
        %v1398 = vpack.c.b16 %v1396, %v1395
        %1401 = vmatpush.bf16.msra.mxu0 0
        %1402 = vmatpush.bf16.msra.mxu0 0
        %1403 = vmatpush.bf16.msra.mxu0 0
        %1404 = vmatpush.bf16.msra.mxu0 0
        %1405 = vmatpush.bf16.msra.mxu0 0
        %1406 = vmatpush.bf16.msra.mxu0 0
        %1407 = vmatpush.bf16.msra.mxu0 %v1398
        %1408 = vmatpush.bf16.msra.mxu0 %v1397
        %1409 = vmatmul.bf16.gmra.mxu0 %v995
        %v1410 = vpop.f32.mrf.mxu0
        %v1411 = vadd.f32 0.0, %v1410
        %v1412 = vpop.f32.mrf.mxu0
        %v1413 = vadd.f32 0.0, %v1412
        %1414 = vmatmul.bf16.gmra.mxu0 %v998
        %v1415 = vpop.f32.mrf.mxu0
        %v1416 = vadd.f32 0.0, %v1415
        %v1417 = vpop.f32.mrf.mxu0
        %v1418 = vadd.f32 0.0, %v1417
        %1419 = vmatmul.bf16.gmra.mxu0 %v1001
        %v1420 = vpop.f32.mrf.mxu0
        %v1421 = vadd.f32 0.0, %v1420
        %v1422 = vpop.f32.mrf.mxu0
        %v1423 = vadd.f32 0.0, %v1422
        %1424 = vmatmul.bf16.gmra.mxu0 %v1004
        %v1425 = vpop.f32.mrf.mxu0
        %v1426 = vadd.f32 0.0, %v1425
        %v1427 = vpop.f32.mrf.mxu0
        %v1428 = vadd.f32 0.0, %v1427
        %1429 = vdwg.mxu0
        %v1434 = vunpack.c.l.b16 %v1339
        %v1435 = vunpack.c.l.b16 %v1340
        %v1436 = vunpack.c.l.b16 %v1341
        %v1437 = vunpack.c.l.b16 %v1342
        %v1438 = vpack.c.b16 %v1435, %v1434
        %v1439 = vpack.c.b16 %v1437, %v1436
        %1442 = vmatpush.bf16.msra.mxu0 0
        %1443 = vmatpush.bf16.msra.mxu0 0
        %1444 = vmatpush.bf16.msra.mxu0 0
        %1445 = vmatpush.bf16.msra.mxu0 0
        %1446 = vmatpush.bf16.msra.mxu0 0
        %1447 = vmatpush.bf16.msra.mxu0 0
        %1448 = vmatpush.bf16.msra.mxu0 %v1439
        %1449 = vmatpush.bf16.msra.mxu0 %v1438
        %1450 = vmatmul.bf16.gmra.mxu0 %v995
        %v1451 = vpop.f32.mrf.mxu0
        %v1452 = vadd.f32 0.0, %v1451
        %v1453 = vpop.f32.mrf.mxu0
        %v1454 = vadd.f32 0.0, %v1453
        %1455 = vmatmul.bf16.gmra.mxu0 %v998
        %v1456 = vpop.f32.mrf.mxu0
        %v1457 = vadd.f32 0.0, %v1456
        %v1458 = vpop.f32.mrf.mxu0
        %v1459 = vadd.f32 0.0, %v1458
        %1460 = vmatmul.bf16.gmra.mxu0 %v1001
        %v1461 = vpop.f32.mrf.mxu0
        %v1462 = vadd.f32 0.0, %v1461
        %v1463 = vpop.f32.mrf.mxu0
        %v1464 = vadd.f32 0.0, %v1463
        %1465 = vmatmul.bf16.gmra.mxu0 %v1004
        %v1466 = vpop.f32.mrf.mxu0
        %v1467 = vadd.f32 0.0, %v1466
        %v1468 = vpop.f32.mrf.mxu0
        %v1469 = vadd.f32 0.0, %v1468
        %1470 = vdwg.mxu0
        %v1471 = vpack.c.bf16 %v1372, %v1370
        %v1472 = vpack.c.bf16 %v1377, %v1375
        %v1473 = vpack.c.bf16 %v1382, %v1380
        %v1474 = vpack.c.bf16 %v1387, %v1385
        %v1475 = vpack.c.bf16 %v1413, %v1411
        %v1476 = vpack.c.bf16 %v1418, %v1416
        %v1477 = vpack.c.bf16 %v1423, %v1421
        %v1478 = vpack.c.bf16 %v1428, %v1426
        %v1480 = vsel %vm1125, %v1471, 0
        %v1483 = vsel %vm1125, %v1472, 0
        %v1486 = vsel %vm1125, %v1473, 0
        %v1489 = vsel %vm1125, %v1474, 0
        %v1492 = vsel %vm1125, %v1475, 0
        %v1495 = vsel %vm1125, %v1476, 0
        %v1498 = vsel %vm1125, %v1477, 0
        %v1501 = vsel %vm1125, %v1478, 0
        %1503 = vmatpush.bf16.xpose.msra.mxu0 0
        %1504 = vmatpush.bf16.xpose.msra.mxu0 0
        %1505 = vmatpush.bf16.xpose.msra.mxu0 0
        %1506 = vmatpush.bf16.xpose.msra.mxu0 0
        %1507 = vmatpush.bf16.xpose.msra.mxu0 %v1501
        %1508 = vmatpush.bf16.xpose.msra.mxu0 %v1498
        %1509 = vmatpush.bf16.xpose.msra.mxu0 %v1495
        %1510 = vmatpush.bf16.xpose.msra.mxu0 %v1492
        %1511 = vmatmul.bf16.gmra.mxu0 %v1480
        %v1512 = vpop.f32.mrf.mxu0
        %v1513 = vadd.f32 0.0, %v1512
        %v1514 = vpop.f32.mrf.mxu0
        %v1515 = vadd.f32 0.0, %v1514
        %1516 = vmatmul.bf16.gmra.mxu0 %v1483
        %v1517 = vpop.f32.mrf.mxu0
        %v1518 = vadd.f32 0.0, %v1517
        %v1519 = vpop.f32.mrf.mxu0
        %v1520 = vadd.f32 0.0, %v1519
        %1521 = vmatmul.bf16.gmra.mxu0 %v1486
        %v1522 = vpop.f32.mrf.mxu0
        %v1523 = vadd.f32 0.0, %v1522
        %v1524 = vpop.f32.mrf.mxu0
        %v1525 = vadd.f32 0.0, %v1524
        %1526 = vmatmul.bf16.gmra.mxu0 %v1489
        %v1527 = vpop.f32.mrf.mxu0
        %v1528 = vadd.f32 0.0, %v1527
        %v1529 = vpop.f32.mrf.mxu0
        %v1530 = vadd.f32 0.0, %v1529
        %1531 = vdwg.mxu0
        %v1532 = vmul.f32 %v1513, 0.125
        %v1533 = vmul.f32 %v1515, 0.125
        %v1534 = vmul.f32 %v1518, 0.125
        %v1535 = vmul.f32 %v1520, 0.125
        %v1536 = vmul.f32 %v1523, 0.125
        %v1537 = vmul.f32 %v1525, 0.125
        %v1538 = vmul.f32 %v1528, 0.125
        %v1539 = vmul.f32 %v1530, 0.125
        %v1540 = vsel %vm1125, %v1532, -inf
        %1541 = vmax.xlane.f32.xlu0 %v1540
        %v1542 = vpop.xlane.xlu0 %1541
        %v1543 = vsel %vm1125, %v1533, -inf
        %1544 = vmax.xlane.f32.xlu0 %v1543
        %v1545 = vpop.xlane.xlu0 %1544
        %v1546 = vsel %vm1125, %v1534, -inf
        %1547 = vmax.xlane.f32.xlu0 %v1546
        %v1548 = vpop.xlane.xlu0 %1547
        %v1549 = vsel %vm1125, %v1535, -inf
        %1550 = vmax.xlane.f32.xlu0 %v1549
        %v1551 = vpop.xlane.xlu0 %1550
        %v1552 = vsel %vm1125, %v1536, -inf
        %1553 = vmax.xlane.f32.xlu0 %v1552
        %v1554 = vpop.xlane.xlu0 %1553
        %v1555 = vsel %vm1125, %v1537, -inf
        %1556 = vmax.xlane.f32.xlu0 %v1555
        %v1557 = vpop.xlane.xlu0 %1556
        %v1558 = vsel %vm1125, %v1538, -inf
        %1559 = vmax.xlane.f32.xlu0 %v1558
        %v1560 = vpop.xlane.xlu0 %1559
        %v1561 = vsel %vm1125, %v1539, -inf
        %1562 = vmax.xlane.f32.xlu0 %v1561
        %v1563 = vpop.xlane.xlu0 %1562
        %v1564 = vsub.f32 %v1532, %v1542
        %v1565 = vsub.f32 %v1533, %v1545
        %v1566 = vsub.f32 %v1534, %v1548
        %v1567 = vsub.f32 %v1535, %v1551
        %v1568 = vsub.f32 %v1536, %v1554
        %v1569 = vsub.f32 %v1537, %v1557
        %v1570 = vsub.f32 %v1538, %v1560
        %v1571 = vsub.f32 %v1539, %v1563
        %v1572 = vmul.f32 %v1564, 1.442695
        %v1573 = vpow.pop %v1572
        %v1574 = vmul.f32 %v1565, 1.442695
        %v1575 = vpow.pop %v1574
        %v1576 = vmul.f32 %v1566, 1.442695
        %v1577 = vpow.pop %v1576
        %v1578 = vmul.f32 %v1567, 1.442695
        %v1579 = vpow.pop %v1578
        %v1580 = vmul.f32 %v1568, 1.442695
        %v1581 = vpow.pop %v1580
        %v1582 = vmul.f32 %v1569, 1.442695
        %v1583 = vpow.pop %v1582
        %v1584 = vmul.f32 %v1570, 1.442695
        %v1585 = vpow.pop %v1584
        %v1586 = vmul.f32 %v1571, 1.442695
        %v1587 = vpow.pop %v1586
        %v1588 = vsel %vm1125, %v1573, 0.0
        %1589 = vadd.xlane.f32.xlu0 %v1588
        %v1590 = vpop.xlane.xlu0 %1589
        %v1591 = vsel %vm1125, %v1575, 0.0
        %1592 = vadd.xlane.f32.xlu0 %v1591
        %v1593 = vpop.xlane.xlu0 %1592
        %v1594 = vsel %vm1125, %v1577, 0.0
        %1595 = vadd.xlane.f32.xlu0 %v1594
        %v1596 = vpop.xlane.xlu0 %1595
        %v1597 = vsel %vm1125, %v1579, 0.0
        %1598 = vadd.xlane.f32.xlu0 %v1597
        %v1599 = vpop.xlane.xlu0 %1598
        %v1600 = vsel %vm1125, %v1581, 0.0
        %1601 = vadd.xlane.f32.xlu0 %v1600
        %v1602 = vpop.xlane.xlu0 %1601
        %v1603 = vsel %vm1125, %v1583, 0.0
        %1604 = vadd.xlane.f32.xlu0 %v1603
        %v1605 = vpop.xlane.xlu0 %1604
        %v1606 = vsel %vm1125, %v1585, 0.0
        %1607 = vadd.xlane.f32.xlu0 %v1606
        %v1608 = vpop.xlane.xlu0 %1607
        %v1609 = vsel %vm1125, %v1587, 0.0
        %1610 = vadd.xlane.f32.xlu0 %v1609
        %v1611 = vpop.xlane.xlu0 %1610
        %v1612 = vpack.c.bf16 %v1575, %v1573
        %v1613 = vpack.c.bf16 %v1579, %v1577
        %v1614 = vpack.c.bf16 %v1583, %v1581
        %v1615 = vpack.c.bf16 %v1587, %v1585
        %v1616 = vpack.c.bf16 %v1454, %v1452
        %v1617 = vpack.c.bf16 %v1459, %v1457
        %v1618 = vpack.c.bf16 %v1464, %v1462
        %v1619 = vpack.c.bf16 %v1469, %v1467
        %v1621 = vsel %vm1125, %v1612, 0
        %v1624 = vsel %vm1125, %v1613, 0
        %v1627 = vsel %vm1125, %v1614, 0
        %v1630 = vsel %vm1125, %v1615, 0
        %1632 = vmatpush.bf16.msra.mxu0 0
        %1633 = vmatpush.bf16.msra.mxu0 0
        %1634 = vmatpush.bf16.msra.mxu0 0
        %1635 = vmatpush.bf16.msra.mxu0 0
        %1636 = vmatpush.bf16.msra.mxu0 %v1619
        %1637 = vmatpush.bf16.msra.mxu0 %v1618
        %1638 = vmatpush.bf16.msra.mxu0 %v1617
        %1639 = vmatpush.bf16.msra.mxu0 %v1616
        %1640 = vmatmul.bf16.gmra.mxu0 %v1621
        %v1641 = vpop.f32.mrf.mxu0
        %v1642 = vadd.f32 0.0, %v1641
        %v1643 = vpop.f32.mrf.mxu0
        %v1644 = vadd.f32 0.0, %v1643
        %1645 = vmatmul.bf16.gmra.mxu0 %v1624
        %v1646 = vpop.f32.mrf.mxu0
        %v1647 = vadd.f32 0.0, %v1646
        %v1648 = vpop.f32.mrf.mxu0
        %v1649 = vadd.f32 0.0, %v1648
        %1650 = vmatmul.bf16.gmra.mxu0 %v1627
        %v1651 = vpop.f32.mrf.mxu0
        %v1652 = vadd.f32 0.0, %v1651
        %v1653 = vpop.f32.mrf.mxu0
        %v1654 = vadd.f32 0.0, %v1653
        %1655 = vmatmul.bf16.gmra.mxu0 %v1630
        %v1656 = vpop.f32.mrf.mxu0
        %v1657 = vadd.f32 0.0, %v1656
        %v1658 = vpop.f32.mrf.mxu0
        %v1659 = vadd.f32 0.0, %v1658
        %1660 = vdwg.mxu0
        %v1661 = vrcp.pop %v1590
        %v1662 = vrcp.pop %v1593
        %v1663 = vrcp.pop %v1596
        %v1664 = vrcp.pop %v1599
        %v1665 = vrcp.pop %v1602
        %v1666 = vrcp.pop %v1605
        %v1667 = vrcp.pop %v1608
        %v1668 = vrcp.pop %v1611
        %v1669 = vmul.f32 %v1642, %v1661
        %v1670 = vmul.f32 %v1644, %v1662
        %v1671 = vmul.f32 %v1647, %v1663
        %v1672 = vmul.f32 %v1649, %v1664
        %v1673 = vmul.f32 %v1652, %v1665
        %v1674 = vmul.f32 %v1654, %v1666
        %v1675 = vmul.f32 %v1657, %v1667
        %v1676 = vmul.f32 %v1659, %v1668
        %v1677 = vpack.c.bf16 %v1670, %v1669
        %v1678 = vpack.c.bf16 %v1672, %v1671
        %v1679 = vpack.c.bf16 %v1674, %v1673
        %v1680 = vpack.c.bf16 %v1676, %v1675
        %v1685 = vunpack.c.l.b16 %v1344
        %v1686 = vunpack.c.l.b16 %v1345
        %v1687 = vunpack.c.l.b16 %v1346
        %v1688 = vunpack.c.l.b16 %v1347
        %v1689 = vpack.c.b16 %v1686, %v1685
        %v1690 = vpack.c.b16 %v1688, %v1687
        %v1692 = vsel %vm1125, %v1677, 0
        %v1695 = vsel %vm1125, %v1678, 0
        %v1698 = vsel %vm1125, %v1679, 0
        %v1701 = vsel %vm1125, %v1680, 0
        %v1704 = vsel %vm1125, %v1689, 0
        %v1707 = vsel %vm1125, %v1690, 0
        %1709 = vmatpush.bf16.xpose.msra.mxu0 0
        %1710 = vmatpush.bf16.xpose.msra.mxu0 0
        %1711 = vmatpush.bf16.xpose.msra.mxu0 0
        %1712 = vmatpush.bf16.xpose.msra.mxu0 0
        %1713 = vmatpush.bf16.xpose.msra.mxu0 0
        %1714 = vmatpush.bf16.xpose.msra.mxu0 0
        %1715 = vmatpush.bf16.xpose.msra.mxu0 %v1707
        %1716 = vmatpush.bf16.xpose.msra.mxu0 %v1704
        %1717 = vmatmul.bf16.gmra.mxu0 %v1692
        %v1718 = vpop.f32.mrf.mxu0
        %v1719 = vadd.f32 0.0, %v1718
        %v1720 = vpop.f32.mrf.mxu0
        %v1721 = vadd.f32 0.0, %v1720
        %1722 = vmatmul.bf16.gmra.mxu0 %v1695
        %v1723 = vpop.f32.mrf.mxu0
        %v1724 = vadd.f32 0.0, %v1723
        %v1725 = vpop.f32.mrf.mxu0
        %v1726 = vadd.f32 0.0, %v1725
        %1727 = vmatmul.bf16.gmra.mxu0 %v1698
        %v1728 = vpop.f32.mrf.mxu0
        %v1729 = vadd.f32 0.0, %v1728
        %v1730 = vpop.f32.mrf.mxu0
        %v1731 = vadd.f32 0.0, %v1730
        %1732 = vmatmul.bf16.gmra.mxu0 %v1701
        %v1733 = vpop.f32.mrf.mxu0
        %v1734 = vadd.f32 0.0, %v1733
        %v1735 = vpop.f32.mrf.mxu0
        %v1736 = vadd.f32 0.0, %v1735
        %1737 = vdwg.mxu0
        %v1742 = vunpack.c.l.b16 %v978
        %v1743 = vunpack.c.l.b16 %v979
        %v1744 = vunpack.c.l.b16 %v980
        %v1745 = vunpack.c.l.b16 %v981
        %v1746 = vpack.c.b16 %v1743, %v1742
        %v1747 = vpack.c.b16 %v1745, %v1744
        %v1749 = vsel %vm1125, %v1324, 0
        %v1752 = vsel %vm1125, %v1325, 0
        %v1755 = vsel %vm1125, %v1326, 0
        %v1758 = vsel %vm1125, %v1327, 0
        %v1761 = vsel %vm1125, %v1746, 0
        %v1764 = vsel %vm1125, %v1747, 0
        %1766 = vmatpush.bf16.xpose.msra.mxu0 0
        %1767 = vmatpush.bf16.xpose.msra.mxu0 0
        %1768 = vmatpush.bf16.xpose.msra.mxu0 0
        %1769 = vmatpush.bf16.xpose.msra.mxu0 0
        %1770 = vmatpush.bf16.xpose.msra.mxu0 0
        %1771 = vmatpush.bf16.xpose.msra.mxu0 0
        %1772 = vmatpush.bf16.xpose.msra.mxu0 %v1764
        %1773 = vmatpush.bf16.xpose.msra.mxu0 %v1761
        %1774 = vmatmul.bf16.gmra.mxu0 %v1749
        %v1775 = vpop.f32.mrf.mxu0
        %v1776 = vadd.f32 %v1719, %v1775
        %v1777 = vpop.f32.mrf.mxu0
        %v1778 = vadd.f32 %v1721, %v1777
        %1779 = vmatmul.bf16.gmra.mxu0 %v1752
        %v1780 = vpop.f32.mrf.mxu0
        %v1781 = vadd.f32 %v1724, %v1780
        %v1782 = vpop.f32.mrf.mxu0
        %v1783 = vadd.f32 %v1726, %v1782
        %1784 = vmatmul.bf16.gmra.mxu0 %v1755
        %v1785 = vpop.f32.mrf.mxu0
        %v1786 = vadd.f32 %v1729, %v1785
        %v1787 = vpop.f32.mrf.mxu0
        %v1788 = vadd.f32 %v1731, %v1787
        %1789 = vmatmul.bf16.gmra.mxu0 %v1758
        %v1790 = vpop.f32.mrf.mxu0
        %v1791 = vadd.f32 %v1734, %v1790
        %v1792 = vpop.f32.mrf.mxu0
        %v1793 = vadd.f32 %v1736, %v1792
        %1794 = vdwg.mxu0
        %v1795 = vadd.f32 %v747, %v1776
        %v1796 = vadd.f32 %v748, %v1778
        %v1797 = vadd.f32 %v749, %v1781
        %v1798 = vadd.f32 %v750, %v1783
        %v1799 = vadd.f32 %v751, %v1786
        %v1800 = vadd.f32 %v752, %v1788
        %v1801 = vadd.f32 %v753, %v1791
        %v1802 = vadd.f32 %v754, %v1793
        %v1803 = vld [vmem:[%s500 + $0x2] sm:$0x1]
        %v1804 = vld [vmem:[%s500 + $0x3] sm:$0x1]
        %v1805 = vsel %vm757, %v1795, 0.0
        %1806 = vadd.xlane.f32.xlu0 %v1805
        %v1807 = vpop.xlane.xlu0 %1806
        %v1808 = vsel %vm757, %v1796, 0.0
        %1809 = vadd.xlane.f32.xlu0 %v1808
        %v1810 = vpop.xlane.xlu0 %1809
        %v1811 = vsel %vm757, %v1797, 0.0
        %1812 = vadd.xlane.f32.xlu0 %v1811
        %v1813 = vpop.xlane.xlu0 %1812
        %v1814 = vsel %vm757, %v1798, 0.0
        %1815 = vadd.xlane.f32.xlu0 %v1814
        %v1816 = vpop.xlane.xlu0 %1815
        %v1817 = vsel %vm757, %v1799, 0.0
        %1818 = vadd.xlane.f32.xlu0 %v1817
        %v1819 = vpop.xlane.xlu0 %1818
        %v1820 = vsel %vm757, %v1800, 0.0
        %1821 = vadd.xlane.f32.xlu0 %v1820
        %v1822 = vpop.xlane.xlu0 %1821
        %v1823 = vsel %vm757, %v1801, 0.0
        %1824 = vadd.xlane.f32.xlu0 %v1823
        %v1825 = vpop.xlane.xlu0 %1824
        %v1826 = vsel %vm757, %v1802, 0.0
        %1827 = vadd.xlane.f32.xlu0 %v1826
        %v1828 = vpop.xlane.xlu0 %1827
        %v1829 = vmul.f32 %v1807, %v788
        %v1830 = vmul.f32 %v1810, %v788
        %v1831 = vmul.f32 %v1813, %v788
        %v1832 = vmul.f32 %v1816, %v788
        %v1833 = vmul.f32 %v1819, %v788
        %v1834 = vmul.f32 %v1822, %v788
        %v1835 = vmul.f32 %v1825, %v788
        %v1836 = vmul.f32 %v1828, %v788
        %v1837 = vsub.f32 %v1795, %v1829
        %v1838 = vsub.f32 %v1796, %v1830
        %v1839 = vsub.f32 %v1797, %v1831
        %v1840 = vsub.f32 %v1798, %v1832
        %v1841 = vsub.f32 %v1799, %v1833
        %v1842 = vsub.f32 %v1800, %v1834
        %v1843 = vsub.f32 %v1801, %v1835
        %v1844 = vsub.f32 %v1802, %v1836
        %v1845 = vmul.f32 %v1837, %v1837
        %v1846 = vmul.f32 %v1838, %v1838
        %v1847 = vmul.f32 %v1839, %v1839
        %v1848 = vmul.f32 %v1840, %v1840
        %v1849 = vmul.f32 %v1841, %v1841
        %v1850 = vmul.f32 %v1842, %v1842
        %v1851 = vmul.f32 %v1843, %v1843
        %v1852 = vmul.f32 %v1844, %v1844
        %v1853 = vsel %vm757, %v1845, 0.0
        %1854 = vadd.xlane.f32.xlu0 %v1853
        %v1855 = vpop.xlane.xlu0 %1854
        %v1856 = vsel %vm757, %v1846, 0.0
        %1857 = vadd.xlane.f32.xlu0 %v1856
        %v1858 = vpop.xlane.xlu0 %1857
        %v1859 = vsel %vm757, %v1847, 0.0
        %1860 = vadd.xlane.f32.xlu0 %v1859
        %v1861 = vpop.xlane.xlu0 %1860
        %v1862 = vsel %vm757, %v1848, 0.0
        %1863 = vadd.xlane.f32.xlu0 %v1862
        %v1864 = vpop.xlane.xlu0 %1863
        %v1865 = vsel %vm757, %v1849, 0.0
        %1866 = vadd.xlane.f32.xlu0 %v1865
        %v1867 = vpop.xlane.xlu0 %1866
        %v1868 = vsel %vm757, %v1850, 0.0
        %1869 = vadd.xlane.f32.xlu0 %v1868
        %v1870 = vpop.xlane.xlu0 %1869
        %v1871 = vsel %vm757, %v1851, 0.0
        %1872 = vadd.xlane.f32.xlu0 %v1871
        %v1873 = vpop.xlane.xlu0 %1872
        %v1874 = vsel %vm757, %v1852, 0.0
        %1875 = vadd.xlane.f32.xlu0 %v1874
        %v1876 = vpop.xlane.xlu0 %1875
        %v1877 = vmul.f32 %v1855, %v788
        %v1878 = vmul.f32 %v1858, %v788
        %v1879 = vmul.f32 %v1861, %v788
        %v1880 = vmul.f32 %v1864, %v788
        %v1881 = vmul.f32 %v1867, %v788
        %v1882 = vmul.f32 %v1870, %v788
        %v1883 = vmul.f32 %v1873, %v788
        %v1884 = vmul.f32 %v1876, %v788
        %v1885 = vadd.f32 %v1877, 1e-05
        %v1886 = vadd.f32 %v1878, 1e-05
        %v1887 = vadd.f32 %v1879, 1e-05
        %v1888 = vadd.f32 %v1880, 1e-05
        %v1889 = vadd.f32 %v1881, 1e-05
        %v1890 = vadd.f32 %v1882, 1e-05
        %v1891 = vadd.f32 %v1883, 1e-05
        %v1892 = vadd.f32 %v1884, 1e-05
        %v1893 = vrsqrt.pop %v1885
        %v1894 = vmul.f32 %v1893, %v1885
        %v1895 = vmul.f32 %v1894, %v1893
        %v1896 = vmul.f32 0.5, %v1895
        %v1897 = vsub.f32 1.5, %v1896
        %v1898 = vmul.f32 %v1893, %v1897
        %vm1899 = vweird.f32 %v1885
        %vm1900 = vweird.f32 %v1893
        %vm1901 = vmor %vm1899, %vm1900
        %v1902 = vsel %vm1901, %v1893, %v1898
        %v1903 = vrsqrt.pop %v1886
        %v1904 = vmul.f32 %v1903, %v1886
        %v1905 = vmul.f32 %v1904, %v1903
        %v1906 = vmul.f32 0.5, %v1905
        %v1907 = vsub.f32 1.5, %v1906
        %v1908 = vmul.f32 %v1903, %v1907
        %vm1909 = vweird.f32 %v1886
        %vm1910 = vweird.f32 %v1903
        %vm1911 = vmor %vm1909, %vm1910
        %v1912 = vsel %vm1911, %v1903, %v1908
        %v1913 = vrsqrt.pop %v1887
        %v1914 = vmul.f32 %v1913, %v1887
        %v1915 = vmul.f32 %v1914, %v1913
        %v1916 = vmul.f32 0.5, %v1915
        %v1917 = vsub.f32 1.5, %v1916
        %v1918 = vmul.f32 %v1913, %v1917
        %vm1919 = vweird.f32 %v1887
        %vm1920 = vweird.f32 %v1913
        %vm1921 = vmor %vm1919, %vm1920
        %v1922 = vsel %vm1921, %v1913, %v1918
        %v1923 = vrsqrt.pop %v1888
        %v1924 = vmul.f32 %v1923, %v1888
        %v1925 = vmul.f32 %v1924, %v1923
        %v1926 = vmul.f32 0.5, %v1925
        %v1927 = vsub.f32 1.5, %v1926
        %v1928 = vmul.f32 %v1923, %v1927
        %vm1929 = vweird.f32 %v1888
        %vm1930 = vweird.f32 %v1923
        %vm1931 = vmor %vm1929, %vm1930
        %v1932 = vsel %vm1931, %v1923, %v1928
        %v1933 = vrsqrt.pop %v1889
        %v1934 = vmul.f32 %v1933, %v1889
        %v1935 = vmul.f32 %v1934, %v1933
        %v1936 = vmul.f32 0.5, %v1935
        %v1937 = vsub.f32 1.5, %v1936
        %v1938 = vmul.f32 %v1933, %v1937
        %vm1939 = vweird.f32 %v1889
        %vm1940 = vweird.f32 %v1933
        %vm1941 = vmor %vm1939, %vm1940
        %v1942 = vsel %vm1941, %v1933, %v1938
        %v1943 = vrsqrt.pop %v1890
        %v1944 = vmul.f32 %v1943, %v1890
        %v1945 = vmul.f32 %v1944, %v1943
        %v1946 = vmul.f32 0.5, %v1945
        %v1947 = vsub.f32 1.5, %v1946
        %v1948 = vmul.f32 %v1943, %v1947
        %vm1949 = vweird.f32 %v1890
        %vm1950 = vweird.f32 %v1943
        %vm1951 = vmor %vm1949, %vm1950
        %v1952 = vsel %vm1951, %v1943, %v1948
        %v1953 = vrsqrt.pop %v1891
        %v1954 = vmul.f32 %v1953, %v1891
        %v1955 = vmul.f32 %v1954, %v1953
        %v1956 = vmul.f32 0.5, %v1955
        %v1957 = vsub.f32 1.5, %v1956
        %v1958 = vmul.f32 %v1953, %v1957
        %vm1959 = vweird.f32 %v1891
        %vm1960 = vweird.f32 %v1953
        %vm1961 = vmor %vm1959, %vm1960
        %v1962 = vsel %vm1961, %v1953, %v1958
        %v1963 = vrsqrt.pop %v1892
        %v1964 = vmul.f32 %v1963, %v1892
        %v1965 = vmul.f32 %v1964, %v1963
        %v1966 = vmul.f32 0.5, %v1965
        %v1967 = vsub.f32 1.5, %v1966
        %v1968 = vmul.f32 %v1963, %v1967
        %vm1969 = vweird.f32 %v1892
        %vm1970 = vweird.f32 %v1963
        %vm1971 = vmor %vm1969, %vm1970
        %v1972 = vsel %vm1971, %v1963, %v1968
        %v1973 = vmul.f32 %v1837, %v1902
        %v1974 = vmul.f32 %v1838, %v1912
        %v1975 = vmul.f32 %v1839, %v1922
        %v1976 = vmul.f32 %v1840, %v1932
        %v1977 = vmul.f32 %v1841, %v1942
        %v1978 = vmul.f32 %v1842, %v1952
        %v1979 = vmul.f32 %v1843, %v1962
        %v1980 = vmul.f32 %v1844, %v1972
        %v1981 = vperm.slane %v1803, 0
        %v1982 = vmul.f32 %v1973, %v1981
        %v1983 = vmul.f32 %v1974, %v1981
        %v1984 = vmul.f32 %v1975, %v1981
        %v1985 = vmul.f32 %v1976, %v1981
        %v1986 = vmul.f32 %v1977, %v1981
        %v1987 = vmul.f32 %v1978, %v1981
        %v1988 = vmul.f32 %v1979, %v1981
        %v1989 = vmul.f32 %v1980, %v1981
        %v1990 = vperm.slane %v1804, 0
        %v1991 = vadd.f32 %v1982, %v1990
        %v1992 = vadd.f32 %v1983, %v1990
        %v1993 = vadd.f32 %v1984, %v1990
        %v1994 = vadd.f32 %v1985, %v1990
        %v1995 = vadd.f32 %v1986, %v1990
        %v1996 = vadd.f32 %v1987, %v1990
        %v1997 = vadd.f32 %v1988, %v1990
        %v1998 = vadd.f32 %v1989, %v1990
        %v1999 = vpack.c.bf16 %v1992, %v1991
        %v2000 = vpack.c.bf16 %v1994, %v1993
        %v2001 = vpack.c.bf16 %v1996, %v1995
        %v2002 = vpack.c.bf16 %v1998, %v1997
        %v2003 = vld [vmem:[%s429] sm:$0xff]
        %v2004 = vld [vmem:[%s429 + $0x8] sm:$0xff]
        %v2005 = vld [vmem:[%s429 + $0x10] sm:$0xff]
        %v2006 = vld [vmem:[%s429 + $0x18] sm:$0xff]
        %v2007 = vld [vmem:[%s429 + $0x20] sm:$0xff]
        %v2008 = vld [vmem:[%s429 + $0x28] sm:$0xff]
        %v2009 = vld [vmem:[%s429 + $0x30] sm:$0xff]
        %v2010 = vld [vmem:[%s429 + $0x38] sm:$0xff]
        %v2011 = vld [vmem:[%s429 + $0x40] sm:$0xff]
        %v2012 = vld [vmem:[%s429 + $0x48] sm:$0xff]
        %v2013 = vld [vmem:[%s429 + $0x50] sm:$0xff]
        %v2014 = vld [vmem:[%s429 + $0x58] sm:$0xff]
        %v2015 = vld [vmem:[%s429 + $0x60] sm:$0xff]
        %v2016 = vld [vmem:[%s429 + $0x68] sm:$0xff]
        %v2017 = vld [vmem:[%s429 + $0x70] sm:$0xff]
        %v2018 = vld [vmem:[%s429 + $0x78] sm:$0xff]
        %v2019 = vld [vmem:[%s429 + $0x80] sm:$0xff]
        %v2020 = vld [vmem:[%s429 + $0x88] sm:$0xff]
        %v2021 = vld [vmem:[%s429 + $0x90] sm:$0xff]
        %v2022 = vld [vmem:[%s429 + $0x98] sm:$0xff]
        %v2023 = vld [vmem:[%s429 + $0xa0] sm:$0xff]
        %v2024 = vld [vmem:[%s429 + $0xa8] sm:$0xff]
        %v2025 = vld [vmem:[%s429 + $0xb0] sm:$0xff]
        %v2026 = vld [vmem:[%s429 + $0xb8] sm:$0xff]
        %v2027 = vld [vmem:[%s429 + $0xc0] sm:$0xff]
        %v2028 = vld [vmem:[%s429 + $0xc8] sm:$0xff]
        %v2029 = vld [vmem:[%s429 + $0xd0] sm:$0xff]
        %v2030 = vld [vmem:[%s429 + $0xd8] sm:$0xff]
        %v2031 = vld [vmem:[%s429 + $0xe0] sm:$0xff]
        %v2032 = vld [vmem:[%s429 + $0xe8] sm:$0xff]
        %v2033 = vld [vmem:[%s429 + $0xf0] sm:$0xff]
        %v2034 = vld [vmem:[%s429 + $0xf8] sm:$0xff]
        %v2035 = vld [vmem:[%s504] sm:$0xff]
        %v2036 = vld [vmem:[%s504 + $0x8] sm:$0xff]
        %v2039 = vperm.slane %v2035, 0
        %v2040 = vperm.slane %v2035, 1
        %v2041 = vperm.slane %v2035, 2
        %v2042 = vperm.slane %v2035, 3
        %v2043 = vperm.slane %v2035, 4
        %v2044 = vperm.slane %v2035, 5
        %v2045 = vperm.slane %v2035, 6
        %v2046 = vperm.slane %v2035, 7
        %v2047 = vperm.slane %v2036, 0
        %v2048 = vperm.slane %v2036, 1
        %v2049 = vperm.slane %v2036, 2
        %v2050 = vperm.slane %v2036, 3
        %v2051 = vperm.slane %v2036, 4
        %v2052 = vperm.slane %v2036, 5
        %v2053 = vperm.slane %v2036, 6
        %v2054 = vperm.slane %v2036, 7
        %v2103 = vunpack.c.l.b16 %v2003
        %v2104 = vunpack.c.h.b16 %v2003
        %v2105 = vunpack.c.l.b16 %v2004
        %v2106 = vunpack.c.h.b16 %v2004
        %v2107 = vunpack.c.l.b16 %v2005
        %v2108 = vunpack.c.h.b16 %v2005
        %v2109 = vunpack.c.l.b16 %v2006
        %v2110 = vunpack.c.h.b16 %v2006
        %v2111 = vunpack.c.l.b16 %v2007
        %v2112 = vunpack.c.h.b16 %v2007
        %v2113 = vunpack.c.l.b16 %v2008
        %v2114 = vunpack.c.h.b16 %v2008
        %v2115 = vunpack.c.l.b16 %v2009
        %v2116 = vunpack.c.h.b16 %v2009
        %v2117 = vunpack.c.l.b16 %v2010
        %v2118 = vunpack.c.h.b16 %v2010
        %v2119 = vunpack.c.l.b16 %v2011
        %v2120 = vunpack.c.h.b16 %v2011
        %v2121 = vunpack.c.l.b16 %v2012
        %v2122 = vunpack.c.h.b16 %v2012
        %v2123 = vunpack.c.l.b16 %v2013
        %v2124 = vunpack.c.h.b16 %v2013
        %v2125 = vunpack.c.l.b16 %v2014
        %v2126 = vunpack.c.h.b16 %v2014
        %v2127 = vunpack.c.l.b16 %v2015
        %v2128 = vunpack.c.h.b16 %v2015
        %v2129 = vunpack.c.l.b16 %v2016
        %v2130 = vunpack.c.h.b16 %v2016
        %v2131 = vunpack.c.l.b16 %v2017
        %v2132 = vunpack.c.h.b16 %v2017
        %v2133 = vunpack.c.l.b16 %v2018
        %v2134 = vunpack.c.h.b16 %v2018
        %v2135 = vunpack.c.l.b16 %v2019
        %v2136 = vunpack.c.h.b16 %v2019
        %v2137 = vunpack.c.l.b16 %v2020
        %v2138 = vunpack.c.h.b16 %v2020
        %v2139 = vunpack.c.l.b16 %v2021
        %v2140 = vunpack.c.h.b16 %v2021
        %v2141 = vunpack.c.l.b16 %v2022
        %v2142 = vunpack.c.h.b16 %v2022
        %v2143 = vunpack.c.l.b16 %v2023
        %v2144 = vunpack.c.h.b16 %v2023
        %v2145 = vunpack.c.l.b16 %v2024
        %v2146 = vunpack.c.h.b16 %v2024
        %v2147 = vunpack.c.l.b16 %v2025
        %v2148 = vunpack.c.h.b16 %v2025
        %v2149 = vunpack.c.l.b16 %v2026
        %v2150 = vunpack.c.h.b16 %v2026
        %v2151 = vunpack.c.l.b16 %v2027
        %v2152 = vunpack.c.h.b16 %v2027
        %v2153 = vunpack.c.l.b16 %v2028
        %v2154 = vunpack.c.h.b16 %v2028
        %v2155 = vunpack.c.l.b16 %v2029
        %v2156 = vunpack.c.h.b16 %v2029
        %v2157 = vunpack.c.l.b16 %v2030
        %v2158 = vunpack.c.h.b16 %v2030
        %v2159 = vunpack.c.l.b16 %v2031
        %v2160 = vunpack.c.h.b16 %v2031
        %v2161 = vunpack.c.l.b16 %v2032
        %v2162 = vunpack.c.h.b16 %v2032
        %v2163 = vunpack.c.l.b16 %v2033
        %v2164 = vunpack.c.h.b16 %v2033
        %v2165 = vunpack.c.l.b16 %v2034
        %v2166 = vunpack.c.h.b16 %v2034
        %v2167 = vpack.c.b16 %v2119, %v2103
        %v2168 = vpack.c.b16 %v2120, %v2104
        %v2169 = vpack.c.b16 %v2121, %v2105
        %v2170 = vpack.c.b16 %v2122, %v2106
        %v2171 = vpack.c.b16 %v2123, %v2107
        %v2172 = vpack.c.b16 %v2124, %v2108
        %v2173 = vpack.c.b16 %v2125, %v2109
        %v2174 = vpack.c.b16 %v2126, %v2110
        %v2175 = vpack.c.b16 %v2127, %v2111
        %v2176 = vpack.c.b16 %v2128, %v2112
        %v2177 = vpack.c.b16 %v2129, %v2113
        %v2178 = vpack.c.b16 %v2130, %v2114
        %v2179 = vpack.c.b16 %v2131, %v2115
        %v2180 = vpack.c.b16 %v2132, %v2116
        %v2181 = vpack.c.b16 %v2133, %v2117
        %v2182 = vpack.c.b16 %v2134, %v2118
        %v2183 = vpack.c.b16 %v2151, %v2135
        %v2184 = vpack.c.b16 %v2152, %v2136
        %v2185 = vpack.c.b16 %v2153, %v2137
        %v2186 = vpack.c.b16 %v2154, %v2138
        %v2187 = vpack.c.b16 %v2155, %v2139
        %v2188 = vpack.c.b16 %v2156, %v2140
        %v2189 = vpack.c.b16 %v2157, %v2141
        %v2190 = vpack.c.b16 %v2158, %v2142
        %v2191 = vpack.c.b16 %v2159, %v2143
        %v2192 = vpack.c.b16 %v2160, %v2144
        %v2193 = vpack.c.b16 %v2161, %v2145
        %v2194 = vpack.c.b16 %v2162, %v2146
        %v2195 = vpack.c.b16 %v2163, %v2147
        %v2196 = vpack.c.b16 %v2164, %v2148
        %v2197 = vpack.c.b16 %v2165, %v2149
        %v2198 = vpack.c.b16 %v2166, %v2150
        %v2232 = vsel %vm757, %v1999, 0
        %v2235 = vsel %vm757, %v2000, 0
        %v2238 = vsel %vm757, %v2001, 0
        %v2241 = vsel %vm757, %v2002, 0
        %2243 = vmatpush.bf16.msra.mxu0 0
        %2244 = vmatpush.bf16.msra.mxu0 0
        %2245 = vmatpush.bf16.msra.mxu0 0
        %2246 = vmatpush.bf16.msra.mxu0 0
        %2247 = vmatpush.bf16.msra.mxu0 0
        %2248 = vmatpush.bf16.msra.mxu0 0
        %2249 = vmatpush.bf16.msra.mxu0 %v2183
        %2250 = vmatpush.bf16.msra.mxu0 %v2167
        %2251 = vmatmul.bf16.gmra.mxu0 %v2232
        %v2252 = vpop.f32.mrf.mxu0
        %v2253 = vadd.f32 %v2039, %v2252
        %v2254 = vpop.f32.mrf.mxu0
        %v2255 = vadd.f32 %v2039, %v2254
        %2256 = vmatmul.bf16.gmra.mxu0 %v2235
        %v2257 = vpop.f32.mrf.mxu0
        %v2258 = vadd.f32 %v2039, %v2257
        %v2259 = vpop.f32.mrf.mxu0
        %v2260 = vadd.f32 %v2039, %v2259
        %2261 = vmatmul.bf16.gmra.mxu0 %v2238
        %v2262 = vpop.f32.mrf.mxu0
        %v2263 = vadd.f32 %v2039, %v2262
        %v2264 = vpop.f32.mrf.mxu0
        %v2265 = vadd.f32 %v2039, %v2264
        %2266 = vmatmul.bf16.gmra.mxu0 %v2241
        %v2267 = vpop.f32.mrf.mxu0
        %v2268 = vadd.f32 %v2039, %v2267
        %v2269 = vpop.f32.mrf.mxu0
        %v2270 = vadd.f32 %v2039, %v2269
        %2271 = vdwg.mxu0
        %2272 = vmatpush.bf16.msra.mxu0 0
        %2273 = vmatpush.bf16.msra.mxu0 0
        %2274 = vmatpush.bf16.msra.mxu0 0
        %2275 = vmatpush.bf16.msra.mxu0 0
        %2276 = vmatpush.bf16.msra.mxu0 0
        %2277 = vmatpush.bf16.msra.mxu0 0
        %2278 = vmatpush.bf16.msra.mxu0 %v2184
        %2279 = vmatpush.bf16.msra.mxu0 %v2168
        %2280 = vmatmul.bf16.gmra.mxu0 %v2232
        %v2281 = vpop.f32.mrf.mxu0
        %v2282 = vadd.f32 %v2040, %v2281
        %v2283 = vpop.f32.mrf.mxu0
        %v2284 = vadd.f32 %v2040, %v2283
        %2285 = vmatmul.bf16.gmra.mxu0 %v2235
        %v2286 = vpop.f32.mrf.mxu0
        %v2287 = vadd.f32 %v2040, %v2286
        %v2288 = vpop.f32.mrf.mxu0
        %v2289 = vadd.f32 %v2040, %v2288
        %2290 = vmatmul.bf16.gmra.mxu0 %v2238
        %v2291 = vpop.f32.mrf.mxu0
        %v2292 = vadd.f32 %v2040, %v2291
        %v2293 = vpop.f32.mrf.mxu0
        %v2294 = vadd.f32 %v2040, %v2293
        %2295 = vmatmul.bf16.gmra.mxu0 %v2241
        %v2296 = vpop.f32.mrf.mxu0
        %v2297 = vadd.f32 %v2040, %v2296
        %v2298 = vpop.f32.mrf.mxu0
        %v2299 = vadd.f32 %v2040, %v2298
        %2300 = vdwg.mxu0
        %2301 = vmatpush.bf16.msra.mxu0 0
        %2302 = vmatpush.bf16.msra.mxu0 0
        %2303 = vmatpush.bf16.msra.mxu0 0
        %2304 = vmatpush.bf16.msra.mxu0 0
        %2305 = vmatpush.bf16.msra.mxu0 0
        %2306 = vmatpush.bf16.msra.mxu0 0
        %2307 = vmatpush.bf16.msra.mxu0 %v2185
        %2308 = vmatpush.bf16.msra.mxu0 %v2169
        %2309 = vmatmul.bf16.gmra.mxu0 %v2232
        %v2310 = vpop.f32.mrf.mxu0
        %v2311 = vadd.f32 %v2041, %v2310
        %v2312 = vpop.f32.mrf.mxu0
        %v2313 = vadd.f32 %v2041, %v2312
        %2314 = vmatmul.bf16.gmra.mxu0 %v2235
        %v2315 = vpop.f32.mrf.mxu0
        %v2316 = vadd.f32 %v2041, %v2315
        %v2317 = vpop.f32.mrf.mxu0
        %v2318 = vadd.f32 %v2041, %v2317
        %2319 = vmatmul.bf16.gmra.mxu0 %v2238
        %v2320 = vpop.f32.mrf.mxu0
        %v2321 = vadd.f32 %v2041, %v2320
        %v2322 = vpop.f32.mrf.mxu0
        %v2323 = vadd.f32 %v2041, %v2322
        %2324 = vmatmul.bf16.gmra.mxu0 %v2241
        %v2325 = vpop.f32.mrf.mxu0
        %v2326 = vadd.f32 %v2041, %v2325
        %v2327 = vpop.f32.mrf.mxu0
        %v2328 = vadd.f32 %v2041, %v2327
        %2329 = vdwg.mxu0
        %2330 = vmatpush.bf16.msra.mxu0 0
        %2331 = vmatpush.bf16.msra.mxu0 0
        %2332 = vmatpush.bf16.msra.mxu0 0
        %2333 = vmatpush.bf16.msra.mxu0 0
        %2334 = vmatpush.bf16.msra.mxu0 0
        %2335 = vmatpush.bf16.msra.mxu0 0
        %2336 = vmatpush.bf16.msra.mxu0 %v2186
        %2337 = vmatpush.bf16.msra.mxu0 %v2170
        %2338 = vmatmul.bf16.gmra.mxu0 %v2232
        %v2339 = vpop.f32.mrf.mxu0
        %v2340 = vadd.f32 %v2042, %v2339
        %v2341 = vpop.f32.mrf.mxu0
        %v2342 = vadd.f32 %v2042, %v2341
        %2343 = vmatmul.bf16.gmra.mxu0 %v2235
        %v2344 = vpop.f32.mrf.mxu0
        %v2345 = vadd.f32 %v2042, %v2344
        %v2346 = vpop.f32.mrf.mxu0
        %v2347 = vadd.f32 %v2042, %v2346
        %2348 = vmatmul.bf16.gmra.mxu0 %v2238
        %v2349 = vpop.f32.mrf.mxu0
        %v2350 = vadd.f32 %v2042, %v2349
        %v2351 = vpop.f32.mrf.mxu0
        %v2352 = vadd.f32 %v2042, %v2351
        %2353 = vmatmul.bf16.gmra.mxu0 %v2241
        %v2354 = vpop.f32.mrf.mxu0
        %v2355 = vadd.f32 %v2042, %v2354
        %v2356 = vpop.f32.mrf.mxu0
        %v2357 = vadd.f32 %v2042, %v2356
        %2358 = vdwg.mxu0
        %2359 = vmatpush.bf16.msra.mxu0 0
        %2360 = vmatpush.bf16.msra.mxu0 0
        %2361 = vmatpush.bf16.msra.mxu0 0
        %2362 = vmatpush.bf16.msra.mxu0 0
        %2363 = vmatpush.bf16.msra.mxu0 0
        %2364 = vmatpush.bf16.msra.mxu0 0
        %2365 = vmatpush.bf16.msra.mxu0 %v2187
        %2366 = vmatpush.bf16.msra.mxu0 %v2171
        %2367 = vmatmul.bf16.gmra.mxu0 %v2232
        %v2368 = vpop.f32.mrf.mxu0
        %v2369 = vadd.f32 %v2043, %v2368
        %v2370 = vpop.f32.mrf.mxu0
        %v2371 = vadd.f32 %v2043, %v2370
        %2372 = vmatmul.bf16.gmra.mxu0 %v2235
        %v2373 = vpop.f32.mrf.mxu0
        %v2374 = vadd.f32 %v2043, %v2373
        %v2375 = vpop.f32.mrf.mxu0
        %v2376 = vadd.f32 %v2043, %v2375
        %2377 = vmatmul.bf16.gmra.mxu0 %v2238
        %v2378 = vpop.f32.mrf.mxu0
        %v2379 = vadd.f32 %v2043, %v2378
        %v2380 = vpop.f32.mrf.mxu0
        %v2381 = vadd.f32 %v2043, %v2380
        %2382 = vmatmul.bf16.gmra.mxu0 %v2241
        %v2383 = vpop.f32.mrf.mxu0
        %v2384 = vadd.f32 %v2043, %v2383
        %v2385 = vpop.f32.mrf.mxu0
        %v2386 = vadd.f32 %v2043, %v2385
        %2387 = vdwg.mxu0
        %2388 = vmatpush.bf16.msra.mxu0 0
        %2389 = vmatpush.bf16.msra.mxu0 0
        %2390 = vmatpush.bf16.msra.mxu0 0
        %2391 = vmatpush.bf16.msra.mxu0 0
        %2392 = vmatpush.bf16.msra.mxu0 0
        %2393 = vmatpush.bf16.msra.mxu0 0
        %2394 = vmatpush.bf16.msra.mxu0 %v2188
        %2395 = vmatpush.bf16.msra.mxu0 %v2172
        %2396 = vmatmul.bf16.gmra.mxu0 %v2232
        %v2397 = vpop.f32.mrf.mxu0
        %v2398 = vadd.f32 %v2044, %v2397
        %v2399 = vpop.f32.mrf.mxu0
        %v2400 = vadd.f32 %v2044, %v2399
        %2401 = vmatmul.bf16.gmra.mxu0 %v2235
        %v2402 = vpop.f32.mrf.mxu0
        %v2403 = vadd.f32 %v2044, %v2402
        %v2404 = vpop.f32.mrf.mxu0
        %v2405 = vadd.f32 %v2044, %v2404
        %2406 = vmatmul.bf16.gmra.mxu0 %v2238
        %v2407 = vpop.f32.mrf.mxu0
        %v2408 = vadd.f32 %v2044, %v2407
        %v2409 = vpop.f32.mrf.mxu0
        %v2410 = vadd.f32 %v2044, %v2409
        %2411 = vmatmul.bf16.gmra.mxu0 %v2241
        %v2412 = vpop.f32.mrf.mxu0
        %v2413 = vadd.f32 %v2044, %v2412
        %v2414 = vpop.f32.mrf.mxu0
        %v2415 = vadd.f32 %v2044, %v2414
        %2416 = vdwg.mxu0
        %2417 = vmatpush.bf16.msra.mxu0 0
        %2418 = vmatpush.bf16.msra.mxu0 0
        %2419 = vmatpush.bf16.msra.mxu0 0
        %2420 = vmatpush.bf16.msra.mxu0 0
        %2421 = vmatpush.bf16.msra.mxu0 0
        %2422 = vmatpush.bf16.msra.mxu0 0
        %2423 = vmatpush.bf16.msra.mxu0 %v2189
        %2424 = vmatpush.bf16.msra.mxu0 %v2173
        %2425 = vmatmul.bf16.gmra.mxu0 %v2232
        %v2426 = vpop.f32.mrf.mxu0
        %v2427 = vadd.f32 %v2045, %v2426
        %v2428 = vpop.f32.mrf.mxu0
        %v2429 = vadd.f32 %v2045, %v2428
        %2430 = vmatmul.bf16.gmra.mxu0 %v2235
        %v2431 = vpop.f32.mrf.mxu0
        %v2432 = vadd.f32 %v2045, %v2431
        %v2433 = vpop.f32.mrf.mxu0
        %v2434 = vadd.f32 %v2045, %v2433
        %2435 = vmatmul.bf16.gmra.mxu0 %v2238
        %v2436 = vpop.f32.mrf.mxu0
        %v2437 = vadd.f32 %v2045, %v2436
        %v2438 = vpop.f32.mrf.mxu0
        %v2439 = vadd.f32 %v2045, %v2438
        %2440 = vmatmul.bf16.gmra.mxu0 %v2241
        %v2441 = vpop.f32.mrf.mxu0
        %v2442 = vadd.f32 %v2045, %v2441
        %v2443 = vpop.f32.mrf.mxu0
        %v2444 = vadd.f32 %v2045, %v2443
        %2445 = vdwg.mxu0
        %2446 = vmatpush.bf16.msra.mxu0 0
        %2447 = vmatpush.bf16.msra.mxu0 0
        %2448 = vmatpush.bf16.msra.mxu0 0
        %2449 = vmatpush.bf16.msra.mxu0 0
        %2450 = vmatpush.bf16.msra.mxu0 0
        %2451 = vmatpush.bf16.msra.mxu0 0
        %2452 = vmatpush.bf16.msra.mxu0 %v2190
        %2453 = vmatpush.bf16.msra.mxu0 %v2174
        %2454 = vmatmul.bf16.gmra.mxu0 %v2232
        %v2455 = vpop.f32.mrf.mxu0
        %v2456 = vadd.f32 %v2046, %v2455
        %v2457 = vpop.f32.mrf.mxu0
        %v2458 = vadd.f32 %v2046, %v2457
        %2459 = vmatmul.bf16.gmra.mxu0 %v2235
        %v2460 = vpop.f32.mrf.mxu0
        %v2461 = vadd.f32 %v2046, %v2460
        %v2462 = vpop.f32.mrf.mxu0
        %v2463 = vadd.f32 %v2046, %v2462
        %2464 = vmatmul.bf16.gmra.mxu0 %v2238
        %v2465 = vpop.f32.mrf.mxu0
        %v2466 = vadd.f32 %v2046, %v2465
        %v2467 = vpop.f32.mrf.mxu0
        %v2468 = vadd.f32 %v2046, %v2467
        %2469 = vmatmul.bf16.gmra.mxu0 %v2241
        %v2470 = vpop.f32.mrf.mxu0
        %v2471 = vadd.f32 %v2046, %v2470
        %v2472 = vpop.f32.mrf.mxu0
        %v2473 = vadd.f32 %v2046, %v2472
        %2474 = vdwg.mxu0
        %2475 = vmatpush.bf16.msra.mxu0 0
        %2476 = vmatpush.bf16.msra.mxu0 0
        %2477 = vmatpush.bf16.msra.mxu0 0
        %2478 = vmatpush.bf16.msra.mxu0 0
        %2479 = vmatpush.bf16.msra.mxu0 0
        %2480 = vmatpush.bf16.msra.mxu0 0
        %2481 = vmatpush.bf16.msra.mxu0 %v2191
        %2482 = vmatpush.bf16.msra.mxu0 %v2175
        %2483 = vmatmul.bf16.gmra.mxu0 %v2232
        %v2484 = vpop.f32.mrf.mxu0
        %v2485 = vadd.f32 %v2047, %v2484
        %v2486 = vpop.f32.mrf.mxu0
        %v2487 = vadd.f32 %v2047, %v2486
        %2488 = vmatmul.bf16.gmra.mxu0 %v2235
        %v2489 = vpop.f32.mrf.mxu0
        %v2490 = vadd.f32 %v2047, %v2489
        %v2491 = vpop.f32.mrf.mxu0
        %v2492 = vadd.f32 %v2047, %v2491
        %2493 = vmatmul.bf16.gmra.mxu0 %v2238
        %v2494 = vpop.f32.mrf.mxu0
        %v2495 = vadd.f32 %v2047, %v2494
        %v2496 = vpop.f32.mrf.mxu0
        %v2497 = vadd.f32 %v2047, %v2496
        %2498 = vmatmul.bf16.gmra.mxu0 %v2241
        %v2499 = vpop.f32.mrf.mxu0
        %v2500 = vadd.f32 %v2047, %v2499
        %v2501 = vpop.f32.mrf.mxu0
        %v2502 = vadd.f32 %v2047, %v2501
        %2503 = vdwg.mxu0
        %2504 = vmatpush.bf16.msra.mxu0 0
        %2505 = vmatpush.bf16.msra.mxu0 0
        %2506 = vmatpush.bf16.msra.mxu0 0
        %2507 = vmatpush.bf16.msra.mxu0 0
        %2508 = vmatpush.bf16.msra.mxu0 0
        %2509 = vmatpush.bf16.msra.mxu0 0
        %2510 = vmatpush.bf16.msra.mxu0 %v2192
        %2511 = vmatpush.bf16.msra.mxu0 %v2176
        %2512 = vmatmul.bf16.gmra.mxu0 %v2232
        %v2513 = vpop.f32.mrf.mxu0
        %v2514 = vadd.f32 %v2048, %v2513
        %v2515 = vpop.f32.mrf.mxu0
        %v2516 = vadd.f32 %v2048, %v2515
        %2517 = vmatmul.bf16.gmra.mxu0 %v2235
        %v2518 = vpop.f32.mrf.mxu0
        %v2519 = vadd.f32 %v2048, %v2518
        %v2520 = vpop.f32.mrf.mxu0
        %v2521 = vadd.f32 %v2048, %v2520
        %2522 = vmatmul.bf16.gmra.mxu0 %v2238
        %v2523 = vpop.f32.mrf.mxu0
        %v2524 = vadd.f32 %v2048, %v2523
        %v2525 = vpop.f32.mrf.mxu0
        %v2526 = vadd.f32 %v2048, %v2525
        %2527 = vmatmul.bf16.gmra.mxu0 %v2241
        %v2528 = vpop.f32.mrf.mxu0
        %v2529 = vadd.f32 %v2048, %v2528
        %v2530 = vpop.f32.mrf.mxu0
        %v2531 = vadd.f32 %v2048, %v2530
        %2532 = vdwg.mxu0
        %2533 = vmatpush.bf16.msra.mxu0 0
        %2534 = vmatpush.bf16.msra.mxu0 0
        %2535 = vmatpush.bf16.msra.mxu0 0
        %2536 = vmatpush.bf16.msra.mxu0 0
        %2537 = vmatpush.bf16.msra.mxu0 0
        %2538 = vmatpush.bf16.msra.mxu0 0
        %2539 = vmatpush.bf16.msra.mxu0 %v2193
        %2540 = vmatpush.bf16.msra.mxu0 %v2177
        %2541 = vmatmul.bf16.gmra.mxu0 %v2232
        %v2542 = vpop.f32.mrf.mxu0
        %v2543 = vadd.f32 %v2049, %v2542
        %v2544 = vpop.f32.mrf.mxu0
        %v2545 = vadd.f32 %v2049, %v2544
        %2546 = vmatmul.bf16.gmra.mxu0 %v2235
        %v2547 = vpop.f32.mrf.mxu0
        %v2548 = vadd.f32 %v2049, %v2547
        %v2549 = vpop.f32.mrf.mxu0
        %v2550 = vadd.f32 %v2049, %v2549
        %2551 = vmatmul.bf16.gmra.mxu0 %v2238
        %v2552 = vpop.f32.mrf.mxu0
        %v2553 = vadd.f32 %v2049, %v2552
        %v2554 = vpop.f32.mrf.mxu0
        %v2555 = vadd.f32 %v2049, %v2554
        %2556 = vmatmul.bf16.gmra.mxu0 %v2241
        %v2557 = vpop.f32.mrf.mxu0
        %v2558 = vadd.f32 %v2049, %v2557
        %v2559 = vpop.f32.mrf.mxu0
        %v2560 = vadd.f32 %v2049, %v2559
        %2561 = vdwg.mxu0
        %2562 = vmatpush.bf16.msra.mxu0 0
        %2563 = vmatpush.bf16.msra.mxu0 0
        %2564 = vmatpush.bf16.msra.mxu0 0
        %2565 = vmatpush.bf16.msra.mxu0 0
        %2566 = vmatpush.bf16.msra.mxu0 0
        %2567 = vmatpush.bf16.msra.mxu0 0
        %2568 = vmatpush.bf16.msra.mxu0 %v2194
        %2569 = vmatpush.bf16.msra.mxu0 %v2178
        %2570 = vmatmul.bf16.gmra.mxu0 %v2232
        %v2571 = vpop.f32.mrf.mxu0
        %v2572 = vadd.f32 %v2050, %v2571
        %v2573 = vpop.f32.mrf.mxu0
        %v2574 = vadd.f32 %v2050, %v2573
        %2575 = vmatmul.bf16.gmra.mxu0 %v2235
        %v2576 = vpop.f32.mrf.mxu0
        %v2577 = vadd.f32 %v2050, %v2576
        %v2578 = vpop.f32.mrf.mxu0
        %v2579 = vadd.f32 %v2050, %v2578
        %2580 = vmatmul.bf16.gmra.mxu0 %v2238
        %v2581 = vpop.f32.mrf.mxu0
        %v2582 = vadd.f32 %v2050, %v2581
        %v2583 = vpop.f32.mrf.mxu0
        %v2584 = vadd.f32 %v2050, %v2583
        %2585 = vmatmul.bf16.gmra.mxu0 %v2241
        %v2586 = vpop.f32.mrf.mxu0
        %v2587 = vadd.f32 %v2050, %v2586
        %v2588 = vpop.f32.mrf.mxu0
        %v2589 = vadd.f32 %v2050, %v2588
        %2590 = vdwg.mxu0
        %2591 = vmatpush.bf16.msra.mxu0 0
        %2592 = vmatpush.bf16.msra.mxu0 0
        %2593 = vmatpush.bf16.msra.mxu0 0
        %2594 = vmatpush.bf16.msra.mxu0 0
        %2595 = vmatpush.bf16.msra.mxu0 0
        %2596 = vmatpush.bf16.msra.mxu0 0
        %2597 = vmatpush.bf16.msra.mxu0 %v2195
        %2598 = vmatpush.bf16.msra.mxu0 %v2179
        %2599 = vmatmul.bf16.gmra.mxu0 %v2232
        %v2600 = vpop.f32.mrf.mxu0
        %v2601 = vadd.f32 %v2051, %v2600
        %v2602 = vpop.f32.mrf.mxu0
        %v2603 = vadd.f32 %v2051, %v2602
        %2604 = vmatmul.bf16.gmra.mxu0 %v2235
        %v2605 = vpop.f32.mrf.mxu0
        %v2606 = vadd.f32 %v2051, %v2605
        %v2607 = vpop.f32.mrf.mxu0
        %v2608 = vadd.f32 %v2051, %v2607
        %2609 = vmatmul.bf16.gmra.mxu0 %v2238
        %v2610 = vpop.f32.mrf.mxu0
        %v2611 = vadd.f32 %v2051, %v2610
        %v2612 = vpop.f32.mrf.mxu0
        %v2613 = vadd.f32 %v2051, %v2612
        %2614 = vmatmul.bf16.gmra.mxu0 %v2241
        %v2615 = vpop.f32.mrf.mxu0
        %v2616 = vadd.f32 %v2051, %v2615
        %v2617 = vpop.f32.mrf.mxu0
        %v2618 = vadd.f32 %v2051, %v2617
        %2619 = vdwg.mxu0
        %2620 = vmatpush.bf16.msra.mxu0 0
        %2621 = vmatpush.bf16.msra.mxu0 0
        %2622 = vmatpush.bf16.msra.mxu0 0
        %2623 = vmatpush.bf16.msra.mxu0 0
        %2624 = vmatpush.bf16.msra.mxu0 0
        %2625 = vmatpush.bf16.msra.mxu0 0
        %2626 = vmatpush.bf16.msra.mxu0 %v2196
        %2627 = vmatpush.bf16.msra.mxu0 %v2180
        %2628 = vmatmul.bf16.gmra.mxu0 %v2232
        %v2629 = vpop.f32.mrf.mxu0
        %v2630 = vadd.f32 %v2052, %v2629
        %v2631 = vpop.f32.mrf.mxu0
        %v2632 = vadd.f32 %v2052, %v2631
        %2633 = vmatmul.bf16.gmra.mxu0 %v2235
        %v2634 = vpop.f32.mrf.mxu0
        %v2635 = vadd.f32 %v2052, %v2634
        %v2636 = vpop.f32.mrf.mxu0
        %v2637 = vadd.f32 %v2052, %v2636
        %2638 = vmatmul.bf16.gmra.mxu0 %v2238
        %v2639 = vpop.f32.mrf.mxu0
        %v2640 = vadd.f32 %v2052, %v2639
        %v2641 = vpop.f32.mrf.mxu0
        %v2642 = vadd.f32 %v2052, %v2641
        %2643 = vmatmul.bf16.gmra.mxu0 %v2241
        %v2644 = vpop.f32.mrf.mxu0
        %v2645 = vadd.f32 %v2052, %v2644
        %v2646 = vpop.f32.mrf.mxu0
        %v2647 = vadd.f32 %v2052, %v2646
        %2648 = vdwg.mxu0
        %2649 = vmatpush.bf16.msra.mxu0 0
        %2650 = vmatpush.bf16.msra.mxu0 0
        %2651 = vmatpush.bf16.msra.mxu0 0
        %2652 = vmatpush.bf16.msra.mxu0 0
        %2653 = vmatpush.bf16.msra.mxu0 0
        %2654 = vmatpush.bf16.msra.mxu0 0
        %2655 = vmatpush.bf16.msra.mxu0 %v2197
        %2656 = vmatpush.bf16.msra.mxu0 %v2181
        %2657 = vmatmul.bf16.gmra.mxu0 %v2232
        %v2658 = vpop.f32.mrf.mxu0
        %v2659 = vadd.f32 %v2053, %v2658
        %v2660 = vpop.f32.mrf.mxu0
        %v2661 = vadd.f32 %v2053, %v2660
        %2662 = vmatmul.bf16.gmra.mxu0 %v2235
        %v2663 = vpop.f32.mrf.mxu0
        %v2664 = vadd.f32 %v2053, %v2663
        %v2665 = vpop.f32.mrf.mxu0
        %v2666 = vadd.f32 %v2053, %v2665
        %2667 = vmatmul.bf16.gmra.mxu0 %v2238
        %v2668 = vpop.f32.mrf.mxu0
        %v2669 = vadd.f32 %v2053, %v2668
        %v2670 = vpop.f32.mrf.mxu0
        %v2671 = vadd.f32 %v2053, %v2670
        %2672 = vmatmul.bf16.gmra.mxu0 %v2241
        %v2673 = vpop.f32.mrf.mxu0
        %v2674 = vadd.f32 %v2053, %v2673
        %v2675 = vpop.f32.mrf.mxu0
        %v2676 = vadd.f32 %v2053, %v2675
        %2677 = vdwg.mxu0
        %2678 = vmatpush.bf16.msra.mxu0 0
        %2679 = vmatpush.bf16.msra.mxu0 0
        %2680 = vmatpush.bf16.msra.mxu0 0
        %2681 = vmatpush.bf16.msra.mxu0 0
        %2682 = vmatpush.bf16.msra.mxu0 0
        %2683 = vmatpush.bf16.msra.mxu0 0
        %2684 = vmatpush.bf16.msra.mxu0 %v2198
        %2685 = vmatpush.bf16.msra.mxu0 %v2182
        %2686 = vmatmul.bf16.gmra.mxu0 %v2232
        %v2687 = vpop.f32.mrf.mxu0
        %v2688 = vadd.f32 %v2054, %v2687
        %v2689 = vpop.f32.mrf.mxu0
        %v2690 = vadd.f32 %v2054, %v2689
        %2691 = vmatmul.bf16.gmra.mxu0 %v2235
        %v2692 = vpop.f32.mrf.mxu0
        %v2693 = vadd.f32 %v2054, %v2692
        %v2694 = vpop.f32.mrf.mxu0
        %v2695 = vadd.f32 %v2054, %v2694
        %2696 = vmatmul.bf16.gmra.mxu0 %v2238
        %v2697 = vpop.f32.mrf.mxu0
        %v2698 = vadd.f32 %v2054, %v2697
        %v2699 = vpop.f32.mrf.mxu0
        %v2700 = vadd.f32 %v2054, %v2699
        %2701 = vmatmul.bf16.gmra.mxu0 %v2241
        %v2702 = vpop.f32.mrf.mxu0
        %v2703 = vadd.f32 %v2054, %v2702
        %v2704 = vpop.f32.mrf.mxu0
        %v2705 = vadd.f32 %v2054, %v2704
        %2706 = vdwg.mxu0
        %v2707 = vmul.f32 %v2253, 0.5
        %v2708 = vmul.f32 %v2282, 0.5
        %v2709 = vmul.f32 %v2311, 0.5
        %v2710 = vmul.f32 %v2340, 0.5
        %v2711 = vmul.f32 %v2369, 0.5
        %v2712 = vmul.f32 %v2398, 0.5
        %v2713 = vmul.f32 %v2427, 0.5
        %v2714 = vmul.f32 %v2456, 0.5
        %v2715 = vmul.f32 %v2485, 0.5
        %v2716 = vmul.f32 %v2514, 0.5
        %v2717 = vmul.f32 %v2543, 0.5
        %v2718 = vmul.f32 %v2572, 0.5
        %v2719 = vmul.f32 %v2601, 0.5
        %v2720 = vmul.f32 %v2630, 0.5
        %v2721 = vmul.f32 %v2659, 0.5
        %v2722 = vmul.f32 %v2688, 0.5
        %v2723 = vmul.f32 %v2255, 0.5
        %v2724 = vmul.f32 %v2284, 0.5
        %v2725 = vmul.f32 %v2313, 0.5
        %v2726 = vmul.f32 %v2342, 0.5
        %v2727 = vmul.f32 %v2371, 0.5
        %v2728 = vmul.f32 %v2400, 0.5
        %v2729 = vmul.f32 %v2429, 0.5
        %v2730 = vmul.f32 %v2458, 0.5
        %v2731 = vmul.f32 %v2487, 0.5
        %v2732 = vmul.f32 %v2516, 0.5
        %v2733 = vmul.f32 %v2545, 0.5
        %v2734 = vmul.f32 %v2574, 0.5
        %v2735 = vmul.f32 %v2603, 0.5
        %v2736 = vmul.f32 %v2632, 0.5
        %v2737 = vmul.f32 %v2661, 0.5
        %v2738 = vmul.f32 %v2690, 0.5
        %v2739 = vmul.f32 %v2258, 0.5
        %v2740 = vmul.f32 %v2287, 0.5
        %v2741 = vmul.f32 %v2316, 0.5
        %v2742 = vmul.f32 %v2345, 0.5
        %v2743 = vmul.f32 %v2374, 0.5
        %v2744 = vmul.f32 %v2403, 0.5
        %v2745 = vmul.f32 %v2432, 0.5
        %v2746 = vmul.f32 %v2461, 0.5
        %v2747 = vmul.f32 %v2490, 0.5
        %v2748 = vmul.f32 %v2519, 0.5
        %v2749 = vmul.f32 %v2548, 0.5
        %v2750 = vmul.f32 %v2577, 0.5
        %v2751 = vmul.f32 %v2606, 0.5
        %v2752 = vmul.f32 %v2635, 0.5
        %v2753 = vmul.f32 %v2664, 0.5
        %v2754 = vmul.f32 %v2693, 0.5
        %v2755 = vmul.f32 %v2260, 0.5
        %v2756 = vmul.f32 %v2289, 0.5
        %v2757 = vmul.f32 %v2318, 0.5
        %v2758 = vmul.f32 %v2347, 0.5
        %v2759 = vmul.f32 %v2376, 0.5
        %v2760 = vmul.f32 %v2405, 0.5
        %v2761 = vmul.f32 %v2434, 0.5
        %v2762 = vmul.f32 %v2463, 0.5
        %v2763 = vmul.f32 %v2492, 0.5
        %v2764 = vmul.f32 %v2521, 0.5
        %v2765 = vmul.f32 %v2550, 0.5
        %v2766 = vmul.f32 %v2579, 0.5
        %v2767 = vmul.f32 %v2608, 0.5
        %v2768 = vmul.f32 %v2637, 0.5
        %v2769 = vmul.f32 %v2666, 0.5
        %v2770 = vmul.f32 %v2695, 0.5
        %v2771 = vmul.f32 %v2263, 0.5
        %v2772 = vmul.f32 %v2292, 0.5
        %v2773 = vmul.f32 %v2321, 0.5
        %v2774 = vmul.f32 %v2350, 0.5
        %v2775 = vmul.f32 %v2379, 0.5
        %v2776 = vmul.f32 %v2408, 0.5
        %v2777 = vmul.f32 %v2437, 0.5
        %v2778 = vmul.f32 %v2466, 0.5
        %v2779 = vmul.f32 %v2495, 0.5
        %v2780 = vmul.f32 %v2524, 0.5
        %v2781 = vmul.f32 %v2553, 0.5
        %v2782 = vmul.f32 %v2582, 0.5
        %v2783 = vmul.f32 %v2611, 0.5
        %v2784 = vmul.f32 %v2640, 0.5
        %v2785 = vmul.f32 %v2669, 0.5
        %v2786 = vmul.f32 %v2698, 0.5
        %v2787 = vmul.f32 %v2265, 0.5
        %v2788 = vmul.f32 %v2294, 0.5
        %v2789 = vmul.f32 %v2323, 0.5
        %v2790 = vmul.f32 %v2352, 0.5
        %v2791 = vmul.f32 %v2381, 0.5
        %v2792 = vmul.f32 %v2410, 0.5
        %v2793 = vmul.f32 %v2439, 0.5
        %v2794 = vmul.f32 %v2468, 0.5
        %v2795 = vmul.f32 %v2497, 0.5
        %v2796 = vmul.f32 %v2526, 0.5
        %v2797 = vmul.f32 %v2555, 0.5
        %v2798 = vmul.f32 %v2584, 0.5
        %v2799 = vmul.f32 %v2613, 0.5
        %v2800 = vmul.f32 %v2642, 0.5
        %v2801 = vmul.f32 %v2671, 0.5
        %v2802 = vmul.f32 %v2700, 0.5
        %v2803 = vmul.f32 %v2268, 0.5
        %v2804 = vmul.f32 %v2297, 0.5
        %v2805 = vmul.f32 %v2326, 0.5
        %v2806 = vmul.f32 %v2355, 0.5
        %v2807 = vmul.f32 %v2384, 0.5
        %v2808 = vmul.f32 %v2413, 0.5
        %v2809 = vmul.f32 %v2442, 0.5
        %v2810 = vmul.f32 %v2471, 0.5
        %v2811 = vmul.f32 %v2500, 0.5
        %v2812 = vmul.f32 %v2529, 0.5
        %v2813 = vmul.f32 %v2558, 0.5
        %v2814 = vmul.f32 %v2587, 0.5
        %v2815 = vmul.f32 %v2616, 0.5
        %v2816 = vmul.f32 %v2645, 0.5
        %v2817 = vmul.f32 %v2674, 0.5
        %v2818 = vmul.f32 %v2703, 0.5
        %v2819 = vmul.f32 %v2270, 0.5
        %v2820 = vmul.f32 %v2299, 0.5
        %v2821 = vmul.f32 %v2328, 0.5
        %v2822 = vmul.f32 %v2357, 0.5
        %v2823 = vmul.f32 %v2386, 0.5
        %v2824 = vmul.f32 %v2415, 0.5
        %v2825 = vmul.f32 %v2444, 0.5
        %v2826 = vmul.f32 %v2473, 0.5
        %v2827 = vmul.f32 %v2502, 0.5
        %v2828 = vmul.f32 %v2531, 0.5
        %v2829 = vmul.f32 %v2560, 0.5
        %v2830 = vmul.f32 %v2589, 0.5
        %v2831 = vmul.f32 %v2618, 0.5
        %v2832 = vmul.f32 %v2647, 0.5
        %v2833 = vmul.f32 %v2676, 0.5
        %v2834 = vmul.f32 %v2705, 0.5
        %v2835 = vmul.f32 %v2253, 0.044715
        %v2836 = vmul.f32 %v2282, 0.044715
        %v2837 = vmul.f32 %v2311, 0.044715
        %v2838 = vmul.f32 %v2340, 0.044715
        %v2839 = vmul.f32 %v2369, 0.044715
        %v2840 = vmul.f32 %v2398, 0.044715
        %v2841 = vmul.f32 %v2427, 0.044715
        %v2842 = vmul.f32 %v2456, 0.044715
        %v2843 = vmul.f32 %v2485, 0.044715
        %v2844 = vmul.f32 %v2514, 0.044715
        %v2845 = vmul.f32 %v2543, 0.044715
        %v2846 = vmul.f32 %v2572, 0.044715
        %v2847 = vmul.f32 %v2601, 0.044715
        %v2848 = vmul.f32 %v2630, 0.044715
        %v2849 = vmul.f32 %v2659, 0.044715
        %v2850 = vmul.f32 %v2688, 0.044715
        %v2851 = vmul.f32 %v2255, 0.044715
        %v2852 = vmul.f32 %v2284, 0.044715
        %v2853 = vmul.f32 %v2313, 0.044715
        %v2854 = vmul.f32 %v2342, 0.044715
        %v2855 = vmul.f32 %v2371, 0.044715
        %v2856 = vmul.f32 %v2400, 0.044715
        %v2857 = vmul.f32 %v2429, 0.044715
        %v2858 = vmul.f32 %v2458, 0.044715
        %v2859 = vmul.f32 %v2487, 0.044715
        %v2860 = vmul.f32 %v2516, 0.044715
        %v2861 = vmul.f32 %v2545, 0.044715
        %v2862 = vmul.f32 %v2574, 0.044715
        %v2863 = vmul.f32 %v2603, 0.044715
        %v2864 = vmul.f32 %v2632, 0.044715
        %v2865 = vmul.f32 %v2661, 0.044715
        %v2866 = vmul.f32 %v2690, 0.044715
        %v2867 = vmul.f32 %v2258, 0.044715
        %v2868 = vmul.f32 %v2287, 0.044715
        %v2869 = vmul.f32 %v2316, 0.044715
        %v2870 = vmul.f32 %v2345, 0.044715
        %v2871 = vmul.f32 %v2374, 0.044715
        %v2872 = vmul.f32 %v2403, 0.044715
        %v2873 = vmul.f32 %v2432, 0.044715
        %v2874 = vmul.f32 %v2461, 0.044715
        %v2875 = vmul.f32 %v2490, 0.044715
        %v2876 = vmul.f32 %v2519, 0.044715
        %v2877 = vmul.f32 %v2548, 0.044715
        %v2878 = vmul.f32 %v2577, 0.044715
        %v2879 = vmul.f32 %v2606, 0.044715
        %v2880 = vmul.f32 %v2635, 0.044715
        %v2881 = vmul.f32 %v2664, 0.044715
        %v2882 = vmul.f32 %v2693, 0.044715
        %v2883 = vmul.f32 %v2260, 0.044715
        %v2884 = vmul.f32 %v2289, 0.044715
        %v2885 = vmul.f32 %v2318, 0.044715
        %v2886 = vmul.f32 %v2347, 0.044715
        %v2887 = vmul.f32 %v2376, 0.044715
        %v2888 = vmul.f32 %v2405, 0.044715
        %v2889 = vmul.f32 %v2434, 0.044715
        %v2890 = vmul.f32 %v2463, 0.044715
        %v2891 = vmul.f32 %v2492, 0.044715
        %v2892 = vmul.f32 %v2521, 0.044715
        %v2893 = vmul.f32 %v2550, 0.044715
        %v2894 = vmul.f32 %v2579, 0.044715
        %v2895 = vmul.f32 %v2608, 0.044715
        %v2896 = vmul.f32 %v2637, 0.044715
        %v2897 = vmul.f32 %v2666, 0.044715
        %v2898 = vmul.f32 %v2695, 0.044715
        %v2899 = vmul.f32 %v2263, 0.044715
        %v2900 = vmul.f32 %v2292, 0.044715
        %v2901 = vmul.f32 %v2321, 0.044715
        %v2902 = vmul.f32 %v2350, 0.044715
        %v2903 = vmul.f32 %v2379, 0.044715
        %v2904 = vmul.f32 %v2408, 0.044715
        %v2905 = vmul.f32 %v2437, 0.044715
        %v2906 = vmul.f32 %v2466, 0.044715
        %v2907 = vmul.f32 %v2495, 0.044715
        %v2908 = vmul.f32 %v2524, 0.044715
        %v2909 = vmul.f32 %v2553, 0.044715
        %v2910 = vmul.f32 %v2582, 0.044715
        %v2911 = vmul.f32 %v2611, 0.044715
        %v2912 = vmul.f32 %v2640, 0.044715
        %v2913 = vmul.f32 %v2669, 0.044715
        %v2914 = vmul.f32 %v2698, 0.044715
        %v2915 = vmul.f32 %v2265, 0.044715
        %v2916 = vmul.f32 %v2294, 0.044715
        %v2917 = vmul.f32 %v2323, 0.044715
        %v2918 = vmul.f32 %v2352, 0.044715
        %v2919 = vmul.f32 %v2381, 0.044715
        %v2920 = vmul.f32 %v2410, 0.044715
        %v2921 = vmul.f32 %v2439, 0.044715
        %v2922 = vmul.f32 %v2468, 0.044715
        %v2923 = vmul.f32 %v2497, 0.044715
        %v2924 = vmul.f32 %v2526, 0.044715
        %v2925 = vmul.f32 %v2555, 0.044715
        %v2926 = vmul.f32 %v2584, 0.044715
        %v2927 = vmul.f32 %v2613, 0.044715
        %v2928 = vmul.f32 %v2642, 0.044715
        %v2929 = vmul.f32 %v2671, 0.044715
        %v2930 = vmul.f32 %v2700, 0.044715
        %v2931 = vmul.f32 %v2268, 0.044715
        %v2932 = vmul.f32 %v2297, 0.044715
        %v2933 = vmul.f32 %v2326, 0.044715
        %v2934 = vmul.f32 %v2355, 0.044715
        %v2935 = vmul.f32 %v2384, 0.044715
        %v2936 = vmul.f32 %v2413, 0.044715
        %v2937 = vmul.f32 %v2442, 0.044715
        %v2938 = vmul.f32 %v2471, 0.044715
        %v2939 = vmul.f32 %v2500, 0.044715
        %v2940 = vmul.f32 %v2529, 0.044715
        %v2941 = vmul.f32 %v2558, 0.044715
        %v2942 = vmul.f32 %v2587, 0.044715
        %v2943 = vmul.f32 %v2616, 0.044715
        %v2944 = vmul.f32 %v2645, 0.044715
        %v2945 = vmul.f32 %v2674, 0.044715
        %v2946 = vmul.f32 %v2703, 0.044715
        %v2947 = vmul.f32 %v2270, 0.044715
        %v2948 = vmul.f32 %v2299, 0.044715
        %v2949 = vmul.f32 %v2328, 0.044715
        %v2950 = vmul.f32 %v2357, 0.044715
        %v2951 = vmul.f32 %v2386, 0.044715
        %v2952 = vmul.f32 %v2415, 0.044715
        %v2953 = vmul.f32 %v2444, 0.044715
        %v2954 = vmul.f32 %v2473, 0.044715
        %v2955 = vmul.f32 %v2502, 0.044715
        %v2956 = vmul.f32 %v2531, 0.044715
        %v2957 = vmul.f32 %v2560, 0.044715
        %v2958 = vmul.f32 %v2589, 0.044715
        %v2959 = vmul.f32 %v2618, 0.044715
        %v2960 = vmul.f32 %v2647, 0.044715
        %v2961 = vmul.f32 %v2676, 0.044715
        %v2962 = vmul.f32 %v2705, 0.044715
        %v2963 = vmul.f32 %v2835, %v2253
        %v2964 = vmul.f32 %v2836, %v2282
        %v2965 = vmul.f32 %v2837, %v2311
        %v2966 = vmul.f32 %v2838, %v2340
        %v2967 = vmul.f32 %v2839, %v2369
        %v2968 = vmul.f32 %v2840, %v2398
        %v2969 = vmul.f32 %v2841, %v2427
        %v2970 = vmul.f32 %v2842, %v2456
        %v2971 = vmul.f32 %v2843, %v2485
        %v2972 = vmul.f32 %v2844, %v2514
        %v2973 = vmul.f32 %v2845, %v2543
        %v2974 = vmul.f32 %v2846, %v2572
        %v2975 = vmul.f32 %v2847, %v2601
        %v2976 = vmul.f32 %v2848, %v2630
        %v2977 = vmul.f32 %v2849, %v2659
        %v2978 = vmul.f32 %v2850, %v2688
        %v2979 = vmul.f32 %v2851, %v2255
        %v2980 = vmul.f32 %v2852, %v2284
        %v2981 = vmul.f32 %v2853, %v2313
        %v2982 = vmul.f32 %v2854, %v2342
        %v2983 = vmul.f32 %v2855, %v2371
        %v2984 = vmul.f32 %v2856, %v2400
        %v2985 = vmul.f32 %v2857, %v2429
        %v2986 = vmul.f32 %v2858, %v2458
        %v2987 = vmul.f32 %v2859, %v2487
        %v2988 = vmul.f32 %v2860, %v2516
        %v2989 = vmul.f32 %v2861, %v2545
        %v2990 = vmul.f32 %v2862, %v2574
        %v2991 = vmul.f32 %v2863, %v2603
        %v2992 = vmul.f32 %v2864, %v2632
        %v2993 = vmul.f32 %v2865, %v2661
        %v2994 = vmul.f32 %v2866, %v2690
        %v2995 = vmul.f32 %v2867, %v2258
        %v2996 = vmul.f32 %v2868, %v2287
        %v2997 = vmul.f32 %v2869, %v2316
        %v2998 = vmul.f32 %v2870, %v2345
        %v2999 = vmul.f32 %v2871, %v2374
        %v3000 = vmul.f32 %v2872, %v2403
        %v3001 = vmul.f32 %v2873, %v2432
        %v3002 = vmul.f32 %v2874, %v2461
        %v3003 = vmul.f32 %v2875, %v2490
        %v3004 = vmul.f32 %v2876, %v2519
        %v3005 = vmul.f32 %v2877, %v2548
        %v3006 = vmul.f32 %v2878, %v2577
        %v3007 = vmul.f32 %v2879, %v2606
        %v3008 = vmul.f32 %v2880, %v2635
        %v3009 = vmul.f32 %v2881, %v2664
        %v3010 = vmul.f32 %v2882, %v2693
        %v3011 = vmul.f32 %v2883, %v2260
        %v3012 = vmul.f32 %v2884, %v2289
        %v3013 = vmul.f32 %v2885, %v2318
        %v3014 = vmul.f32 %v2886, %v2347
        %v3015 = vmul.f32 %v2887, %v2376
        %v3016 = vmul.f32 %v2888, %v2405
        %v3017 = vmul.f32 %v2889, %v2434
        %v3018 = vmul.f32 %v2890, %v2463
        %v3019 = vmul.f32 %v2891, %v2492
        %v3020 = vmul.f32 %v2892, %v2521
        %v3021 = vmul.f32 %v2893, %v2550
        %v3022 = vmul.f32 %v2894, %v2579
        %v3023 = vmul.f32 %v2895, %v2608
        %v3024 = vmul.f32 %v2896, %v2637
        %v3025 = vmul.f32 %v2897, %v2666
        %v3026 = vmul.f32 %v2898, %v2695
        %v3027 = vmul.f32 %v2899, %v2263
        %v3028 = vmul.f32 %v2900, %v2292
        %v3029 = vmul.f32 %v2901, %v2321
        %v3030 = vmul.f32 %v2902, %v2350
        %v3031 = vmul.f32 %v2903, %v2379
        %v3032 = vmul.f32 %v2904, %v2408
        %v3033 = vmul.f32 %v2905, %v2437
        %v3034 = vmul.f32 %v2906, %v2466
        %v3035 = vmul.f32 %v2907, %v2495
        %v3036 = vmul.f32 %v2908, %v2524
        %v3037 = vmul.f32 %v2909, %v2553
        %v3038 = vmul.f32 %v2910, %v2582
        %v3039 = vmul.f32 %v2911, %v2611
        %v3040 = vmul.f32 %v2912, %v2640
        %v3041 = vmul.f32 %v2913, %v2669
        %v3042 = vmul.f32 %v2914, %v2698
        %v3043 = vmul.f32 %v2915, %v2265
        %v3044 = vmul.f32 %v2916, %v2294
        %v3045 = vmul.f32 %v2917, %v2323
        %v3046 = vmul.f32 %v2918, %v2352
        %v3047 = vmul.f32 %v2919, %v2381
        %v3048 = vmul.f32 %v2920, %v2410
        %v3049 = vmul.f32 %v2921, %v2439
        %v3050 = vmul.f32 %v2922, %v2468
        %v3051 = vmul.f32 %v2923, %v2497
        %v3052 = vmul.f32 %v2924, %v2526
        %v3053 = vmul.f32 %v2925, %v2555
        %v3054 = vmul.f32 %v2926, %v2584
        %v3055 = vmul.f32 %v2927, %v2613
        %v3056 = vmul.f32 %v2928, %v2642
        %v3057 = vmul.f32 %v2929, %v2671
        %v3058 = vmul.f32 %v2930, %v2700
        %v3059 = vmul.f32 %v2931, %v2268
        %v3060 = vmul.f32 %v2932, %v2297
        %v3061 = vmul.f32 %v2933, %v2326
        %v3062 = vmul.f32 %v2934, %v2355
        %v3063 = vmul.f32 %v2935, %v2384
        %v3064 = vmul.f32 %v2936, %v2413
        %v3065 = vmul.f32 %v2937, %v2442
        %v3066 = vmul.f32 %v2938, %v2471
        %v3067 = vmul.f32 %v2939, %v2500
        %v3068 = vmul.f32 %v2940, %v2529
        %v3069 = vmul.f32 %v2941, %v2558
        %v3070 = vmul.f32 %v2942, %v2587
        %v3071 = vmul.f32 %v2943, %v2616
        %v3072 = vmul.f32 %v2944, %v2645
        %v3073 = vmul.f32 %v2945, %v2674
        %v3074 = vmul.f32 %v2946, %v2703
        %v3075 = vmul.f32 %v2947, %v2270
        %v3076 = vmul.f32 %v2948, %v2299
        %v3077 = vmul.f32 %v2949, %v2328
        %v3078 = vmul.f32 %v2950, %v2357
        %v3079 = vmul.f32 %v2951, %v2386
        %v3080 = vmul.f32 %v2952, %v2415
        %v3081 = vmul.f32 %v2953, %v2444
        %v3082 = vmul.f32 %v2954, %v2473
        %v3083 = vmul.f32 %v2955, %v2502
        %v3084 = vmul.f32 %v2956, %v2531
        %v3085 = vmul.f32 %v2957, %v2560
        %v3086 = vmul.f32 %v2958, %v2589
        %v3087 = vmul.f32 %v2959, %v2618
        %v3088 = vmul.f32 %v2960, %v2647
        %v3089 = vmul.f32 %v2961, %v2676
        %v3090 = vmul.f32 %v2962, %v2705
        %v3091 = vmul.f32 %v2963, %v2253
        %v3092 = vmul.f32 %v2964, %v2282
        %v3093 = vmul.f32 %v2965, %v2311
        %v3094 = vmul.f32 %v2966, %v2340
        %v3095 = vmul.f32 %v2967, %v2369
        %v3096 = vmul.f32 %v2968, %v2398
        %v3097 = vmul.f32 %v2969, %v2427
        %v3098 = vmul.f32 %v2970, %v2456
        %v3099 = vmul.f32 %v2971, %v2485
        %v3100 = vmul.f32 %v2972, %v2514
        %v3101 = vmul.f32 %v2973, %v2543
        %v3102 = vmul.f32 %v2974, %v2572
        %v3103 = vmul.f32 %v2975, %v2601
        %v3104 = vmul.f32 %v2976, %v2630
        %v3105 = vmul.f32 %v2977, %v2659
        %v3106 = vmul.f32 %v2978, %v2688
        %v3107 = vmul.f32 %v2979, %v2255
        %v3108 = vmul.f32 %v2980, %v2284
        %v3109 = vmul.f32 %v2981, %v2313
        %v3110 = vmul.f32 %v2982, %v2342
        %v3111 = vmul.f32 %v2983, %v2371
        %v3112 = vmul.f32 %v2984, %v2400
        %v3113 = vmul.f32 %v2985, %v2429
        %v3114 = vmul.f32 %v2986, %v2458
        %v3115 = vmul.f32 %v2987, %v2487
        %v3116 = vmul.f32 %v2988, %v2516
        %v3117 = vmul.f32 %v2989, %v2545
        %v3118 = vmul.f32 %v2990, %v2574
        %v3119 = vmul.f32 %v2991, %v2603
        %v3120 = vmul.f32 %v2992, %v2632
        %v3121 = vmul.f32 %v2993, %v2661
        %v3122 = vmul.f32 %v2994, %v2690
        %v3123 = vmul.f32 %v2995, %v2258
        %v3124 = vmul.f32 %v2996, %v2287
        %v3125 = vmul.f32 %v2997, %v2316
        %v3126 = vmul.f32 %v2998, %v2345
        %v3127 = vmul.f32 %v2999, %v2374
        %v3128 = vmul.f32 %v3000, %v2403
        %v3129 = vmul.f32 %v3001, %v2432
        %v3130 = vmul.f32 %v3002, %v2461
        %v3131 = vmul.f32 %v3003, %v2490
        %v3132 = vmul.f32 %v3004, %v2519
        %v3133 = vmul.f32 %v3005, %v2548
        %v3134 = vmul.f32 %v3006, %v2577
        %v3135 = vmul.f32 %v3007, %v2606
        %v3136 = vmul.f32 %v3008, %v2635
        %v3137 = vmul.f32 %v3009, %v2664
        %v3138 = vmul.f32 %v3010, %v2693
        %v3139 = vmul.f32 %v3011, %v2260
        %v3140 = vmul.f32 %v3012, %v2289
        %v3141 = vmul.f32 %v3013, %v2318
        %v3142 = vmul.f32 %v3014, %v2347
        %v3143 = vmul.f32 %v3015, %v2376
        %v3144 = vmul.f32 %v3016, %v2405
        %v3145 = vmul.f32 %v3017, %v2434
        %v3146 = vmul.f32 %v3018, %v2463
        %v3147 = vmul.f32 %v3019, %v2492
        %v3148 = vmul.f32 %v3020, %v2521
        %v3149 = vmul.f32 %v3021, %v2550
        %v3150 = vmul.f32 %v3022, %v2579
        %v3151 = vmul.f32 %v3023, %v2608
        %v3152 = vmul.f32 %v3024, %v2637
        %v3153 = vmul.f32 %v3025, %v2666
        %v3154 = vmul.f32 %v3026, %v2695
        %v3155 = vmul.f32 %v3027, %v2263
        %v3156 = vmul.f32 %v3028, %v2292
        %v3157 = vmul.f32 %v3029, %v2321
        %v3158 = vmul.f32 %v3030, %v2350
        %v3159 = vmul.f32 %v3031, %v2379
        %v3160 = vmul.f32 %v3032, %v2408
        %v3161 = vmul.f32 %v3033, %v2437
        %v3162 = vmul.f32 %v3034, %v2466
        %v3163 = vmul.f32 %v3035, %v2495
        %v3164 = vmul.f32 %v3036, %v2524
        %v3165 = vmul.f32 %v3037, %v2553
        %v3166 = vmul.f32 %v3038, %v2582
        %v3167 = vmul.f32 %v3039, %v2611
        %v3168 = vmul.f32 %v3040, %v2640
        %v3169 = vmul.f32 %v3041, %v2669
        %v3170 = vmul.f32 %v3042, %v2698
        %v3171 = vmul.f32 %v3043, %v2265
        %v3172 = vmul.f32 %v3044, %v2294
        %v3173 = vmul.f32 %v3045, %v2323
        %v3174 = vmul.f32 %v3046, %v2352
        %v3175 = vmul.f32 %v3047, %v2381
        %v3176 = vmul.f32 %v3048, %v2410
        %v3177 = vmul.f32 %v3049, %v2439
        %v3178 = vmul.f32 %v3050, %v2468
        %v3179 = vmul.f32 %v3051, %v2497
        %v3180 = vmul.f32 %v3052, %v2526
        %v3181 = vmul.f32 %v3053, %v2555
        %v3182 = vmul.f32 %v3054, %v2584
        %v3183 = vmul.f32 %v3055, %v2613
        %v3184 = vmul.f32 %v3056, %v2642
        %v3185 = vmul.f32 %v3057, %v2671
        %v3186 = vmul.f32 %v3058, %v2700
        %v3187 = vmul.f32 %v3059, %v2268
        %v3188 = vmul.f32 %v3060, %v2297
        %v3189 = vmul.f32 %v3061, %v2326
        %v3190 = vmul.f32 %v3062, %v2355
        %v3191 = vmul.f32 %v3063, %v2384
        %v3192 = vmul.f32 %v3064, %v2413
        %v3193 = vmul.f32 %v3065, %v2442
        %v3194 = vmul.f32 %v3066, %v2471
        %v3195 = vmul.f32 %v3067, %v2500
        %v3196 = vmul.f32 %v3068, %v2529
        %v3197 = vmul.f32 %v3069, %v2558
        %v3198 = vmul.f32 %v3070, %v2587
        %v3199 = vmul.f32 %v3071, %v2616
        %v3200 = vmul.f32 %v3072, %v2645
        %v3201 = vmul.f32 %v3073, %v2674
        %v3202 = vmul.f32 %v3074, %v2703
        %v3203 = vmul.f32 %v3075, %v2270
        %v3204 = vmul.f32 %v3076, %v2299
        %v3205 = vmul.f32 %v3077, %v2328
        %v3206 = vmul.f32 %v3078, %v2357
        %v3207 = vmul.f32 %v3079, %v2386
        %v3208 = vmul.f32 %v3080, %v2415
        %v3209 = vmul.f32 %v3081, %v2444
        %v3210 = vmul.f32 %v3082, %v2473
        %v3211 = vmul.f32 %v3083, %v2502
        %v3212 = vmul.f32 %v3084, %v2531
        %v3213 = vmul.f32 %v3085, %v2560
        %v3214 = vmul.f32 %v3086, %v2589
        %v3215 = vmul.f32 %v3087, %v2618
        %v3216 = vmul.f32 %v3088, %v2647
        %v3217 = vmul.f32 %v3089, %v2676
        %v3218 = vmul.f32 %v3090, %v2705
        %v3219 = vadd.f32 %v2253, %v3091
        %v3220 = vadd.f32 %v2282, %v3092
        %v3221 = vadd.f32 %v2311, %v3093
        %v3222 = vadd.f32 %v2340, %v3094
        %v3223 = vadd.f32 %v2369, %v3095
        %v3224 = vadd.f32 %v2398, %v3096
        %v3225 = vadd.f32 %v2427, %v3097
        %v3226 = vadd.f32 %v2456, %v3098
        %v3227 = vadd.f32 %v2485, %v3099
        %v3228 = vadd.f32 %v2514, %v3100
        %v3229 = vadd.f32 %v2543, %v3101
        %v3230 = vadd.f32 %v2572, %v3102
        %v3231 = vadd.f32 %v2601, %v3103
        %v3232 = vadd.f32 %v2630, %v3104
        %v3233 = vadd.f32 %v2659, %v3105
        %v3234 = vadd.f32 %v2688, %v3106
        %v3235 = vadd.f32 %v2255, %v3107
        %v3236 = vadd.f32 %v2284, %v3108
        %v3237 = vadd.f32 %v2313, %v3109
        %v3238 = vadd.f32 %v2342, %v3110
        %v3239 = vadd.f32 %v2371, %v3111
        %v3240 = vadd.f32 %v2400, %v3112
        %v3241 = vadd.f32 %v2429, %v3113
        %v3242 = vadd.f32 %v2458, %v3114
        %v3243 = vadd.f32 %v2487, %v3115
        %v3244 = vadd.f32 %v2516, %v3116
        %v3245 = vadd.f32 %v2545, %v3117
        %v3246 = vadd.f32 %v2574, %v3118
        %v3247 = vadd.f32 %v2603, %v3119
        %v3248 = vadd.f32 %v2632, %v3120
        %v3249 = vadd.f32 %v2661, %v3121
        %v3250 = vadd.f32 %v2690, %v3122
        %v3251 = vadd.f32 %v2258, %v3123
        %v3252 = vadd.f32 %v2287, %v3124
        %v3253 = vadd.f32 %v2316, %v3125
        %v3254 = vadd.f32 %v2345, %v3126
        %v3255 = vadd.f32 %v2374, %v3127
        %v3256 = vadd.f32 %v2403, %v3128
        %v3257 = vadd.f32 %v2432, %v3129
        %v3258 = vadd.f32 %v2461, %v3130
        %v3259 = vadd.f32 %v2490, %v3131
        %v3260 = vadd.f32 %v2519, %v3132
        %v3261 = vadd.f32 %v2548, %v3133
        %v3262 = vadd.f32 %v2577, %v3134
        %v3263 = vadd.f32 %v2606, %v3135
        %v3264 = vadd.f32 %v2635, %v3136
        %v3265 = vadd.f32 %v2664, %v3137
        %v3266 = vadd.f32 %v2693, %v3138
        %v3267 = vadd.f32 %v2260, %v3139
        %v3268 = vadd.f32 %v2289, %v3140
        %v3269 = vadd.f32 %v2318, %v3141
        %v3270 = vadd.f32 %v2347, %v3142
        %v3271 = vadd.f32 %v2376, %v3143
        %v3272 = vadd.f32 %v2405, %v3144
        %v3273 = vadd.f32 %v2434, %v3145
        %v3274 = vadd.f32 %v2463, %v3146
        %v3275 = vadd.f32 %v2492, %v3147
        %v3276 = vadd.f32 %v2521, %v3148
        %v3277 = vadd.f32 %v2550, %v3149
        %v3278 = vadd.f32 %v2579, %v3150
        %v3279 = vadd.f32 %v2608, %v3151
        %v3280 = vadd.f32 %v2637, %v3152
        %v3281 = vadd.f32 %v2666, %v3153
        %v3282 = vadd.f32 %v2695, %v3154
        %v3283 = vadd.f32 %v2263, %v3155
        %v3284 = vadd.f32 %v2292, %v3156
        %v3285 = vadd.f32 %v2321, %v3157
        %v3286 = vadd.f32 %v2350, %v3158
        %v3287 = vadd.f32 %v2379, %v3159
        %v3288 = vadd.f32 %v2408, %v3160
        %v3289 = vadd.f32 %v2437, %v3161
        %v3290 = vadd.f32 %v2466, %v3162
        %v3291 = vadd.f32 %v2495, %v3163
        %v3292 = vadd.f32 %v2524, %v3164
        %v3293 = vadd.f32 %v2553, %v3165
        %v3294 = vadd.f32 %v2582, %v3166
        %v3295 = vadd.f32 %v2611, %v3167
        %v3296 = vadd.f32 %v2640, %v3168
        %v3297 = vadd.f32 %v2669, %v3169
        %v3298 = vadd.f32 %v2698, %v3170
        %v3299 = vadd.f32 %v2265, %v3171
        %v3300 = vadd.f32 %v2294, %v3172
        %v3301 = vadd.f32 %v2323, %v3173
        %v3302 = vadd.f32 %v2352, %v3174
        %v3303 = vadd.f32 %v2381, %v3175
        %v3304 = vadd.f32 %v2410, %v3176
        %v3305 = vadd.f32 %v2439, %v3177
        %v3306 = vadd.f32 %v2468, %v3178
        %v3307 = vadd.f32 %v2497, %v3179
        %v3308 = vadd.f32 %v2526, %v3180
        %v3309 = vadd.f32 %v2555, %v3181
        %v3310 = vadd.f32 %v2584, %v3182
        %v3311 = vadd.f32 %v2613, %v3183
        %v3312 = vadd.f32 %v2642, %v3184
        %v3313 = vadd.f32 %v2671, %v3185
        %v3314 = vadd.f32 %v2700, %v3186
        %v3315 = vadd.f32 %v2268, %v3187
        %v3316 = vadd.f32 %v2297, %v3188
        %v3317 = vadd.f32 %v2326, %v3189
        %v3318 = vadd.f32 %v2355, %v3190
        %v3319 = vadd.f32 %v2384, %v3191
        %v3320 = vadd.f32 %v2413, %v3192
        %v3321 = vadd.f32 %v2442, %v3193
        %v3322 = vadd.f32 %v2471, %v3194
        %v3323 = vadd.f32 %v2500, %v3195
        %v3324 = vadd.f32 %v2529, %v3196
        %v3325 = vadd.f32 %v2558, %v3197
        %v3326 = vadd.f32 %v2587, %v3198
        %v3327 = vadd.f32 %v2616, %v3199
        %v3328 = vadd.f32 %v2645, %v3200
        %v3329 = vadd.f32 %v2674, %v3201
        %v3330 = vadd.f32 %v2703, %v3202
        %v3331 = vadd.f32 %v2270, %v3203
        %v3332 = vadd.f32 %v2299, %v3204
        %v3333 = vadd.f32 %v2328, %v3205
        %v3334 = vadd.f32 %v2357, %v3206
        %v3335 = vadd.f32 %v2386, %v3207
        %v3336 = vadd.f32 %v2415, %v3208
        %v3337 = vadd.f32 %v2444, %v3209
        %v3338 = vadd.f32 %v2473, %v3210
        %v3339 = vadd.f32 %v2502, %v3211
        %v3340 = vadd.f32 %v2531, %v3212
        %v3341 = vadd.f32 %v2560, %v3213
        %v3342 = vadd.f32 %v2589, %v3214
        %v3343 = vadd.f32 %v2618, %v3215
        %v3344 = vadd.f32 %v2647, %v3216
        %v3345 = vadd.f32 %v2676, %v3217
        %v3346 = vadd.f32 %v2705, %v3218
        %v3347 = vmul.f32 %v3219, 0.7978846
        %v3348 = vmul.f32 %v3220, 0.7978846
        %v3349 = vmul.f32 %v3221, 0.7978846
        %v3350 = vmul.f32 %v3222, 0.7978846
        %v3351 = vmul.f32 %v3223, 0.7978846
        %v3352 = vmul.f32 %v3224, 0.7978846
        %v3353 = vmul.f32 %v3225, 0.7978846
        %v3354 = vmul.f32 %v3226, 0.7978846
        %v3355 = vmul.f32 %v3227, 0.7978846
        %v3356 = vmul.f32 %v3228, 0.7978846
        %v3357 = vmul.f32 %v3229, 0.7978846
        %v3358 = vmul.f32 %v3230, 0.7978846
        %v3359 = vmul.f32 %v3231, 0.7978846
        %v3360 = vmul.f32 %v3232, 0.7978846
        %v3361 = vmul.f32 %v3233, 0.7978846
        %v3362 = vmul.f32 %v3234, 0.7978846
        %v3363 = vmul.f32 %v3235, 0.7978846
        %v3364 = vmul.f32 %v3236, 0.7978846
        %v3365 = vmul.f32 %v3237, 0.7978846
        %v3366 = vmul.f32 %v3238, 0.7978846
        %v3367 = vmul.f32 %v3239, 0.7978846
        %v3368 = vmul.f32 %v3240, 0.7978846
        %v3369 = vmul.f32 %v3241, 0.7978846
        %v3370 = vmul.f32 %v3242, 0.7978846
        %v3371 = vmul.f32 %v3243, 0.7978846
        %v3372 = vmul.f32 %v3244, 0.7978846
        %v3373 = vmul.f32 %v3245, 0.7978846
        %v3374 = vmul.f32 %v3246, 0.7978846
        %v3375 = vmul.f32 %v3247, 0.7978846
        %v3376 = vmul.f32 %v3248, 0.7978846
        %v3377 = vmul.f32 %v3249, 0.7978846
        %v3378 = vmul.f32 %v3250, 0.7978846
        %v3379 = vmul.f32 %v3251, 0.7978846
        %v3380 = vmul.f32 %v3252, 0.7978846
        %v3381 = vmul.f32 %v3253, 0.7978846
        %v3382 = vmul.f32 %v3254, 0.7978846
        %v3383 = vmul.f32 %v3255, 0.7978846
        %v3384 = vmul.f32 %v3256, 0.7978846
        %v3385 = vmul.f32 %v3257, 0.7978846
        %v3386 = vmul.f32 %v3258, 0.7978846
        %v3387 = vmul.f32 %v3259, 0.7978846
        %v3388 = vmul.f32 %v3260, 0.7978846
        %v3389 = vmul.f32 %v3261, 0.7978846
        %v3390 = vmul.f32 %v3262, 0.7978846
        %v3391 = vmul.f32 %v3263, 0.7978846
        %v3392 = vmul.f32 %v3264, 0.7978846
        %v3393 = vmul.f32 %v3265, 0.7978846
        %v3394 = vmul.f32 %v3266, 0.7978846
        %v3395 = vmul.f32 %v3267, 0.7978846
        %v3396 = vmul.f32 %v3268, 0.7978846
        %v3397 = vmul.f32 %v3269, 0.7978846
        %v3398 = vmul.f32 %v3270, 0.7978846
        %v3399 = vmul.f32 %v3271, 0.7978846
        %v3400 = vmul.f32 %v3272, 0.7978846
        %v3401 = vmul.f32 %v3273, 0.7978846
        %v3402 = vmul.f32 %v3274, 0.7978846
        %v3403 = vmul.f32 %v3275, 0.7978846
        %v3404 = vmul.f32 %v3276, 0.7978846
        %v3405 = vmul.f32 %v3277, 0.7978846
        %v3406 = vmul.f32 %v3278, 0.7978846
        %v3407 = vmul.f32 %v3279, 0.7978846
        %v3408 = vmul.f32 %v3280, 0.7978846
        %v3409 = vmul.f32 %v3281, 0.7978846
        %v3410 = vmul.f32 %v3282, 0.7978846
        %v3411 = vmul.f32 %v3283, 0.7978846
        %v3412 = vmul.f32 %v3284, 0.7978846
        %v3413 = vmul.f32 %v3285, 0.7978846
        %v3414 = vmul.f32 %v3286, 0.7978846
        %v3415 = vmul.f32 %v3287, 0.7978846
        %v3416 = vmul.f32 %v3288, 0.7978846
        %v3417 = vmul.f32 %v3289, 0.7978846
        %v3418 = vmul.f32 %v3290, 0.7978846
        %v3419 = vmul.f32 %v3291, 0.7978846
        %v3420 = vmul.f32 %v3292, 0.7978846
        %v3421 = vmul.f32 %v3293, 0.7978846
        %v3422 = vmul.f32 %v3294, 0.7978846
        %v3423 = vmul.f32 %v3295, 0.7978846
        %v3424 = vmul.f32 %v3296, 0.7978846
        %v3425 = vmul.f32 %v3297, 0.7978846
        %v3426 = vmul.f32 %v3298, 0.7978846
        %v3427 = vmul.f32 %v3299, 0.7978846
        %v3428 = vmul.f32 %v3300, 0.7978846
        %v3429 = vmul.f32 %v3301, 0.7978846
        %v3430 = vmul.f32 %v3302, 0.7978846
        %v3431 = vmul.f32 %v3303, 0.7978846
        %v3432 = vmul.f32 %v3304, 0.7978846
        %v3433 = vmul.f32 %v3305, 0.7978846
        %v3434 = vmul.f32 %v3306, 0.7978846
        %v3435 = vmul.f32 %v3307, 0.7978846
        %v3436 = vmul.f32 %v3308, 0.7978846
        %v3437 = vmul.f32 %v3309, 0.7978846
        %v3438 = vmul.f32 %v3310, 0.7978846
        %v3439 = vmul.f32 %v3311, 0.7978846
        %v3440 = vmul.f32 %v3312, 0.7978846
        %v3441 = vmul.f32 %v3313, 0.7978846
        %v3442 = vmul.f32 %v3314, 0.7978846
        %v3443 = vmul.f32 %v3315, 0.7978846
        %v3444 = vmul.f32 %v3316, 0.7978846
        %v3445 = vmul.f32 %v3317, 0.7978846
        %v3446 = vmul.f32 %v3318, 0.7978846
        %v3447 = vmul.f32 %v3319, 0.7978846
        %v3448 = vmul.f32 %v3320, 0.7978846
        %v3449 = vmul.f32 %v3321, 0.7978846
        %v3450 = vmul.f32 %v3322, 0.7978846
        %v3451 = vmul.f32 %v3323, 0.7978846
        %v3452 = vmul.f32 %v3324, 0.7978846
        %v3453 = vmul.f32 %v3325, 0.7978846
        %v3454 = vmul.f32 %v3326, 0.7978846
        %v3455 = vmul.f32 %v3327, 0.7978846
        %v3456 = vmul.f32 %v3328, 0.7978846
        %v3457 = vmul.f32 %v3329, 0.7978846
        %v3458 = vmul.f32 %v3330, 0.7978846
        %v3459 = vmul.f32 %v3331, 0.7978846
        %v3460 = vmul.f32 %v3332, 0.7978846
        %v3461 = vmul.f32 %v3333, 0.7978846
        %v3462 = vmul.f32 %v3334, 0.7978846
        %v3463 = vmul.f32 %v3335, 0.7978846
        %v3464 = vmul.f32 %v3336, 0.7978846
        %v3465 = vmul.f32 %v3337, 0.7978846
        %v3466 = vmul.f32 %v3338, 0.7978846
        %v3467 = vmul.f32 %v3339, 0.7978846
        %v3468 = vmul.f32 %v3340, 0.7978846
        %v3469 = vmul.f32 %v3341, 0.7978846
        %v3470 = vmul.f32 %v3342, 0.7978846
        %v3471 = vmul.f32 %v3343, 0.7978846
        %v3472 = vmul.f32 %v3344, 0.7978846
        %v3473 = vmul.f32 %v3345, 0.7978846
        %v3474 = vmul.f32 %v3346, 0.7978846
        %v3475 = vtanh.pop %v3347
        %v3476 = vtanh.pop %v3348
        %v3477 = vtanh.pop %v3349
        %v3478 = vtanh.pop %v3350
        %v3479 = vtanh.pop %v3351
        %v3480 = vtanh.pop %v3352
        %v3481 = vtanh.pop %v3353
        %v3482 = vtanh.pop %v3354
        %v3483 = vtanh.pop %v3355
        %v3484 = vtanh.pop %v3356
        %v3485 = vtanh.pop %v3357
        %v3486 = vtanh.pop %v3358
        %v3487 = vtanh.pop %v3359
        %v3488 = vtanh.pop %v3360
        %v3489 = vtanh.pop %v3361
        %v3490 = vtanh.pop %v3362
        %v3491 = vtanh.pop %v3363
        %v3492 = vtanh.pop %v3364
        %v3493 = vtanh.pop %v3365
        %v3494 = vtanh.pop %v3366
        %v3495 = vtanh.pop %v3367
        %v3496 = vtanh.pop %v3368
        %v3497 = vtanh.pop %v3369
        %v3498 = vtanh.pop %v3370
        %v3499 = vtanh.pop %v3371
        %v3500 = vtanh.pop %v3372
        %v3501 = vtanh.pop %v3373
        %v3502 = vtanh.pop %v3374
        %v3503 = vtanh.pop %v3375
        %v3504 = vtanh.pop %v3376
        %v3505 = vtanh.pop %v3377
        %v3506 = vtanh.pop %v3378
        %v3507 = vtanh.pop %v3379
        %v3508 = vtanh.pop %v3380
        %v3509 = vtanh.pop %v3381
        %v3510 = vtanh.pop %v3382
        %v3511 = vtanh.pop %v3383
        %v3512 = vtanh.pop %v3384
        %v3513 = vtanh.pop %v3385
        %v3514 = vtanh.pop %v3386
        %v3515 = vtanh.pop %v3387
        %v3516 = vtanh.pop %v3388
        %v3517 = vtanh.pop %v3389
        %v3518 = vtanh.pop %v3390
        %v3519 = vtanh.pop %v3391
        %v3520 = vtanh.pop %v3392
        %v3521 = vtanh.pop %v3393
        %v3522 = vtanh.pop %v3394
        %v3523 = vtanh.pop %v3395
        %v3524 = vtanh.pop %v3396
        %v3525 = vtanh.pop %v3397
        %v3526 = vtanh.pop %v3398
        %v3527 = vtanh.pop %v3399
        %v3528 = vtanh.pop %v3400
        %v3529 = vtanh.pop %v3401
        %v3530 = vtanh.pop %v3402
        %v3531 = vtanh.pop %v3403
        %v3532 = vtanh.pop %v3404
        %v3533 = vtanh.pop %v3405
        %v3534 = vtanh.pop %v3406
        %v3535 = vtanh.pop %v3407
        %v3536 = vtanh.pop %v3408
        %v3537 = vtanh.pop %v3409
        %v3538 = vtanh.pop %v3410
        %v3539 = vtanh.pop %v3411
        %v3540 = vtanh.pop %v3412
        %v3541 = vtanh.pop %v3413
        %v3542 = vtanh.pop %v3414
        %v3543 = vtanh.pop %v3415
        %v3544 = vtanh.pop %v3416
        %v3545 = vtanh.pop %v3417
        %v3546 = vtanh.pop %v3418
        %v3547 = vtanh.pop %v3419
        %v3548 = vtanh.pop %v3420
        %v3549 = vtanh.pop %v3421
        %v3550 = vtanh.pop %v3422
        %v3551 = vtanh.pop %v3423
        %v3552 = vtanh.pop %v3424
        %v3553 = vtanh.pop %v3425
        %v3554 = vtanh.pop %v3426
        %v3555 = vtanh.pop %v3427
        %v3556 = vtanh.pop %v3428
        %v3557 = vtanh.pop %v3429
        %v3558 = vtanh.pop %v3430
        %v3559 = vtanh.pop %v3431
        %v3560 = vtanh.pop %v3432
        %v3561 = vtanh.pop %v3433
        %v3562 = vtanh.pop %v3434
        %v3563 = vtanh.pop %v3435
        %v3564 = vtanh.pop %v3436
        %v3565 = vtanh.pop %v3437
        %v3566 = vtanh.pop %v3438
        %v3567 = vtanh.pop %v3439
        %v3568 = vtanh.pop %v3440
        %v3569 = vtanh.pop %v3441
        %v3570 = vtanh.pop %v3442
        %v3571 = vtanh.pop %v3443
        %v3572 = vtanh.pop %v3444
        %v3573 = vtanh.pop %v3445
        %v3574 = vtanh.pop %v3446
        %v3575 = vtanh.pop %v3447
        %v3576 = vtanh.pop %v3448
        %v3577 = vtanh.pop %v3449
        %v3578 = vtanh.pop %v3450
        %v3579 = vtanh.pop %v3451
        %v3580 = vtanh.pop %v3452
        %v3581 = vtanh.pop %v3453
        %v3582 = vtanh.pop %v3454
        %v3583 = vtanh.pop %v3455
        %v3584 = vtanh.pop %v3456
        %v3585 = vtanh.pop %v3457
        %v3586 = vtanh.pop %v3458
        %v3587 = vtanh.pop %v3459
        %v3588 = vtanh.pop %v3460
        %v3589 = vtanh.pop %v3461
        %v3590 = vtanh.pop %v3462
        %v3591 = vtanh.pop %v3463
        %v3592 = vtanh.pop %v3464
        %v3593 = vtanh.pop %v3465
        %v3594 = vtanh.pop %v3466
        %v3595 = vtanh.pop %v3467
        %v3596 = vtanh.pop %v3468
        %v3597 = vtanh.pop %v3469
        %v3598 = vtanh.pop %v3470
        %v3599 = vtanh.pop %v3471
        %v3600 = vtanh.pop %v3472
        %v3601 = vtanh.pop %v3473
        %v3602 = vtanh.pop %v3474
        %v3603 = vadd.f32 %v3475, 1.0
        %v3604 = vadd.f32 %v3476, 1.0
        %v3605 = vadd.f32 %v3477, 1.0
        %v3606 = vadd.f32 %v3478, 1.0
        %v3607 = vadd.f32 %v3479, 1.0
        %v3608 = vadd.f32 %v3480, 1.0
        %v3609 = vadd.f32 %v3481, 1.0
        %v3610 = vadd.f32 %v3482, 1.0
        %v3611 = vadd.f32 %v3483, 1.0
        %v3612 = vadd.f32 %v3484, 1.0
        %v3613 = vadd.f32 %v3485, 1.0
        %v3614 = vadd.f32 %v3486, 1.0
        %v3615 = vadd.f32 %v3487, 1.0
        %v3616 = vadd.f32 %v3488, 1.0
        %v3617 = vadd.f32 %v3489, 1.0
        %v3618 = vadd.f32 %v3490, 1.0
        %v3619 = vadd.f32 %v3491, 1.0
        %v3620 = vadd.f32 %v3492, 1.0
        %v3621 = vadd.f32 %v3493, 1.0
        %v3622 = vadd.f32 %v3494, 1.0
        %v3623 = vadd.f32 %v3495, 1.0
        %v3624 = vadd.f32 %v3496, 1.0
        %v3625 = vadd.f32 %v3497, 1.0
        %v3626 = vadd.f32 %v3498, 1.0
        %v3627 = vadd.f32 %v3499, 1.0
        %v3628 = vadd.f32 %v3500, 1.0
        %v3629 = vadd.f32 %v3501, 1.0
        %v3630 = vadd.f32 %v3502, 1.0
        %v3631 = vadd.f32 %v3503, 1.0
        %v3632 = vadd.f32 %v3504, 1.0
        %v3633 = vadd.f32 %v3505, 1.0
        %v3634 = vadd.f32 %v3506, 1.0
        %v3635 = vadd.f32 %v3507, 1.0
        %v3636 = vadd.f32 %v3508, 1.0
        %v3637 = vadd.f32 %v3509, 1.0
        %v3638 = vadd.f32 %v3510, 1.0
        %v3639 = vadd.f32 %v3511, 1.0
        %v3640 = vadd.f32 %v3512, 1.0
        %v3641 = vadd.f32 %v3513, 1.0
        %v3642 = vadd.f32 %v3514, 1.0
        %v3643 = vadd.f32 %v3515, 1.0
        %v3644 = vadd.f32 %v3516, 1.0
        %v3645 = vadd.f32 %v3517, 1.0
        %v3646 = vadd.f32 %v3518, 1.0
        %v3647 = vadd.f32 %v3519, 1.0
        %v3648 = vadd.f32 %v3520, 1.0
        %v3649 = vadd.f32 %v3521, 1.0
        %v3650 = vadd.f32 %v3522, 1.0
        %v3651 = vadd.f32 %v3523, 1.0
        %v3652 = vadd.f32 %v3524, 1.0
        %v3653 = vadd.f32 %v3525, 1.0
        %v3654 = vadd.f32 %v3526, 1.0
        %v3655 = vadd.f32 %v3527, 1.0
        %v3656 = vadd.f32 %v3528, 1.0
        %v3657 = vadd.f32 %v3529, 1.0
        %v3658 = vadd.f32 %v3530, 1.0
        %v3659 = vadd.f32 %v3531, 1.0
        %v3660 = vadd.f32 %v3532, 1.0
        %v3661 = vadd.f32 %v3533, 1.0
        %v3662 = vadd.f32 %v3534, 1.0
        %v3663 = vadd.f32 %v3535, 1.0
        %v3664 = vadd.f32 %v3536, 1.0
        %v3665 = vadd.f32 %v3537, 1.0
        %v3666 = vadd.f32 %v3538, 1.0
        %v3667 = vadd.f32 %v3539, 1.0
        %v3668 = vadd.f32 %v3540, 1.0
        %v3669 = vadd.f32 %v3541, 1.0
        %v3670 = vadd.f32 %v3542, 1.0
        %v3671 = vadd.f32 %v3543, 1.0
        %v3672 = vadd.f32 %v3544, 1.0
        %v3673 = vadd.f32 %v3545, 1.0
        %v3674 = vadd.f32 %v3546, 1.0
        %v3675 = vadd.f32 %v3547, 1.0
        %v3676 = vadd.f32 %v3548, 1.0
        %v3677 = vadd.f32 %v3549, 1.0
        %v3678 = vadd.f32 %v3550, 1.0
        %v3679 = vadd.f32 %v3551, 1.0
        %v3680 = vadd.f32 %v3552, 1.0
        %v3681 = vadd.f32 %v3553, 1.0
        %v3682 = vadd.f32 %v3554, 1.0
        %v3683 = vadd.f32 %v3555, 1.0
        %v3684 = vadd.f32 %v3556, 1.0
        %v3685 = vadd.f32 %v3557, 1.0
        %v3686 = vadd.f32 %v3558, 1.0
        %v3687 = vadd.f32 %v3559, 1.0
        %v3688 = vadd.f32 %v3560, 1.0
        %v3689 = vadd.f32 %v3561, 1.0
        %v3690 = vadd.f32 %v3562, 1.0
        %v3691 = vadd.f32 %v3563, 1.0
        %v3692 = vadd.f32 %v3564, 1.0
        %v3693 = vadd.f32 %v3565, 1.0
        %v3694 = vadd.f32 %v3566, 1.0
        %v3695 = vadd.f32 %v3567, 1.0
        %v3696 = vadd.f32 %v3568, 1.0
        %v3697 = vadd.f32 %v3569, 1.0
        %v3698 = vadd.f32 %v3570, 1.0
        %v3699 = vadd.f32 %v3571, 1.0
        %v3700 = vadd.f32 %v3572, 1.0
        %v3701 = vadd.f32 %v3573, 1.0
        %v3702 = vadd.f32 %v3574, 1.0
        %v3703 = vadd.f32 %v3575, 1.0
        %v3704 = vadd.f32 %v3576, 1.0
        %v3705 = vadd.f32 %v3577, 1.0
        %v3706 = vadd.f32 %v3578, 1.0
        %v3707 = vadd.f32 %v3579, 1.0
        %v3708 = vadd.f32 %v3580, 1.0
        %v3709 = vadd.f32 %v3581, 1.0
        %v3710 = vadd.f32 %v3582, 1.0
        %v3711 = vadd.f32 %v3583, 1.0
        %v3712 = vadd.f32 %v3584, 1.0
        %v3713 = vadd.f32 %v3585, 1.0
        %v3714 = vadd.f32 %v3586, 1.0
        %v3715 = vadd.f32 %v3587, 1.0
        %v3716 = vadd.f32 %v3588, 1.0
        %v3717 = vadd.f32 %v3589, 1.0
        %v3718 = vadd.f32 %v3590, 1.0
        %v3719 = vadd.f32 %v3591, 1.0
        %v3720 = vadd.f32 %v3592, 1.0
        %v3721 = vadd.f32 %v3593, 1.0
        %v3722 = vadd.f32 %v3594, 1.0
        %v3723 = vadd.f32 %v3595, 1.0
        %v3724 = vadd.f32 %v3596, 1.0
        %v3725 = vadd.f32 %v3597, 1.0
        %v3726 = vadd.f32 %v3598, 1.0
        %v3727 = vadd.f32 %v3599, 1.0
        %v3728 = vadd.f32 %v3600, 1.0
        %v3729 = vadd.f32 %v3601, 1.0
        %v3730 = vadd.f32 %v3602, 1.0
        %v3731 = vmul.f32 %v2707, %v3603
        %v3732 = vmul.f32 %v2708, %v3604
        %v3733 = vmul.f32 %v2709, %v3605
        %v3734 = vmul.f32 %v2710, %v3606
        %v3735 = vmul.f32 %v2711, %v3607
        %v3736 = vmul.f32 %v2712, %v3608
        %v3737 = vmul.f32 %v2713, %v3609
        %v3738 = vmul.f32 %v2714, %v3610
        %v3739 = vmul.f32 %v2715, %v3611
        %v3740 = vmul.f32 %v2716, %v3612
        %v3741 = vmul.f32 %v2717, %v3613
        %v3742 = vmul.f32 %v2718, %v3614
        %v3743 = vmul.f32 %v2719, %v3615
        %v3744 = vmul.f32 %v2720, %v3616
        %v3745 = vmul.f32 %v2721, %v3617
        %v3746 = vmul.f32 %v2722, %v3618
        %v3747 = vmul.f32 %v2723, %v3619
        %v3748 = vmul.f32 %v2724, %v3620
        %v3749 = vmul.f32 %v2725, %v3621
        %v3750 = vmul.f32 %v2726, %v3622
        %v3751 = vmul.f32 %v2727, %v3623
        %v3752 = vmul.f32 %v2728, %v3624
        %v3753 = vmul.f32 %v2729, %v3625
        %v3754 = vmul.f32 %v2730, %v3626
        %v3755 = vmul.f32 %v2731, %v3627
        %v3756 = vmul.f32 %v2732, %v3628
        %v3757 = vmul.f32 %v2733, %v3629
        %v3758 = vmul.f32 %v2734, %v3630
        %v3759 = vmul.f32 %v2735, %v3631
        %v3760 = vmul.f32 %v2736, %v3632
        %v3761 = vmul.f32 %v2737, %v3633
        %v3762 = vmul.f32 %v2738, %v3634
        %v3763 = vmul.f32 %v2739, %v3635
        %v3764 = vmul.f32 %v2740, %v3636
        %v3765 = vmul.f32 %v2741, %v3637
        %v3766 = vmul.f32 %v2742, %v3638
        %v3767 = vmul.f32 %v2743, %v3639
        %v3768 = vmul.f32 %v2744, %v3640
        %v3769 = vmul.f32 %v2745, %v3641
        %v3770 = vmul.f32 %v2746, %v3642
        %v3771 = vmul.f32 %v2747, %v3643
        %v3772 = vmul.f32 %v2748, %v3644
        %v3773 = vmul.f32 %v2749, %v3645
        %v3774 = vmul.f32 %v2750, %v3646
        %v3775 = vmul.f32 %v2751, %v3647
        %v3776 = vmul.f32 %v2752, %v3648
        %v3777 = vmul.f32 %v2753, %v3649
        %v3778 = vmul.f32 %v2754, %v3650
        %v3779 = vmul.f32 %v2755, %v3651
        %v3780 = vmul.f32 %v2756, %v3652
        %v3781 = vmul.f32 %v2757, %v3653
        %v3782 = vmul.f32 %v2758, %v3654
        %v3783 = vmul.f32 %v2759, %v3655
        %v3784 = vmul.f32 %v2760, %v3656
        %v3785 = vmul.f32 %v2761, %v3657
        %v3786 = vmul.f32 %v2762, %v3658
        %v3787 = vmul.f32 %v2763, %v3659
        %v3788 = vmul.f32 %v2764, %v3660
        %v3789 = vmul.f32 %v2765, %v3661
        %v3790 = vmul.f32 %v2766, %v3662
        %v3791 = vmul.f32 %v2767, %v3663
        %v3792 = vmul.f32 %v2768, %v3664
        %v3793 = vmul.f32 %v2769, %v3665
        %v3794 = vmul.f32 %v2770, %v3666
        %v3795 = vmul.f32 %v2771, %v3667
        %v3796 = vmul.f32 %v2772, %v3668
        %v3797 = vmul.f32 %v2773, %v3669
        %v3798 = vmul.f32 %v2774, %v3670
        %v3799 = vmul.f32 %v2775, %v3671
        %v3800 = vmul.f32 %v2776, %v3672
        %v3801 = vmul.f32 %v2777, %v3673
        %v3802 = vmul.f32 %v2778, %v3674
        %v3803 = vmul.f32 %v2779, %v3675
        %v3804 = vmul.f32 %v2780, %v3676
        %v3805 = vmul.f32 %v2781, %v3677
        %v3806 = vmul.f32 %v2782, %v3678
        %v3807 = vmul.f32 %v2783, %v3679
        %v3808 = vmul.f32 %v2784, %v3680
        %v3809 = vmul.f32 %v2785, %v3681
        %v3810 = vmul.f32 %v2786, %v3682
        %v3811 = vmul.f32 %v2787, %v3683
        %v3812 = vmul.f32 %v2788, %v3684
        %v3813 = vmul.f32 %v2789, %v3685
        %v3814 = vmul.f32 %v2790, %v3686
        %v3815 = vmul.f32 %v2791, %v3687
        %v3816 = vmul.f32 %v2792, %v3688
        %v3817 = vmul.f32 %v2793, %v3689
        %v3818 = vmul.f32 %v2794, %v3690
        %v3819 = vmul.f32 %v2795, %v3691
        %v3820 = vmul.f32 %v2796, %v3692
        %v3821 = vmul.f32 %v2797, %v3693
        %v3822 = vmul.f32 %v2798, %v3694
        %v3823 = vmul.f32 %v2799, %v3695
        %v3824 = vmul.f32 %v2800, %v3696
        %v3825 = vmul.f32 %v2801, %v3697
        %v3826 = vmul.f32 %v2802, %v3698
        %v3827 = vmul.f32 %v2803, %v3699
        %v3828 = vmul.f32 %v2804, %v3700
        %v3829 = vmul.f32 %v2805, %v3701
        %v3830 = vmul.f32 %v2806, %v3702
        %v3831 = vmul.f32 %v2807, %v3703
        %v3832 = vmul.f32 %v2808, %v3704
        %v3833 = vmul.f32 %v2809, %v3705
        %v3834 = vmul.f32 %v2810, %v3706
        %v3835 = vmul.f32 %v2811, %v3707
        %v3836 = vmul.f32 %v2812, %v3708
        %v3837 = vmul.f32 %v2813, %v3709
        %v3838 = vmul.f32 %v2814, %v3710
        %v3839 = vmul.f32 %v2815, %v3711
        %v3840 = vmul.f32 %v2816, %v3712
        %v3841 = vmul.f32 %v2817, %v3713
        %v3842 = vmul.f32 %v2818, %v3714
        %v3843 = vmul.f32 %v2819, %v3715
        %v3844 = vmul.f32 %v2820, %v3716
        %v3845 = vmul.f32 %v2821, %v3717
        %v3846 = vmul.f32 %v2822, %v3718
        %v3847 = vmul.f32 %v2823, %v3719
        %v3848 = vmul.f32 %v2824, %v3720
        %v3849 = vmul.f32 %v2825, %v3721
        %v3850 = vmul.f32 %v2826, %v3722
        %v3851 = vmul.f32 %v2827, %v3723
        %v3852 = vmul.f32 %v2828, %v3724
        %v3853 = vmul.f32 %v2829, %v3725
        %v3854 = vmul.f32 %v2830, %v3726
        %v3855 = vmul.f32 %v2831, %v3727
        %v3856 = vmul.f32 %v2832, %v3728
        %v3857 = vmul.f32 %v2833, %v3729
        %v3858 = vmul.f32 %v2834, %v3730
        %v3859 = vpack.c.bf16 %v3747, %v3731
        %v3860 = vpack.c.bf16 %v3748, %v3732
        %v3861 = vpack.c.bf16 %v3749, %v3733
        %v3862 = vpack.c.bf16 %v3750, %v3734
        %v3863 = vpack.c.bf16 %v3751, %v3735
        %v3864 = vpack.c.bf16 %v3752, %v3736
        %v3865 = vpack.c.bf16 %v3753, %v3737
        %v3866 = vpack.c.bf16 %v3754, %v3738
        %v3867 = vpack.c.bf16 %v3755, %v3739
        %v3868 = vpack.c.bf16 %v3756, %v3740
        %v3869 = vpack.c.bf16 %v3757, %v3741
        %v3870 = vpack.c.bf16 %v3758, %v3742
        %v3871 = vpack.c.bf16 %v3759, %v3743
        %v3872 = vpack.c.bf16 %v3760, %v3744
        %v3873 = vpack.c.bf16 %v3761, %v3745
        %v3874 = vpack.c.bf16 %v3762, %v3746
        %v3875 = vpack.c.bf16 %v3779, %v3763
        %v3876 = vpack.c.bf16 %v3780, %v3764
        %v3877 = vpack.c.bf16 %v3781, %v3765
        %v3878 = vpack.c.bf16 %v3782, %v3766
        %v3879 = vpack.c.bf16 %v3783, %v3767
        %v3880 = vpack.c.bf16 %v3784, %v3768
        %v3881 = vpack.c.bf16 %v3785, %v3769
        %v3882 = vpack.c.bf16 %v3786, %v3770
        %v3883 = vpack.c.bf16 %v3787, %v3771
        %v3884 = vpack.c.bf16 %v3788, %v3772
        %v3885 = vpack.c.bf16 %v3789, %v3773
        %v3886 = vpack.c.bf16 %v3790, %v3774
        %v3887 = vpack.c.bf16 %v3791, %v3775
        %v3888 = vpack.c.bf16 %v3792, %v3776
        %v3889 = vpack.c.bf16 %v3793, %v3777
        %v3890 = vpack.c.bf16 %v3794, %v3778
        %v3891 = vpack.c.bf16 %v3811, %v3795
        %v3892 = vpack.c.bf16 %v3812, %v3796
        %v3893 = vpack.c.bf16 %v3813, %v3797
        %v3894 = vpack.c.bf16 %v3814, %v3798
        %v3895 = vpack.c.bf16 %v3815, %v3799
        %v3896 = vpack.c.bf16 %v3816, %v3800
        %v3897 = vpack.c.bf16 %v3817, %v3801
        %v3898 = vpack.c.bf16 %v3818, %v3802
        %v3899 = vpack.c.bf16 %v3819, %v3803
        %v3900 = vpack.c.bf16 %v3820, %v3804
        %v3901 = vpack.c.bf16 %v3821, %v3805
        %v3902 = vpack.c.bf16 %v3822, %v3806
        %v3903 = vpack.c.bf16 %v3823, %v3807
        %v3904 = vpack.c.bf16 %v3824, %v3808
        %v3905 = vpack.c.bf16 %v3825, %v3809
        %v3906 = vpack.c.bf16 %v3826, %v3810
        %v3907 = vpack.c.bf16 %v3843, %v3827
        %v3908 = vpack.c.bf16 %v3844, %v3828
        %v3909 = vpack.c.bf16 %v3845, %v3829
        %v3910 = vpack.c.bf16 %v3846, %v3830
        %v3911 = vpack.c.bf16 %v3847, %v3831
        %v3912 = vpack.c.bf16 %v3848, %v3832
        %v3913 = vpack.c.bf16 %v3849, %v3833
        %v3914 = vpack.c.bf16 %v3850, %v3834
        %v3915 = vpack.c.bf16 %v3851, %v3835
        %v3916 = vpack.c.bf16 %v3852, %v3836
        %v3917 = vpack.c.bf16 %v3853, %v3837
        %v3918 = vpack.c.bf16 %v3854, %v3838
        %v3919 = vpack.c.bf16 %v3855, %v3839
        %v3920 = vpack.c.bf16 %v3856, %v3840
        %v3921 = vpack.c.bf16 %v3857, %v3841
        %v3922 = vpack.c.bf16 %v3858, %v3842
        %v3923 = vld [vmem:[%s439] sm:$0xff]
        %v3924 = vld [vmem:[%s439 + $0x8] sm:$0xff]
        %v3925 = vld [vmem:[%s439 + $0x10] sm:$0xff]
        %v3926 = vld [vmem:[%s439 + $0x18] sm:$0xff]
        %v3927 = vld [vmem:[%s439 + $0x20] sm:$0xff]
        %v3928 = vld [vmem:[%s439 + $0x28] sm:$0xff]
        %v3929 = vld [vmem:[%s439 + $0x30] sm:$0xff]
        %v3930 = vld [vmem:[%s439 + $0x38] sm:$0xff]
        %v3931 = vld [vmem:[%s439 + $0x40] sm:$0xff]
        %v3932 = vld [vmem:[%s439 + $0x48] sm:$0xff]
        %v3933 = vld [vmem:[%s439 + $0x50] sm:$0xff]
        %v3934 = vld [vmem:[%s439 + $0x58] sm:$0xff]
        %v3935 = vld [vmem:[%s439 + $0x60] sm:$0xff]
        %v3936 = vld [vmem:[%s439 + $0x68] sm:$0xff]
        %v3937 = vld [vmem:[%s439 + $0x70] sm:$0xff]
        %v3938 = vld [vmem:[%s439 + $0x78] sm:$0xff]
        %v3939 = vld [vmem:[%s439 + $0x80] sm:$0xff]
        %v3940 = vld [vmem:[%s439 + $0x88] sm:$0xff]
        %v3941 = vld [vmem:[%s439 + $0x90] sm:$0xff]
        %v3942 = vld [vmem:[%s439 + $0x98] sm:$0xff]
        %v3943 = vld [vmem:[%s439 + $0xa0] sm:$0xff]
        %v3944 = vld [vmem:[%s439 + $0xa8] sm:$0xff]
        %v3945 = vld [vmem:[%s439 + $0xb0] sm:$0xff]
        %v3946 = vld [vmem:[%s439 + $0xb8] sm:$0xff]
        %v3947 = vld [vmem:[%s439 + $0xc0] sm:$0xff]
        %v3948 = vld [vmem:[%s439 + $0xc8] sm:$0xff]
        %v3949 = vld [vmem:[%s439 + $0xd0] sm:$0xff]
        %v3950 = vld [vmem:[%s439 + $0xd8] sm:$0xff]
        %v3951 = vld [vmem:[%s439 + $0xe0] sm:$0xff]
        %v3952 = vld [vmem:[%s439 + $0xe8] sm:$0xff]
        %v3953 = vld [vmem:[%s439 + $0xf0] sm:$0xff]
        %v3954 = vld [vmem:[%s439 + $0xf8] sm:$0xff]
        %v3955 = vld [vmem:[%s500 + $0x4] sm:$0x1]
        %v3956 = vperm.slane %v3955, 0
        %v3989 = vunpack.c.l.b16 %v3923
        %v3990 = vunpack.c.h.b16 %v3923
        %v3991 = vunpack.c.l.b16 %v3924
        %v3992 = vunpack.c.h.b16 %v3924
        %v3993 = vunpack.c.l.b16 %v3925
        %v3994 = vunpack.c.h.b16 %v3925
        %v3995 = vunpack.c.l.b16 %v3926
        %v3996 = vunpack.c.h.b16 %v3926
        %v3997 = vunpack.c.l.b16 %v3927
        %v3998 = vunpack.c.h.b16 %v3927
        %v3999 = vunpack.c.l.b16 %v3928
        %v4000 = vunpack.c.h.b16 %v3928
        %v4001 = vunpack.c.l.b16 %v3929
        %v4002 = vunpack.c.h.b16 %v3929
        %v4003 = vunpack.c.l.b16 %v3930
        %v4004 = vunpack.c.h.b16 %v3930
        %v4005 = vunpack.c.l.b16 %v3931
        %v4006 = vunpack.c.h.b16 %v3931
        %v4007 = vunpack.c.l.b16 %v3932
        %v4008 = vunpack.c.h.b16 %v3932
        %v4009 = vunpack.c.l.b16 %v3933
        %v4010 = vunpack.c.h.b16 %v3933
        %v4011 = vunpack.c.l.b16 %v3934
        %v4012 = vunpack.c.h.b16 %v3934
        %v4013 = vunpack.c.l.b16 %v3935
        %v4014 = vunpack.c.h.b16 %v3935
        %v4015 = vunpack.c.l.b16 %v3936
        %v4016 = vunpack.c.h.b16 %v3936
        %v4017 = vunpack.c.l.b16 %v3937
        %v4018 = vunpack.c.h.b16 %v3937
        %v4019 = vunpack.c.l.b16 %v3938
        %v4020 = vunpack.c.h.b16 %v3938
        %v4021 = vunpack.c.l.b16 %v3939
        %v4022 = vunpack.c.h.b16 %v3939
        %v4023 = vunpack.c.l.b16 %v3940
        %v4024 = vunpack.c.h.b16 %v3940
        %v4025 = vunpack.c.l.b16 %v3941
        %v4026 = vunpack.c.h.b16 %v3941
        %v4027 = vunpack.c.l.b16 %v3942
        %v4028 = vunpack.c.h.b16 %v3942
        %v4029 = vunpack.c.l.b16 %v3943
        %v4030 = vunpack.c.h.b16 %v3943
        %v4031 = vunpack.c.l.b16 %v3944
        %v4032 = vunpack.c.h.b16 %v3944
        %v4033 = vunpack.c.l.b16 %v3945
        %v4034 = vunpack.c.h.b16 %v3945
        %v4035 = vunpack.c.l.b16 %v3946
        %v4036 = vunpack.c.h.b16 %v3946
        %v4037 = vunpack.c.l.b16 %v3947
        %v4038 = vunpack.c.h.b16 %v3947
        %v4039 = vunpack.c.l.b16 %v3948
        %v4040 = vunpack.c.h.b16 %v3948
        %v4041 = vunpack.c.l.b16 %v3949
        %v4042 = vunpack.c.h.b16 %v3949
        %v4043 = vunpack.c.l.b16 %v3950
        %v4044 = vunpack.c.h.b16 %v3950
        %v4045 = vunpack.c.l.b16 %v3951
        %v4046 = vunpack.c.h.b16 %v3951
        %v4047 = vunpack.c.l.b16 %v3952
        %v4048 = vunpack.c.h.b16 %v3952
        %v4049 = vunpack.c.l.b16 %v3953
        %v4050 = vunpack.c.h.b16 %v3953
        %v4051 = vunpack.c.l.b16 %v3954
        %v4052 = vunpack.c.h.b16 %v3954
        %v4053 = vpack.c.b16 %v4005, %v3989
        %v4054 = vpack.c.b16 %v4006, %v3990
        %v4055 = vpack.c.b16 %v4007, %v3991
        %v4056 = vpack.c.b16 %v4008, %v3992
        %v4057 = vpack.c.b16 %v4009, %v3993
        %v4058 = vpack.c.b16 %v4010, %v3994
        %v4059 = vpack.c.b16 %v4011, %v3995
        %v4060 = vpack.c.b16 %v4012, %v3996
        %v4061 = vpack.c.b16 %v4013, %v3997
        %v4062 = vpack.c.b16 %v4014, %v3998
        %v4063 = vpack.c.b16 %v4015, %v3999
        %v4064 = vpack.c.b16 %v4016, %v4000
        %v4065 = vpack.c.b16 %v4017, %v4001
        %v4066 = vpack.c.b16 %v4018, %v4002
        %v4067 = vpack.c.b16 %v4019, %v4003
        %v4068 = vpack.c.b16 %v4020, %v4004
        %v4069 = vpack.c.b16 %v4037, %v4021
        %v4070 = vpack.c.b16 %v4038, %v4022
        %v4071 = vpack.c.b16 %v4039, %v4023
        %v4072 = vpack.c.b16 %v4040, %v4024
        %v4073 = vpack.c.b16 %v4041, %v4025
        %v4074 = vpack.c.b16 %v4042, %v4026
        %v4075 = vpack.c.b16 %v4043, %v4027
        %v4076 = vpack.c.b16 %v4044, %v4028
        %v4077 = vpack.c.b16 %v4045, %v4029
        %v4078 = vpack.c.b16 %v4046, %v4030
        %v4079 = vpack.c.b16 %v4047, %v4031
        %v4080 = vpack.c.b16 %v4048, %v4032
        %v4081 = vpack.c.b16 %v4049, %v4033
        %v4082 = vpack.c.b16 %v4050, %v4034
        %v4083 = vpack.c.b16 %v4051, %v4035
        %v4084 = vpack.c.b16 %v4052, %v4036
        %4117 = vmatpush.bf16.xpose.msra.mxu0 0
        %4118 = vmatpush.bf16.xpose.msra.mxu0 0
        %4119 = vmatpush.bf16.xpose.msra.mxu0 0
        %4120 = vmatpush.bf16.xpose.msra.mxu0 0
        %4121 = vmatpush.bf16.xpose.msra.mxu0 0
        %4122 = vmatpush.bf16.xpose.msra.mxu0 0
        %4123 = vmatpush.bf16.xpose.msra.mxu0 %v4069
        %4124 = vmatpush.bf16.xpose.msra.mxu0 %v4053
        %4125 = vmatmul.bf16.gmra.mxu0 %v3859
        %v4126 = vpop.f32.mrf.mxu0
        %v4127 = vadd.f32 %v3956, %v4126
        %v4128 = vpop.f32.mrf.mxu0
        %v4129 = vadd.f32 %v3956, %v4128
        %4130 = vmatmul.bf16.gmra.mxu0 %v3875
        %v4131 = vpop.f32.mrf.mxu0
        %v4132 = vadd.f32 %v3956, %v4131
        %v4133 = vpop.f32.mrf.mxu0
        %v4134 = vadd.f32 %v3956, %v4133
        %4135 = vmatmul.bf16.gmra.mxu0 %v3891
        %v4136 = vpop.f32.mrf.mxu0
        %v4137 = vadd.f32 %v3956, %v4136
        %v4138 = vpop.f32.mrf.mxu0
        %v4139 = vadd.f32 %v3956, %v4138
        %4140 = vmatmul.bf16.gmra.mxu0 %v3907
        %v4141 = vpop.f32.mrf.mxu0
        %v4142 = vadd.f32 %v3956, %v4141
        %v4143 = vpop.f32.mrf.mxu0
        %v4144 = vadd.f32 %v3956, %v4143
        %4145 = vdwg.mxu0
        %4146 = vmatpush.bf16.xpose.msra.mxu0 0
        %4147 = vmatpush.bf16.xpose.msra.mxu0 0
        %4148 = vmatpush.bf16.xpose.msra.mxu0 0
        %4149 = vmatpush.bf16.xpose.msra.mxu0 0
        %4150 = vmatpush.bf16.xpose.msra.mxu0 0
        %4151 = vmatpush.bf16.xpose.msra.mxu0 0
        %4152 = vmatpush.bf16.xpose.msra.mxu0 %v4070
        %4153 = vmatpush.bf16.xpose.msra.mxu0 %v4054
        %4154 = vmatmul.bf16.gmra.mxu0 %v3860
        %v4155 = vpop.f32.mrf.mxu0
        %v4156 = vadd.f32 %v4127, %v4155
        %v4157 = vpop.f32.mrf.mxu0
        %v4158 = vadd.f32 %v4129, %v4157
        %4159 = vmatmul.bf16.gmra.mxu0 %v3876
        %v4160 = vpop.f32.mrf.mxu0
        %v4161 = vadd.f32 %v4132, %v4160
        %v4162 = vpop.f32.mrf.mxu0
        %v4163 = vadd.f32 %v4134, %v4162
        %4164 = vmatmul.bf16.gmra.mxu0 %v3892
        %v4165 = vpop.f32.mrf.mxu0
        %v4166 = vadd.f32 %v4137, %v4165
        %v4167 = vpop.f32.mrf.mxu0
        %v4168 = vadd.f32 %v4139, %v4167
        %4169 = vmatmul.bf16.gmra.mxu0 %v3908
        %v4170 = vpop.f32.mrf.mxu0
        %v4171 = vadd.f32 %v4142, %v4170
        %v4172 = vpop.f32.mrf.mxu0
        %v4173 = vadd.f32 %v4144, %v4172
        %4174 = vdwg.mxu0
        %4175 = vmatpush.bf16.xpose.msra.mxu0 0
        %4176 = vmatpush.bf16.xpose.msra.mxu0 0
        %4177 = vmatpush.bf16.xpose.msra.mxu0 0
        %4178 = vmatpush.bf16.xpose.msra.mxu0 0
        %4179 = vmatpush.bf16.xpose.msra.mxu0 0
        %4180 = vmatpush.bf16.xpose.msra.mxu0 0
        %4181 = vmatpush.bf16.xpose.msra.mxu0 %v4071
        %4182 = vmatpush.bf16.xpose.msra.mxu0 %v4055
        %4183 = vmatmul.bf16.gmra.mxu0 %v3861
        %v4184 = vpop.f32.mrf.mxu0
        %v4185 = vadd.f32 %v4156, %v4184
        %v4186 = vpop.f32.mrf.mxu0
        %v4187 = vadd.f32 %v4158, %v4186
        %4188 = vmatmul.bf16.gmra.mxu0 %v3877
        %v4189 = vpop.f32.mrf.mxu0
        %v4190 = vadd.f32 %v4161, %v4189
        %v4191 = vpop.f32.mrf.mxu0
        %v4192 = vadd.f32 %v4163, %v4191
        %4193 = vmatmul.bf16.gmra.mxu0 %v3893
        %v4194 = vpop.f32.mrf.mxu0
        %v4195 = vadd.f32 %v4166, %v4194
        %v4196 = vpop.f32.mrf.mxu0
        %v4197 = vadd.f32 %v4168, %v4196
        %4198 = vmatmul.bf16.gmra.mxu0 %v3909
        %v4199 = vpop.f32.mrf.mxu0
        %v4200 = vadd.f32 %v4171, %v4199
        %v4201 = vpop.f32.mrf.mxu0
        %v4202 = vadd.f32 %v4173, %v4201
        %4203 = vdwg.mxu0
        %4204 = vmatpush.bf16.xpose.msra.mxu0 0
        %4205 = vmatpush.bf16.xpose.msra.mxu0 0
        %4206 = vmatpush.bf16.xpose.msra.mxu0 0
        %4207 = vmatpush.bf16.xpose.msra.mxu0 0
        %4208 = vmatpush.bf16.xpose.msra.mxu0 0
        %4209 = vmatpush.bf16.xpose.msra.mxu0 0
        %4210 = vmatpush.bf16.xpose.msra.mxu0 %v4072
        %4211 = vmatpush.bf16.xpose.msra.mxu0 %v4056
        %4212 = vmatmul.bf16.gmra.mxu0 %v3862
        %v4213 = vpop.f32.mrf.mxu0
        %v4214 = vadd.f32 %v4185, %v4213
        %v4215 = vpop.f32.mrf.mxu0
        %v4216 = vadd.f32 %v4187, %v4215
        %4217 = vmatmul.bf16.gmra.mxu0 %v3878
        %v4218 = vpop.f32.mrf.mxu0
        %v4219 = vadd.f32 %v4190, %v4218
        %v4220 = vpop.f32.mrf.mxu0
        %v4221 = vadd.f32 %v4192, %v4220
        %4222 = vmatmul.bf16.gmra.mxu0 %v3894
        %v4223 = vpop.f32.mrf.mxu0
        %v4224 = vadd.f32 %v4195, %v4223
        %v4225 = vpop.f32.mrf.mxu0
        %v4226 = vadd.f32 %v4197, %v4225
        %4227 = vmatmul.bf16.gmra.mxu0 %v3910
        %v4228 = vpop.f32.mrf.mxu0
        %v4229 = vadd.f32 %v4200, %v4228
        %v4230 = vpop.f32.mrf.mxu0
        %v4231 = vadd.f32 %v4202, %v4230
        %4232 = vdwg.mxu0
        %4233 = vmatpush.bf16.xpose.msra.mxu0 0
        %4234 = vmatpush.bf16.xpose.msra.mxu0 0
        %4235 = vmatpush.bf16.xpose.msra.mxu0 0
        %4236 = vmatpush.bf16.xpose.msra.mxu0 0
        %4237 = vmatpush.bf16.xpose.msra.mxu0 0
        %4238 = vmatpush.bf16.xpose.msra.mxu0 0
        %4239 = vmatpush.bf16.xpose.msra.mxu0 %v4073
        %4240 = vmatpush.bf16.xpose.msra.mxu0 %v4057
        %4241 = vmatmul.bf16.gmra.mxu0 %v3863
        %v4242 = vpop.f32.mrf.mxu0
        %v4243 = vadd.f32 %v4214, %v4242
        %v4244 = vpop.f32.mrf.mxu0
        %v4245 = vadd.f32 %v4216, %v4244
        %4246 = vmatmul.bf16.gmra.mxu0 %v3879
        %v4247 = vpop.f32.mrf.mxu0
        %v4248 = vadd.f32 %v4219, %v4247
        %v4249 = vpop.f32.mrf.mxu0
        %v4250 = vadd.f32 %v4221, %v4249
        %4251 = vmatmul.bf16.gmra.mxu0 %v3895
        %v4252 = vpop.f32.mrf.mxu0
        %v4253 = vadd.f32 %v4224, %v4252
        %v4254 = vpop.f32.mrf.mxu0
        %v4255 = vadd.f32 %v4226, %v4254
        %4256 = vmatmul.bf16.gmra.mxu0 %v3911
        %v4257 = vpop.f32.mrf.mxu0
        %v4258 = vadd.f32 %v4229, %v4257
        %v4259 = vpop.f32.mrf.mxu0
        %v4260 = vadd.f32 %v4231, %v4259
        %4261 = vdwg.mxu0
        %4262 = vmatpush.bf16.xpose.msra.mxu0 0
        %4263 = vmatpush.bf16.xpose.msra.mxu0 0
        %4264 = vmatpush.bf16.xpose.msra.mxu0 0
        %4265 = vmatpush.bf16.xpose.msra.mxu0 0
        %4266 = vmatpush.bf16.xpose.msra.mxu0 0
        %4267 = vmatpush.bf16.xpose.msra.mxu0 0
        %4268 = vmatpush.bf16.xpose.msra.mxu0 %v4074
        %4269 = vmatpush.bf16.xpose.msra.mxu0 %v4058
        %4270 = vmatmul.bf16.gmra.mxu0 %v3864
        %v4271 = vpop.f32.mrf.mxu0
        %v4272 = vadd.f32 %v4243, %v4271
        %v4273 = vpop.f32.mrf.mxu0
        %v4274 = vadd.f32 %v4245, %v4273
        %4275 = vmatmul.bf16.gmra.mxu0 %v3880
        %v4276 = vpop.f32.mrf.mxu0
        %v4277 = vadd.f32 %v4248, %v4276
        %v4278 = vpop.f32.mrf.mxu0
        %v4279 = vadd.f32 %v4250, %v4278
        %4280 = vmatmul.bf16.gmra.mxu0 %v3896
        %v4281 = vpop.f32.mrf.mxu0
        %v4282 = vadd.f32 %v4253, %v4281
        %v4283 = vpop.f32.mrf.mxu0
        %v4284 = vadd.f32 %v4255, %v4283
        %4285 = vmatmul.bf16.gmra.mxu0 %v3912
        %v4286 = vpop.f32.mrf.mxu0
        %v4287 = vadd.f32 %v4258, %v4286
        %v4288 = vpop.f32.mrf.mxu0
        %v4289 = vadd.f32 %v4260, %v4288
        %4290 = vdwg.mxu0
        %4291 = vmatpush.bf16.xpose.msra.mxu0 0
        %4292 = vmatpush.bf16.xpose.msra.mxu0 0
        %4293 = vmatpush.bf16.xpose.msra.mxu0 0
        %4294 = vmatpush.bf16.xpose.msra.mxu0 0
        %4295 = vmatpush.bf16.xpose.msra.mxu0 0
        %4296 = vmatpush.bf16.xpose.msra.mxu0 0
        %4297 = vmatpush.bf16.xpose.msra.mxu0 %v4075
        %4298 = vmatpush.bf16.xpose.msra.mxu0 %v4059
        %4299 = vmatmul.bf16.gmra.mxu0 %v3865
        %v4300 = vpop.f32.mrf.mxu0
        %v4301 = vadd.f32 %v4272, %v4300
        %v4302 = vpop.f32.mrf.mxu0
        %v4303 = vadd.f32 %v4274, %v4302
        %4304 = vmatmul.bf16.gmra.mxu0 %v3881
        %v4305 = vpop.f32.mrf.mxu0
        %v4306 = vadd.f32 %v4277, %v4305
        %v4307 = vpop.f32.mrf.mxu0
        %v4308 = vadd.f32 %v4279, %v4307
        %4309 = vmatmul.bf16.gmra.mxu0 %v3897
        %v4310 = vpop.f32.mrf.mxu0
        %v4311 = vadd.f32 %v4282, %v4310
        %v4312 = vpop.f32.mrf.mxu0
        %v4313 = vadd.f32 %v4284, %v4312
        %4314 = vmatmul.bf16.gmra.mxu0 %v3913
        %v4315 = vpop.f32.mrf.mxu0
        %v4316 = vadd.f32 %v4287, %v4315
        %v4317 = vpop.f32.mrf.mxu0
        %v4318 = vadd.f32 %v4289, %v4317
        %4319 = vdwg.mxu0
        %4320 = vmatpush.bf16.xpose.msra.mxu0 0
        %4321 = vmatpush.bf16.xpose.msra.mxu0 0
        %4322 = vmatpush.bf16.xpose.msra.mxu0 0
        %4323 = vmatpush.bf16.xpose.msra.mxu0 0
        %4324 = vmatpush.bf16.xpose.msra.mxu0 0
        %4325 = vmatpush.bf16.xpose.msra.mxu0 0
        %4326 = vmatpush.bf16.xpose.msra.mxu0 %v4076
        %4327 = vmatpush.bf16.xpose.msra.mxu0 %v4060
        %4328 = vmatmul.bf16.gmra.mxu0 %v3866
        %v4329 = vpop.f32.mrf.mxu0
        %v4330 = vadd.f32 %v4301, %v4329
        %v4331 = vpop.f32.mrf.mxu0
        %v4332 = vadd.f32 %v4303, %v4331
        %4333 = vmatmul.bf16.gmra.mxu0 %v3882
        %v4334 = vpop.f32.mrf.mxu0
        %v4335 = vadd.f32 %v4306, %v4334
        %v4336 = vpop.f32.mrf.mxu0
        %v4337 = vadd.f32 %v4308, %v4336
        %4338 = vmatmul.bf16.gmra.mxu0 %v3898
        %v4339 = vpop.f32.mrf.mxu0
        %v4340 = vadd.f32 %v4311, %v4339
        %v4341 = vpop.f32.mrf.mxu0
        %v4342 = vadd.f32 %v4313, %v4341
        %4343 = vmatmul.bf16.gmra.mxu0 %v3914
        %v4344 = vpop.f32.mrf.mxu0
        %v4345 = vadd.f32 %v4316, %v4344
        %v4346 = vpop.f32.mrf.mxu0
        %v4347 = vadd.f32 %v4318, %v4346
        %4348 = vdwg.mxu0
        %4349 = vmatpush.bf16.xpose.msra.mxu0 0
        %4350 = vmatpush.bf16.xpose.msra.mxu0 0
        %4351 = vmatpush.bf16.xpose.msra.mxu0 0
        %4352 = vmatpush.bf16.xpose.msra.mxu0 0
        %4353 = vmatpush.bf16.xpose.msra.mxu0 0
        %4354 = vmatpush.bf16.xpose.msra.mxu0 0
        %4355 = vmatpush.bf16.xpose.msra.mxu0 %v4077
        %4356 = vmatpush.bf16.xpose.msra.mxu0 %v4061
        %4357 = vmatmul.bf16.gmra.mxu0 %v3867
        %v4358 = vpop.f32.mrf.mxu0
        %v4359 = vadd.f32 %v4330, %v4358
        %v4360 = vpop.f32.mrf.mxu0
        %v4361 = vadd.f32 %v4332, %v4360
        %4362 = vmatmul.bf16.gmra.mxu0 %v3883
        %v4363 = vpop.f32.mrf.mxu0
        %v4364 = vadd.f32 %v4335, %v4363
        %v4365 = vpop.f32.mrf.mxu0
        %v4366 = vadd.f32 %v4337, %v4365
        %4367 = vmatmul.bf16.gmra.mxu0 %v3899
        %v4368 = vpop.f32.mrf.mxu0
        %v4369 = vadd.f32 %v4340, %v4368
        %v4370 = vpop.f32.mrf.mxu0
        %v4371 = vadd.f32 %v4342, %v4370
        %4372 = vmatmul.bf16.gmra.mxu0 %v3915
        %v4373 = vpop.f32.mrf.mxu0
        %v4374 = vadd.f32 %v4345, %v4373
        %v4375 = vpop.f32.mrf.mxu0
        %v4376 = vadd.f32 %v4347, %v4375
        %4377 = vdwg.mxu0
        %4378 = vmatpush.bf16.xpose.msra.mxu0 0
        %4379 = vmatpush.bf16.xpose.msra.mxu0 0
        %4380 = vmatpush.bf16.xpose.msra.mxu0 0
        %4381 = vmatpush.bf16.xpose.msra.mxu0 0
        %4382 = vmatpush.bf16.xpose.msra.mxu0 0
        %4383 = vmatpush.bf16.xpose.msra.mxu0 0
        %4384 = vmatpush.bf16.xpose.msra.mxu0 %v4078
        %4385 = vmatpush.bf16.xpose.msra.mxu0 %v4062
        %4386 = vmatmul.bf16.gmra.mxu0 %v3868
        %v4387 = vpop.f32.mrf.mxu0
        %v4388 = vadd.f32 %v4359, %v4387
        %v4389 = vpop.f32.mrf.mxu0
        %v4390 = vadd.f32 %v4361, %v4389
        %4391 = vmatmul.bf16.gmra.mxu0 %v3884
        %v4392 = vpop.f32.mrf.mxu0
        %v4393 = vadd.f32 %v4364, %v4392
        %v4394 = vpop.f32.mrf.mxu0
        %v4395 = vadd.f32 %v4366, %v4394
        %4396 = vmatmul.bf16.gmra.mxu0 %v3900
        %v4397 = vpop.f32.mrf.mxu0
        %v4398 = vadd.f32 %v4369, %v4397
        %v4399 = vpop.f32.mrf.mxu0
        %v4400 = vadd.f32 %v4371, %v4399
        %4401 = vmatmul.bf16.gmra.mxu0 %v3916
        %v4402 = vpop.f32.mrf.mxu0
        %v4403 = vadd.f32 %v4374, %v4402
        %v4404 = vpop.f32.mrf.mxu0
        %v4405 = vadd.f32 %v4376, %v4404
        %4406 = vdwg.mxu0
        %4407 = vmatpush.bf16.xpose.msra.mxu0 0
        %4408 = vmatpush.bf16.xpose.msra.mxu0 0
        %4409 = vmatpush.bf16.xpose.msra.mxu0 0
        %4410 = vmatpush.bf16.xpose.msra.mxu0 0
        %4411 = vmatpush.bf16.xpose.msra.mxu0 0
        %4412 = vmatpush.bf16.xpose.msra.mxu0 0
        %4413 = vmatpush.bf16.xpose.msra.mxu0 %v4079
        %4414 = vmatpush.bf16.xpose.msra.mxu0 %v4063
        %4415 = vmatmul.bf16.gmra.mxu0 %v3869
        %v4416 = vpop.f32.mrf.mxu0
        %v4417 = vadd.f32 %v4388, %v4416
        %v4418 = vpop.f32.mrf.mxu0
        %v4419 = vadd.f32 %v4390, %v4418
        %4420 = vmatmul.bf16.gmra.mxu0 %v3885
        %v4421 = vpop.f32.mrf.mxu0
        %v4422 = vadd.f32 %v4393, %v4421
        %v4423 = vpop.f32.mrf.mxu0
        %v4424 = vadd.f32 %v4395, %v4423
        %4425 = vmatmul.bf16.gmra.mxu0 %v3901
        %v4426 = vpop.f32.mrf.mxu0
        %v4427 = vadd.f32 %v4398, %v4426
        %v4428 = vpop.f32.mrf.mxu0
        %v4429 = vadd.f32 %v4400, %v4428
        %4430 = vmatmul.bf16.gmra.mxu0 %v3917
        %v4431 = vpop.f32.mrf.mxu0
        %v4432 = vadd.f32 %v4403, %v4431
        %v4433 = vpop.f32.mrf.mxu0
        %v4434 = vadd.f32 %v4405, %v4433
        %4435 = vdwg.mxu0
        %4436 = vmatpush.bf16.xpose.msra.mxu0 0
        %4437 = vmatpush.bf16.xpose.msra.mxu0 0
        %4438 = vmatpush.bf16.xpose.msra.mxu0 0
        %4439 = vmatpush.bf16.xpose.msra.mxu0 0
        %4440 = vmatpush.bf16.xpose.msra.mxu0 0
        %4441 = vmatpush.bf16.xpose.msra.mxu0 0
        %4442 = vmatpush.bf16.xpose.msra.mxu0 %v4080
        %4443 = vmatpush.bf16.xpose.msra.mxu0 %v4064
        %4444 = vmatmul.bf16.gmra.mxu0 %v3870
        %v4445 = vpop.f32.mrf.mxu0
        %v4446 = vadd.f32 %v4417, %v4445
        %v4447 = vpop.f32.mrf.mxu0
        %v4448 = vadd.f32 %v4419, %v4447
        %4449 = vmatmul.bf16.gmra.mxu0 %v3886
        %v4450 = vpop.f32.mrf.mxu0
        %v4451 = vadd.f32 %v4422, %v4450
        %v4452 = vpop.f32.mrf.mxu0
        %v4453 = vadd.f32 %v4424, %v4452
        %4454 = vmatmul.bf16.gmra.mxu0 %v3902
        %v4455 = vpop.f32.mrf.mxu0
        %v4456 = vadd.f32 %v4427, %v4455
        %v4457 = vpop.f32.mrf.mxu0
        %v4458 = vadd.f32 %v4429, %v4457
        %4459 = vmatmul.bf16.gmra.mxu0 %v3918
        %v4460 = vpop.f32.mrf.mxu0
        %v4461 = vadd.f32 %v4432, %v4460
        %v4462 = vpop.f32.mrf.mxu0
        %v4463 = vadd.f32 %v4434, %v4462
        %4464 = vdwg.mxu0
        %4465 = vmatpush.bf16.xpose.msra.mxu0 0
        %4466 = vmatpush.bf16.xpose.msra.mxu0 0
        %4467 = vmatpush.bf16.xpose.msra.mxu0 0
        %4468 = vmatpush.bf16.xpose.msra.mxu0 0
        %4469 = vmatpush.bf16.xpose.msra.mxu0 0
        %4470 = vmatpush.bf16.xpose.msra.mxu0 0
        %4471 = vmatpush.bf16.xpose.msra.mxu0 %v4081
        %4472 = vmatpush.bf16.xpose.msra.mxu0 %v4065
        %4473 = vmatmul.bf16.gmra.mxu0 %v3871
        %v4474 = vpop.f32.mrf.mxu0
        %v4475 = vadd.f32 %v4446, %v4474
        %v4476 = vpop.f32.mrf.mxu0
        %v4477 = vadd.f32 %v4448, %v4476
        %4478 = vmatmul.bf16.gmra.mxu0 %v3887
        %v4479 = vpop.f32.mrf.mxu0
        %v4480 = vadd.f32 %v4451, %v4479
        %v4481 = vpop.f32.mrf.mxu0
        %v4482 = vadd.f32 %v4453, %v4481
        %4483 = vmatmul.bf16.gmra.mxu0 %v3903
        %v4484 = vpop.f32.mrf.mxu0
        %v4485 = vadd.f32 %v4456, %v4484
        %v4486 = vpop.f32.mrf.mxu0
        %v4487 = vadd.f32 %v4458, %v4486
        %4488 = vmatmul.bf16.gmra.mxu0 %v3919
        %v4489 = vpop.f32.mrf.mxu0
        %v4490 = vadd.f32 %v4461, %v4489
        %v4491 = vpop.f32.mrf.mxu0
        %v4492 = vadd.f32 %v4463, %v4491
        %4493 = vdwg.mxu0
        %4494 = vmatpush.bf16.xpose.msra.mxu0 0
        %4495 = vmatpush.bf16.xpose.msra.mxu0 0
        %4496 = vmatpush.bf16.xpose.msra.mxu0 0
        %4497 = vmatpush.bf16.xpose.msra.mxu0 0
        %4498 = vmatpush.bf16.xpose.msra.mxu0 0
        %4499 = vmatpush.bf16.xpose.msra.mxu0 0
        %4500 = vmatpush.bf16.xpose.msra.mxu0 %v4082
        %4501 = vmatpush.bf16.xpose.msra.mxu0 %v4066
        %4502 = vmatmul.bf16.gmra.mxu0 %v3872
        %v4503 = vpop.f32.mrf.mxu0
        %v4504 = vadd.f32 %v4475, %v4503
        %v4505 = vpop.f32.mrf.mxu0
        %v4506 = vadd.f32 %v4477, %v4505
        %4507 = vmatmul.bf16.gmra.mxu0 %v3888
        %v4508 = vpop.f32.mrf.mxu0
        %v4509 = vadd.f32 %v4480, %v4508
        %v4510 = vpop.f32.mrf.mxu0
        %v4511 = vadd.f32 %v4482, %v4510
        %4512 = vmatmul.bf16.gmra.mxu0 %v3904
        %v4513 = vpop.f32.mrf.mxu0
        %v4514 = vadd.f32 %v4485, %v4513
        %v4515 = vpop.f32.mrf.mxu0
        %v4516 = vadd.f32 %v4487, %v4515
        %4517 = vmatmul.bf16.gmra.mxu0 %v3920
        %v4518 = vpop.f32.mrf.mxu0
        %v4519 = vadd.f32 %v4490, %v4518
        %v4520 = vpop.f32.mrf.mxu0
        %v4521 = vadd.f32 %v4492, %v4520
        %4522 = vdwg.mxu0
        %4523 = vmatpush.bf16.xpose.msra.mxu0 0
        %4524 = vmatpush.bf16.xpose.msra.mxu0 0
        %4525 = vmatpush.bf16.xpose.msra.mxu0 0
        %4526 = vmatpush.bf16.xpose.msra.mxu0 0
        %4527 = vmatpush.bf16.xpose.msra.mxu0 0
        %4528 = vmatpush.bf16.xpose.msra.mxu0 0
        %4529 = vmatpush.bf16.xpose.msra.mxu0 %v4083
        %4530 = vmatpush.bf16.xpose.msra.mxu0 %v4067
        %4531 = vmatmul.bf16.gmra.mxu0 %v3873
        %v4532 = vpop.f32.mrf.mxu0
        %v4533 = vadd.f32 %v4504, %v4532
        %v4534 = vpop.f32.mrf.mxu0
        %v4535 = vadd.f32 %v4506, %v4534
        %4536 = vmatmul.bf16.gmra.mxu0 %v3889
        %v4537 = vpop.f32.mrf.mxu0
        %v4538 = vadd.f32 %v4509, %v4537
        %v4539 = vpop.f32.mrf.mxu0
        %v4540 = vadd.f32 %v4511, %v4539
        %4541 = vmatmul.bf16.gmra.mxu0 %v3905
        %v4542 = vpop.f32.mrf.mxu0
        %v4543 = vadd.f32 %v4514, %v4542
        %v4544 = vpop.f32.mrf.mxu0
        %v4545 = vadd.f32 %v4516, %v4544
        %4546 = vmatmul.bf16.gmra.mxu0 %v3921
        %v4547 = vpop.f32.mrf.mxu0
        %v4548 = vadd.f32 %v4519, %v4547
        %v4549 = vpop.f32.mrf.mxu0
        %v4550 = vadd.f32 %v4521, %v4549
        %4551 = vdwg.mxu0
        %4552 = vmatpush.bf16.xpose.msra.mxu0 0
        %4553 = vmatpush.bf16.xpose.msra.mxu0 0
        %4554 = vmatpush.bf16.xpose.msra.mxu0 0
        %4555 = vmatpush.bf16.xpose.msra.mxu0 0
        %4556 = vmatpush.bf16.xpose.msra.mxu0 0
        %4557 = vmatpush.bf16.xpose.msra.mxu0 0
        %4558 = vmatpush.bf16.xpose.msra.mxu0 %v4084
        %4559 = vmatpush.bf16.xpose.msra.mxu0 %v4068
        %4560 = vmatmul.bf16.gmra.mxu0 %v3874
        %v4561 = vpop.f32.mrf.mxu0
        %v4562 = vadd.f32 %v4533, %v4561
        %v4563 = vpop.f32.mrf.mxu0
        %v4564 = vadd.f32 %v4535, %v4563
        %4565 = vmatmul.bf16.gmra.mxu0 %v3890
        %v4566 = vpop.f32.mrf.mxu0
        %v4567 = vadd.f32 %v4538, %v4566
        %v4568 = vpop.f32.mrf.mxu0
        %v4569 = vadd.f32 %v4540, %v4568
        %4570 = vmatmul.bf16.gmra.mxu0 %v3906
        %v4571 = vpop.f32.mrf.mxu0
        %v4572 = vadd.f32 %v4543, %v4571
        %v4573 = vpop.f32.mrf.mxu0
        %v4574 = vadd.f32 %v4545, %v4573
        %4575 = vmatmul.bf16.gmra.mxu0 %v3922
        %v4576 = vpop.f32.mrf.mxu0
        %v4577 = vadd.f32 %v4548, %v4576
        %v4578 = vpop.f32.mrf.mxu0
        %v4579 = vadd.f32 %v4550, %v4578
        %4580 = vdwg.mxu0
        %v4581 = vadd.f32 %v1795, %v4562
        %v4582 = vadd.f32 %v1796, %v4564
        %v4583 = vadd.f32 %v1797, %v4567
        %v4584 = vadd.f32 %v1798, %v4569
        %v4585 = vadd.f32 %v1799, %v4572
        %v4586 = vadd.f32 %v1800, %v4574
        %v4587 = vadd.f32 %v1801, %v4577
        %v4588 = vadd.f32 %v1802, %v4579
        %p4589 = scmp.ne.s32.totalorder %s31, 3
        // Predicated region
        $region77: #{transformer_blocks_forward.1} parent=51 // pred_check
          %p4590 = pneg %p4589
        $region78: #{transformer_blocks_forward.1} parent=51 // pred_check_branch
          %4592 = sbr.rel (%p4590) target = $region80
        $region79: #{transformer_blocks_forward.1} parent=51 // pred_region
          %4593 = vst.msk [vmem:[#allocation2] sm:$0xff] %vm757, %v4581
          %4594 = vst.msk [vmem:[#allocation2 + $0x8] sm:$0xff] %vm757, %v4582
          %4595 = vst.msk [vmem:[#allocation2 + $0x10] sm:$0xff] %vm757, %v4583
          %4596 = vst.msk [vmem:[#allocation2 + $0x18] sm:$0xff] %vm757, %v4584
          %4597 = vst.msk [vmem:[#allocation2 + $0x20] sm:$0xff] %vm757, %v4585
          %4598 = vst.msk [vmem:[#allocation2 + $0x28] sm:$0xff] %vm757, %v4586
          %4599 = vst.msk [vmem:[#allocation2 + $0x30] sm:$0xff] %vm757, %v4587
          %4600 = vst.msk [vmem:[#allocation2 + $0x38] sm:$0xff] %vm757, %v4588
        $region80: #{transformer_blocks_forward.1} parent=51 // pred_fallthru
          _
        %p4601 = scmp.eq.s32.totalorder %s31, 3
        // Predicated region
        $region81: #{transformer_blocks_forward.1} parent=51 // pred_check
          %p4602 = pneg %p4601
        $region82: #{transformer_blocks_forward.1} parent=51 // pred_check_branch
          %4604 = sbr.rel (%p4602) target = $region84
        $region83: #{transformer_blocks_forward.1} parent=51 // pred_region
          %v4605 = vld [vmem:[#allocation6 + $0x2] sm:$0x1]
          %v4606 = vld [vmem:[#allocation6 + $0x3] sm:$0x1]
          %v4607 = vsel %vm757, %v4581, 0.0
          %4608 = vadd.xlane.f32.xlu0 %v4607
          %v4609 = vpop.xlane.xlu0 %4608
          %v4610 = vsel %vm757, %v4582, 0.0
          %4611 = vadd.xlane.f32.xlu0 %v4610
          %v4612 = vpop.xlane.xlu0 %4611
          %v4613 = vsel %vm757, %v4583, 0.0
          %4614 = vadd.xlane.f32.xlu0 %v4613
          %v4615 = vpop.xlane.xlu0 %4614
          %v4616 = vsel %vm757, %v4584, 0.0
          %4617 = vadd.xlane.f32.xlu0 %v4616
          %v4618 = vpop.xlane.xlu0 %4617
          %v4619 = vsel %vm757, %v4585, 0.0
          %4620 = vadd.xlane.f32.xlu0 %v4619
          %v4621 = vpop.xlane.xlu0 %4620
          %v4622 = vsel %vm757, %v4586, 0.0
          %4623 = vadd.xlane.f32.xlu0 %v4622
          %v4624 = vpop.xlane.xlu0 %4623
          %v4625 = vsel %vm757, %v4587, 0.0
          %4626 = vadd.xlane.f32.xlu0 %v4625
          %v4627 = vpop.xlane.xlu0 %4626
          %v4628 = vsel %vm757, %v4588, 0.0
          %4629 = vadd.xlane.f32.xlu0 %v4628
          %v4630 = vpop.xlane.xlu0 %4629
          %v4631 = vmul.f32 %v4609, %v788
          %v4632 = vmul.f32 %v4612, %v788
          %v4633 = vmul.f32 %v4615, %v788
          %v4634 = vmul.f32 %v4618, %v788
          %v4635 = vmul.f32 %v4621, %v788
          %v4636 = vmul.f32 %v4624, %v788
          %v4637 = vmul.f32 %v4627, %v788
          %v4638 = vmul.f32 %v4630, %v788
          %v4639 = vsub.f32 %v4581, %v4631
          %v4640 = vsub.f32 %v4582, %v4632
          %v4641 = vsub.f32 %v4583, %v4633
          %v4642 = vsub.f32 %v4584, %v4634
          %v4643 = vsub.f32 %v4585, %v4635
          %v4644 = vsub.f32 %v4586, %v4636
          %v4645 = vsub.f32 %v4587, %v4637
          %v4646 = vsub.f32 %v4588, %v4638
          %v4647 = vmul.f32 %v4639, %v4639
          %v4648 = vmul.f32 %v4640, %v4640
          %v4649 = vmul.f32 %v4641, %v4641
          %v4650 = vmul.f32 %v4642, %v4642
          %v4651 = vmul.f32 %v4643, %v4643
          %v4652 = vmul.f32 %v4644, %v4644
          %v4653 = vmul.f32 %v4645, %v4645
          %v4654 = vmul.f32 %v4646, %v4646
          %v4655 = vsel %vm757, %v4647, 0.0
          %4656 = vadd.xlane.f32.xlu0 %v4655
          %v4657 = vpop.xlane.xlu0 %4656
          %v4658 = vsel %vm757, %v4648, 0.0
          %4659 = vadd.xlane.f32.xlu0 %v4658
          %v4660 = vpop.xlane.xlu0 %4659
          %v4661 = vsel %vm757, %v4649, 0.0
          %4662 = vadd.xlane.f32.xlu0 %v4661
          %v4663 = vpop.xlane.xlu0 %4662
          %v4664 = vsel %vm757, %v4650, 0.0
          %4665 = vadd.xlane.f32.xlu0 %v4664
          %v4666 = vpop.xlane.xlu0 %4665
          %v4667 = vsel %vm757, %v4651, 0.0
          %4668 = vadd.xlane.f32.xlu0 %v4667
          %v4669 = vpop.xlane.xlu0 %4668
          %v4670 = vsel %vm757, %v4652, 0.0
          %4671 = vadd.xlane.f32.xlu0 %v4670
          %v4672 = vpop.xlane.xlu0 %4671
          %v4673 = vsel %vm757, %v4653, 0.0
          %4674 = vadd.xlane.f32.xlu0 %v4673
          %v4675 = vpop.xlane.xlu0 %4674
          %v4676 = vsel %vm757, %v4654, 0.0
          %4677 = vadd.xlane.f32.xlu0 %v4676
          %v4678 = vpop.xlane.xlu0 %4677
          %v4679 = vmul.f32 %v4657, %v788
          %v4680 = vmul.f32 %v4660, %v788
          %v4681 = vmul.f32 %v4663, %v788
          %v4682 = vmul.f32 %v4666, %v788
          %v4683 = vmul.f32 %v4669, %v788
          %v4684 = vmul.f32 %v4672, %v788
          %v4685 = vmul.f32 %v4675, %v788
          %v4686 = vmul.f32 %v4678, %v788
          %v4687 = vadd.f32 %v4679, 1e-05
          %v4688 = vadd.f32 %v4680, 1e-05
          %v4689 = vadd.f32 %v4681, 1e-05
          %v4690 = vadd.f32 %v4682, 1e-05
          %v4691 = vadd.f32 %v4683, 1e-05
          %v4692 = vadd.f32 %v4684, 1e-05
          %v4693 = vadd.f32 %v4685, 1e-05
          %v4694 = vadd.f32 %v4686, 1e-05
          %v4695 = vrsqrt.pop %v4687
          %v4696 = vmul.f32 %v4695, %v4687
          %v4697 = vmul.f32 %v4696, %v4695
          %v4698 = vmul.f32 0.5, %v4697
          %v4699 = vsub.f32 1.5, %v4698
          %v4700 = vmul.f32 %v4695, %v4699
          %vm4701 = vweird.f32 %v4687
          %vm4702 = vweird.f32 %v4695
          %vm4703 = vmor %vm4701, %vm4702
          %v4704 = vsel %vm4703, %v4695, %v4700
          %v4705 = vrsqrt.pop %v4688
          %v4706 = vmul.f32 %v4705, %v4688
          %v4707 = vmul.f32 %v4706, %v4705
          %v4708 = vmul.f32 0.5, %v4707
          %v4709 = vsub.f32 1.5, %v4708
          %v4710 = vmul.f32 %v4705, %v4709
          %vm4711 = vweird.f32 %v4688
          %vm4712 = vweird.f32 %v4705
          %vm4713 = vmor %vm4711, %vm4712
          %v4714 = vsel %vm4713, %v4705, %v4710
          %v4715 = vrsqrt.pop %v4689
          %v4716 = vmul.f32 %v4715, %v4689
          %v4717 = vmul.f32 %v4716, %v4715
          %v4718 = vmul.f32 0.5, %v4717
          %v4719 = vsub.f32 1.5, %v4718
          %v4720 = vmul.f32 %v4715, %v4719
          %vm4721 = vweird.f32 %v4689
          %vm4722 = vweird.f32 %v4715
          %vm4723 = vmor %vm4721, %vm4722
          %v4724 = vsel %vm4723, %v4715, %v4720
          %v4725 = vrsqrt.pop %v4690
          %v4726 = vmul.f32 %v4725, %v4690
          %v4727 = vmul.f32 %v4726, %v4725
          %v4728 = vmul.f32 0.5, %v4727
          %v4729 = vsub.f32 1.5, %v4728
          %v4730 = vmul.f32 %v4725, %v4729
          %vm4731 = vweird.f32 %v4690
          %vm4732 = vweird.f32 %v4725
          %vm4733 = vmor %vm4731, %vm4732
          %v4734 = vsel %vm4733, %v4725, %v4730
          %v4735 = vrsqrt.pop %v4691
          %v4736 = vmul.f32 %v4735, %v4691
          %v4737 = vmul.f32 %v4736, %v4735
          %v4738 = vmul.f32 0.5, %v4737
          %v4739 = vsub.f32 1.5, %v4738
          %v4740 = vmul.f32 %v4735, %v4739
          %vm4741 = vweird.f32 %v4691
          %vm4742 = vweird.f32 %v4735
          %vm4743 = vmor %vm4741, %vm4742
          %v4744 = vsel %vm4743, %v4735, %v4740
          %v4745 = vrsqrt.pop %v4692
          %v4746 = vmul.f32 %v4745, %v4692
          %v4747 = vmul.f32 %v4746, %v4745
          %v4748 = vmul.f32 0.5, %v4747
          %v4749 = vsub.f32 1.5, %v4748
          %v4750 = vmul.f32 %v4745, %v4749
          %vm4751 = vweird.f32 %v4692
          %vm4752 = vweird.f32 %v4745
          %vm4753 = vmor %vm4751, %vm4752
          %v4754 = vsel %vm4753, %v4745, %v4750
          %v4755 = vrsqrt.pop %v4693
          %v4756 = vmul.f32 %v4755, %v4693
          %v4757 = vmul.f32 %v4756, %v4755
          %v4758 = vmul.f32 0.5, %v4757
          %v4759 = vsub.f32 1.5, %v4758
          %v4760 = vmul.f32 %v4755, %v4759
          %vm4761 = vweird.f32 %v4693
          %vm4762 = vweird.f32 %v4755
          %vm4763 = vmor %vm4761, %vm4762
          %v4764 = vsel %vm4763, %v4755, %v4760
          %v4765 = vrsqrt.pop %v4694
          %v4766 = vmul.f32 %v4765, %v4694
          %v4767 = vmul.f32 %v4766, %v4765
          %v4768 = vmul.f32 0.5, %v4767
          %v4769 = vsub.f32 1.5, %v4768
          %v4770 = vmul.f32 %v4765, %v4769
          %vm4771 = vweird.f32 %v4694
          %vm4772 = vweird.f32 %v4765
          %vm4773 = vmor %vm4771, %vm4772
          %v4774 = vsel %vm4773, %v4765, %v4770
          %v4775 = vmul.f32 %v4639, %v4704
          %v4776 = vmul.f32 %v4640, %v4714
          %v4777 = vmul.f32 %v4641, %v4724
          %v4778 = vmul.f32 %v4642, %v4734
          %v4779 = vmul.f32 %v4643, %v4744
          %v4780 = vmul.f32 %v4644, %v4754
          %v4781 = vmul.f32 %v4645, %v4764
          %v4782 = vmul.f32 %v4646, %v4774
          %v4783 = vperm.slane %v4605, 0
          %v4784 = vmul.f32 %v4775, %v4783
          %v4785 = vmul.f32 %v4776, %v4783
          %v4786 = vmul.f32 %v4777, %v4783
          %v4787 = vmul.f32 %v4778, %v4783
          %v4788 = vmul.f32 %v4779, %v4783
          %v4789 = vmul.f32 %v4780, %v4783
          %v4790 = vmul.f32 %v4781, %v4783
          %v4791 = vmul.f32 %v4782, %v4783
          %v4792 = vperm.slane %v4606, 0
          %v4793 = vadd.f32 %v4784, %v4792
          %v4794 = vadd.f32 %v4785, %v4792
          %v4795 = vadd.f32 %v4786, %v4792
          %v4796 = vadd.f32 %v4787, %v4792
          %v4797 = vadd.f32 %v4788, %v4792
          %v4798 = vadd.f32 %v4789, %v4792
          %v4799 = vadd.f32 %v4790, %v4792
          %v4800 = vadd.f32 %v4791, %v4792
          %4801 = vst.msk [vmem:[%s495] sm:$0xff] %vm757, %v4793
          %4802 = vst.msk [vmem:[%s495 + $0x8] sm:$0xff] %vm757, %v4794
          %4803 = vst.msk [vmem:[%s495 + $0x10] sm:$0xff] %vm757, %v4795
          %4804 = vst.msk [vmem:[%s495 + $0x18] sm:$0xff] %vm757, %v4796
          %4805 = vst.msk [vmem:[%s495 + $0x20] sm:$0xff] %vm757, %v4797
          %4806 = vst.msk [vmem:[%s495 + $0x28] sm:$0xff] %vm757, %v4798
          %4807 = vst.msk [vmem:[%s495 + $0x30] sm:$0xff] %vm757, %v4799
          %4808 = vst.msk [vmem:[%s495 + $0x38] sm:$0xff] %vm757, %v4800
        $region84: #{transformer_blocks_forward.1} parent=51 // pred_fallthru
          _
        %s4809 = sand.u32 %s244, 1
        %s4810 = scalar_lea.sflag [#allocation5], %s4809
        %s4811 = sand.u32 %s244, 1
        %s4812 = smul.addr %s4811, 64
        %s4813 = scalar_lea.vmem [#allocation11], %s4812
        // Predicated region
        $region85: #{transformer_blocks_forward.1} parent=51 // pred_check
          %p4814 = pneg %p254
        $region86: #{transformer_blocks_forward.1} parent=51 // pred_check_branch
          %4816 = sbr.rel (%p4814) target = $region88
        $region87: #{transformer_blocks_forward.1} parent=51 // pred_region
          %s4817 = smul.u32 8, %s30
          %4819 = vsyncadd %s4810, 0
          %s4820 = smul.addr %s4817, 8
          %s4821 = scalar_lea.hbm %s8, %s4820
          %s4822 = sshll.u32 %s4813, 4
          %s4823 = int_to_ptr.vmem [resolvable:$true] %s4822
          %s4824 = sshll.u32 %s4821, 4
          %s4825 = int_to_ptr.hbm [resolvable:$true] %s4824
          %4830 = dma.vmem_to_hbm [thread:$0]  %s4823, 1024, %s4825, %s4810, 128, 128, 8
        $region88: #{transformer_blocks_forward.1} parent=51 // pred_fallthru
          _
      $region52: #{transformer_blocks_forward.1} parent=5 // pred_fallthru
        _
      %p4831 = scmp.le.s32.totalorder 2, %s21
      // Predicated region
      $region89: #{transformer_blocks_forward.1} parent=5 // pred_check
        %p4832 = pneg %p4831
      $region90: #{transformer_blocks_forward.1} parent=5 // pred_check_branch
        %4834 = sbr.rel (%p4832) target = $region92
      $region91: #{transformer_blocks_forward.1} parent=5 // pred_region
        %s4835 = ssub.s32 %s21, 2
        // Predicated region
        $region93: #{transformer_blocks_forward.1} parent=91 // pred_check
          %p4836 = pneg %p260
        $region94: #{transformer_blocks_forward.1} parent=91 // pred_check_branch
          %4838 = sbr.rel (%p4836) target = $region96
        $region95: #{transformer_blocks_forward.1} parent=91 // pred_region
          %s4839 = sand.u32 %s245, 1
          %s4840 = scalar_lea.sflag [#allocation5], %s4839
          %s4841 = sand.u32 %s245, 1
          %s4842 = smul.addr %s4841, 64
          %s4843 = scalar_lea.vmem [#allocation11], %s4842
          %4845 = dma.done %s4840, 1024
        $region96: #{transformer_blocks_forward.1} parent=91 // pred_fallthru
          _
      $region92: #{transformer_blocks_forward.1} parent=5 // pred_fallthru
        _
    $region6: #{transformer_blocks_forward.1} parent=1 // loop_footer
      %s25 = sadd.s32 1, %s21
    $region7: #{transformer_blocks_forward.1} parent=1 // loop_footer_branch
      %20 = sbr.rel target = $region3
    $region8: #{transformer_blocks_forward.1} parent=1 // loop_exit
      _
    %4846 = vsyncpa [#allocation4], 1
    %s4847 = scalar_lea.sflag [#allocation4], 1
    %4848 = vsyncpa %s4847, 1
    %4849 = vsyncpa [#allocation7], 1
    %4850 = vsyncpa [#allocation5], 1
    %s4851 = scalar_lea.sflag [#allocation5], 1
    %4852 = vsyncpa %s4851, 1

</llo_original>
